<compile_context>
chip_gen: v7x
topology: tpu7x:2x2x1
jax: 0.10.0
libtpu: 0.0.40
codegen_flags: <defaults>
</compile_context>

<pallas_src>
import numpy as np
import jax
import jax.numpy as jnp
from jax.experimental import pallas as pl
from jax.experimental.pallas import tpu as pltpu

_HI = jax.lax.Precision.HIGHEST  # used by the pure-JAX reference only


# ------------------------- host-side packing (once) ------------------------ #

def pack_params(params):
    """PyTorch-layout params -> MXU-friendly packed tensors (done once)."""
    w1, b1, w2, b2, wf1, bf1, wf2, bf2 = params
    f32 = jnp.float32
    # Conv1 (20,1,3,3) -> (9 taps, 32 lanes), channels zero-padded 20->32.
    w1p = jnp.zeros((9, 32), f32).at[:, :20].set(
        jnp.transpose(w1[:, 0], (1, 2, 0)).reshape(9, 20))
    b1p = jnp.zeros((1, 32), f32).at[:, :20].set(b1.reshape(1, 20))
    # Conv2 (50,20,3,3) -> (9 taps, 32 cin, 64 cout), zero-padded.
    w2p = jnp.zeros((9, 32, 64), f32).at[:, :20, :50].set(
        jnp.transpose(w2, (2, 3, 1, 0)).reshape(9, 20, 50))
    b2p = jnp.zeros((1, 64), f32).at[:, :50].set(b2.reshape(1, 50))
    # Linear(800,10): fold the NCHW flatten permutation into the weight:
    #   wf1p[p, c, o] = wf1[o, c*16 + p]   with p = oi*4 + oj, cin padded 50->64.
    wf1p = jnp.zeros((16, 64, 10), f32).at[:, :50, :].set(
        jnp.transpose(wf1.reshape(10, 50, 16), (2, 1, 0)))
    bf1p = bf1.reshape(1, 10).astype(f32)
    wf2p = wf2.reshape(1, 10).astype(f32)
    bf2p = bf2.reshape(1, 1).astype(f32)
    return (w1p, b1p, w2p, b2p, wf1p, bf1p, wf2p, bf2p)


def _avgpool_matrix(B):
    """AdaptiveAvgPool2d((4,4)) on a 5x5 map, plus row re-ordering to
    (oi, oj, b), expressed as a constant (16B, 64B-18) averaging matrix."""
    rows2 = 64 * B - 18
    a = np.zeros((16 * B, rows2), np.float32)
    for oi in range(4):
        for oj in range(4):
            for b in range(B):
                q = (oi * 4 + oj) * B + b
                for di in range(2):
                    for dj in range(2):
                        a[q, b * 64 + (oi + di) * 8 + (oj + dj)] = 0.25
    return jnp.asarray(a)


def _pool_im2col(x):
    """(B,1,16,16) -> (4, 64B, 9): conv1 patches, one slab per MaxPool candidate.
    Row index r = b*64 + pi*8 + pj (7x7 valid pooled grid zero-padded to 8x8)."""
    B = x.shape[0]
    xi = x[:, 0]
    cands = []
    for dh in range(2):
        for dw in range(2):
            taps = []
            for kh in range(3):
                for kw in range(3):
                    v = xi[:, dh + kh:dh + kh + 13:2, dw + kw:dw + kw + 13:2]  # (B,7,7)
                    taps.append(jnp.pad(v, ((0, 0), (0, 1), (0, 1))).reshape(B * 64))
            cands.append(jnp.stack(taps, axis=-1))                             # (64B, 9)
    return jnp.stack(cands, axis=0).astype(jnp.float32)                        # (4,64B,9)


# --------------------------- fused Pallas kernel ---------------------------- #

def _fused_forward_call(B):
    rows1 = 64 * B          # padded pooled-grid rows (b, pi<8, pj<8)
    rows2 = 64 * B - 18     # rows reachable by every conv2 tap offset (max 2*8+2)

    def kernel(p1_ref, w1_ref, b1_ref, w2_ref, b2_ref, a_ref,
               wf1_ref, bf1_ref, wf2_ref, bf2_ref, out_ref, mp_ref, ap_ref):
        # Conv1(1->20,3x3) + ReLU + MaxPool2d(2,2): one matmul per pool
        # candidate, elementwise max on the VPU.  Channels live in lanes (->32).
        b1 = b1_ref[...]
        mp = None
        for d in range(4):
            cand = jnp.dot(p1_ref[d], w1_ref[...],
                           preferred_element_type=jnp.float32)
            cand = jnp.maximum(cand + b1, 0.0)
            mp = cand if mp is None else jnp.maximum(mp, cand)
        mp_ref[...] = mp                                     # (64B, 32), VMEM resident

        # Conv2(20->50,3x3) + ReLU: in-kernel im2col via 9 shifted row-slices of
        # the pooled map, accumulated as 9 matmuls (cout padded to 64 lanes).
        acc = jnp.zeros((rows2, 64), jnp.float32)
        for kh in range(3):
            for kw in range(3):
                acc = acc + jnp.dot(mp_ref[pl.ds(kh * 8 + kw, rows2), :],
                                    w2_ref[kh * 3 + kw],
                                    preferred_element_type=jnp.float32)
        y2 = jnp.maximum(acc + b2_ref[...], 0.0)

        # AdaptiveAvgPool2d((4,4)): one matmul with a constant averaging matrix
        # (also reorders rows to (oi, oj, b) for the classifier).
        ap_ref[...] = jnp.dot(a_ref[...], y2, preferred_element_type=jnp.float32)

        # Classifier: Linear(800,10) with the NCHW flatten folded into the packed
        # weight -> 16 per-position matmuls; ReLU; Linear(10,1) as VPU reduction.
        acc3 = jnp.zeros((B, 10), jnp.float32)
        for p in range(16):
            acc3 = acc3 + jnp.dot(ap_ref[pl.ds(p * B, B), :], wf1_ref[p],
                                  preferred_element_type=jnp.float32)
        h = jnp.maximum(acc3 + bf1_ref[...], 0.0)
        out_ref[...] = jnp.sum(h * wf2_ref[...], axis=-1, keepdims=True) + bf2_ref[...]

    return pl.pallas_call(
        kernel,
        out_shape=jax.ShapeDtypeStruct((B, 1), jnp.float32),
        in_specs=[pl.BlockSpec(memory_space=pltpu.MemorySpace.VMEM)] * 10,
        out_specs=pl.BlockSpec(memory_space=pltpu.MemorySpace.VMEM),
        scratch_shapes=[pltpu.VMEM((rows1, 32), jnp.float32),    # pooled map
                        pltpu.VMEM((16 * B, 64), jnp.float32)],  # avg-pooled feats
    )


@jax.jit
def forward(x, packed):
    """x: (B, 1, 16, 16) float32 NCHW  ->  (B, 1) float32"""
    B = x.shape[0]
    w1p, b1p, w2p, b2p, wf1p, bf1p, wf2p, bf2p = packed
    p1 = _pool_im2col(x)        # only per-call glue: 9-tap im2col of the 2 KB input
    a_mat = _avgpool_matrix(B)  # compile-time constant
    return _fused_forward_call(B)(p1, w1p, b1p, w2p, b2p, a_mat,
                                  wf1p, bf1p, wf2p, bf2p)


# --------------------------- pure-JAX reference ----------------------------- #

def ref_forward(x, params):
    w1, b1, w2, b2, wf1, bf1, wf2, bf2 = params
    B = x.shape[0]
    xi = x[:, 0]
    y1 = jnp.zeros((B, 20, 14, 14), jnp.float32)
    for kh in range(3):
        for kw in range(3):
            y1 = y1 + w1[None, :, 0, kh, kw, None, None] * xi[:, None, kh:kh + 14, kw:kw + 14]
    y1 = jax.nn.relu(y1 + b1[None, :, None, None])
    mp = jnp.max(y1.reshape(B, 20, 7, 2, 7, 2), axis=(3, 5))
    y2 = jnp.zeros((B, 50, 5, 5), jnp.float32)
    for kh in range(3):
        for kw in range(3):
            y2 = y2 + jnp.einsum('oc,bchw->bohw', w2[:, :, kh, kw],
                                 mp[:, :, kh:kh + 5, kw:kw + 5], precision=_HI)
    y2 = jax.nn.relu(y2 + b2[None, :, None, None])
    ap = 0.25 * (y2[:, :, 0:4, 0:4] + y2[:, :, 0:4, 1:5]
                 + y2[:, :, 1:5, 0:4] + y2[:, :, 1:5, 1:5])
    feat = ap.reshape(B, -1)
    h = jax.nn.relu(jnp.dot(feat, wf1.T, precision=_HI) + bf1)
    return jnp.dot(h, wf2.T, precision=_HI) + bf2


# ----------------------------------- main ----------------------------------- #

if __name__ == "__main__":
    key = jax.random.PRNGKey(0)
    ks = jax.random.split(key, 9)
    # Deterministic synthetic parameters, PyTorch layouts:
    #   Conv2d weight (Cout, Cin, kh, kw); Linear weight (out, in).
    params = (
        0.30 * jax.random.normal(ks[0], (20, 1, 3, 3), jnp.float32),
        0.10 * jax.random.normal(ks[1], (20,), jnp.float32),
        0.10 * jax.random.normal(ks[2], (50, 20, 3, 3), jnp.float32),
        0.10 * jax.random.normal(ks[3], (50,), jnp.float32),
        0.05 * jax.random.normal(ks[4], (10, 800), jnp.float32),
        0.10 * jax.random.normal(ks[5], (10,), jnp.float32),
        0.10 * jax.random.normal(ks[6], (1, 10), jnp.float32),
        0.10 * jax.random.normal(ks[7], (1,), jnp.float32),
    )
    x = jax.random.normal(ks[8], (2, 1, 16, 16), jnp.float32)

    packed = pack_params(params)           # weight packing: once, off the hot path
    out = jax.block_until_ready(forward(x, packed))
    assert out.shape == (2, 1), out.shape

    ref = jax.block_until_ready(ref_forward(x, params))
    # Kernel uses default MXU precision (bf16 passes, f32 accumulate); reference
    # is full f32, so allow a modest tolerance.
    assert jnp.allclose(out, ref, rtol=2.5e-2, atol=2.5e-2), (out, ref)

    print("KERNEL_OK")
</pallas_src>

<mosaic_0001>
module attributes {stable_mosaic.version = 11 : i64} {
  func.func @kernel(%arg0: memref<4x128x9xf32, #tpu.memory_space<vmem>>, %arg1: memref<9x32xf32, #tpu.memory_space<vmem>>, %arg2: memref<1x32xf32, #tpu.memory_space<vmem>>, %arg3: memref<9x32x64xf32, #tpu.memory_space<vmem>>, %arg4: memref<1x64xf32, #tpu.memory_space<vmem>>, %arg5: memref<32x110xf32, #tpu.memory_space<vmem>>, %arg6: memref<16x64x10xf32, #tpu.memory_space<vmem>>, %arg7: memref<1x10xf32, #tpu.memory_space<vmem>>, %arg8: memref<1x10xf32, #tpu.memory_space<vmem>>, %arg9: memref<1x1xf32, #tpu.memory_space<vmem>>, %arg10: memref<2x1xf32, #tpu.memory_space<vmem>>, %arg11: memref<128x32xf32, #tpu.memory_space<vmem>>, %arg12: memref<32x64xf32, #tpu.memory_space<vmem>>) attributes {dimension_semantics = [], scalar_prefetch = 0 : i64, scratch_operands = 2 : i64, tpu.core_type = #tpu.core_type<tc>} {
    %c0 = arith.constant 0 : index
    %c0_0 = arith.constant 0 : index
    %0 = vector.load %arg2[%c0, %c0_0] : memref<1x32xf32, #tpu.memory_space<vmem>>, vector<1x32xf32>
    %c0_1 = arith.constant 0 : index
    %c0_2 = arith.constant 0 : index
    %c0_3 = arith.constant 0 : index
    %1 = vector.load %arg0[%c0_1, %c0_2, %c0_3] : memref<4x128x9xf32, #tpu.memory_space<vmem>>, vector<1x128x9xf32>
    %2 = vector.shape_cast %1 : vector<1x128x9xf32> to vector<128x9xf32>
    %c0_4 = arith.constant 0 : index
    %c0_5 = arith.constant 0 : index
    %3 = vector.load %arg1[%c0_4, %c0_5] : memref<9x32xf32, #tpu.memory_space<vmem>>, vector<9x32xf32>
    %cst = arith.constant dense<0.000000e+00> : vector<128x32xf32>
    %4 = tpu.matmul %2, %3, %cst {dimension_numbers = #tpu.dot_dimension_numbers<[1], [0], [0], [1], [0, 0, 1, 1], [], []>} : vector<128x9xf32>, vector<9x32xf32>, vector<128x32xf32> -> vector<128x32xf32>
    %5 = vector.broadcast %0 : vector<1x32xf32> to vector<128x32xf32>
    %6 = arith.addf %4, %5 : vector<128x32xf32>
    %cst_6 = arith.constant 0.000000e+00 : f32
    %7 = vector.broadcast %cst_6 : f32 to vector<128x32xf32>
    %8 = arith.maximumf %6, %7 : vector<128x32xf32>
    %c1 = arith.constant 1 : index
    %c0_7 = arith.constant 0 : index
    %c0_8 = arith.constant 0 : index
    %9 = vector.load %arg0[%c1, %c0_7, %c0_8] : memref<4x128x9xf32, #tpu.memory_space<vmem>>, vector<1x128x9xf32>
    %10 = vector.shape_cast %9 : vector<1x128x9xf32> to vector<128x9xf32>
    %c0_9 = arith.constant 0 : index
    %c0_10 = arith.constant 0 : index
    %11 = vector.load %arg1[%c0_9, %c0_10] : memref<9x32xf32, #tpu.memory_space<vmem>>, vector<9x32xf32>
    %cst_11 = arith.constant dense<0.000000e+00> : vector<128x32xf32>
    %12 = tpu.matmul %10, %11, %cst_11 {dimension_numbers = #tpu.dot_dimension_numbers<[1], [0], [0], [1], [0, 0, 1, 1], [], []>} : vector<128x9xf32>, vector<9x32xf32>, vector<128x32xf32> -> vector<128x32xf32>
    %13 = vector.broadcast %0 : vector<1x32xf32> to vector<128x32xf32>
    %14 = arith.addf %12, %13 : vector<128x32xf32>
    %cst_12 = arith.constant 0.000000e+00 : f32
    %15 = vector.broadcast %cst_12 : f32 to vector<128x32xf32>
    %16 = arith.maximumf %14, %15 : vector<128x32xf32>
    %17 = arith.maximumf %8, %16 : vector<128x32xf32>
    %c2 = arith.constant 2 : index
    %c0_13 = arith.constant 0 : index
    %c0_14 = arith.constant 0 : index
    %18 = vector.load %arg0[%c2, %c0_13, %c0_14] : memref<4x128x9xf32, #tpu.memory_space<vmem>>, vector<1x128x9xf32>
    %19 = vector.shape_cast %18 : vector<1x128x9xf32> to vector<128x9xf32>
    %c0_15 = arith.constant 0 : index
    %c0_16 = arith.constant 0 : index
    %20 = vector.load %arg1[%c0_15, %c0_16] : memref<9x32xf32, #tpu.memory_space<vmem>>, vector<9x32xf32>
    %cst_17 = arith.constant dense<0.000000e+00> : vector<128x32xf32>
    %21 = tpu.matmul %19, %20, %cst_17 {dimension_numbers = #tpu.dot_dimension_numbers<[1], [0], [0], [1], [0, 0, 1, 1], [], []>} : vector<128x9xf32>, vector<9x32xf32>, vector<128x32xf32> -> vector<128x32xf32>
    %22 = vector.broadcast %0 : vector<1x32xf32> to vector<128x32xf32>
    %23 = arith.addf %21, %22 : vector<128x32xf32>
    %cst_18 = arith.constant 0.000000e+00 : f32
    %24 = vector.broadcast %cst_18 : f32 to vector<128x32xf32>
    %25 = arith.maximumf %23, %24 : vector<128x32xf32>
    %26 = arith.maximumf %17, %25 : vector<128x32xf32>
    %c3 = arith.constant 3 : index
    %c0_19 = arith.constant 0 : index
    %c0_20 = arith.constant 0 : index
    %27 = vector.load %arg0[%c3, %c0_19, %c0_20] : memref<4x128x9xf32, #tpu.memory_space<vmem>>, vector<1x128x9xf32>
    %28 = vector.shape_cast %27 : vector<1x128x9xf32> to vector<128x9xf32>
    %c0_21 = arith.constant 0 : index
    %c0_22 = arith.constant 0 : index
    %29 = vector.load %arg1[%c0_21, %c0_22] : memref<9x32xf32, #tpu.memory_space<vmem>>, vector<9x32xf32>
    %cst_23 = arith.constant dense<0.000000e+00> : vector<128x32xf32>
    %30 = tpu.matmul %28, %29, %cst_23 {dimension_numbers = #tpu.dot_dimension_numbers<[1], [0], [0], [1], [0, 0, 1, 1], [], []>} : vector<128x9xf32>, vector<9x32xf32>, vector<128x32xf32> -> vector<128x32xf32>
    %31 = vector.broadcast %0 : vector<1x32xf32> to vector<128x32xf32>
    %32 = arith.addf %30, %31 : vector<128x32xf32>
    %cst_24 = arith.constant 0.000000e+00 : f32
    %33 = vector.broadcast %cst_24 : f32 to vector<128x32xf32>
    %34 = arith.maximumf %32, %33 : vector<128x32xf32>
    %35 = arith.maximumf %26, %34 : vector<128x32xf32>
    %c0_25 = arith.constant 0 : index
    %c0_26 = arith.constant 0 : index
    %36 = vector.load %arg11[%c0_25, %c0_26] : memref<128x32xf32, #tpu.memory_space<vmem>>, vector<128x32xf32>
    tpu.vector_store %arg11[%c0_25, %c0_26], %35 {strides = array<i32>} : memref<128x32xf32, #tpu.memory_space<vmem>>, vector<128x32xf32>,
    %cst_27 = arith.constant 0.000000e+00 : f32
    %37 = vector.broadcast %cst_27 : f32 to vector<110x64xf32>
    %c0_28 = arith.constant 0 : index
    %c0_29 = arith.constant 0 : index
    %38 = vector.load %arg11[%c0_28, %c0_29] : memref<128x32xf32, #tpu.memory_space<vmem>>, vector<110x32xf32>
    %c0_30 = arith.constant 0 : index
    %c0_31 = arith.constant 0 : index
    %c0_32 = arith.constant 0 : index
    %39 = vector.load %arg3[%c0_30, %c0_31, %c0_32] : memref<9x32x64xf32, #tpu.memory_space<vmem>>, vector<1x32x64xf32>
    %40 = vector.shape_cast %39 : vector<1x32x64xf32> to vector<32x64xf32>
    %cst_33 = arith.constant dense<0.000000e+00> : vector<110x64xf32>
    %41 = tpu.matmul %38, %40, %cst_33 {dimension_numbers = #tpu.dot_dimension_numbers<[1], [0], [0], [1], [0, 0, 1, 1], [], []>} : vector<110x32xf32>, vector<32x64xf32>, vector<110x64xf32> -> vector<110x64xf32>
    %42 = arith.addf %37, %41 : vector<110x64xf32>
    %c1_34 = arith.constant 1 : index
    %c0_35 = arith.constant 0 : index
    %43 = vector.load %arg11[%c1_34, %c0_35] : memref<128x32xf32, #tpu.memory_space<vmem>>, vector<110x32xf32>
    %c1_36 = arith.constant 1 : index
    %c0_37 = arith.constant 0 : index
    %c0_38 = arith.constant 0 : index
    %44 = vector.load %arg3[%c1_36, %c0_37, %c0_38] : memref<9x32x64xf32, #tpu.memory_space<vmem>>, vector<1x32x64xf32>
    %45 = vector.shape_cast %44 : vector<1x32x64xf32> to vector<32x64xf32>
    %cst_39 = arith.constant dense<0.000000e+00> : vector<110x64xf32>
    %46 = tpu.matmul %43, %45, %cst_39 {dimension_numbers = #tpu.dot_dimension_numbers<[1], [0], [0], [1], [0, 0, 1, 1], [], []>} : vector<110x32xf32>, vector<32x64xf32>, vector<110x64xf32> -> vector<110x64xf32>
    %47 = arith.addf %42, %46 : vector<110x64xf32>
    %c2_40 = arith.constant 2 : index
    %c0_41 = arith.constant 0 : index
    %48 = vector.load %arg11[%c2_40, %c0_41] : memref<128x32xf32, #tpu.memory_space<vmem>>, vector<110x32xf32>
    %c2_42 = arith.constant 2 : index
    %c0_43 = arith.constant 0 : index
    %c0_44 = arith.constant 0 : index
    %49 = vector.load %arg3[%c2_42, %c0_43, %c0_44] : memref<9x32x64xf32, #tpu.memory_space<vmem>>, vector<1x32x64xf32>
    %50 = vector.shape_cast %49 : vector<1x32x64xf32> to vector<32x64xf32>
    %cst_45 = arith.constant dense<0.000000e+00> : vector<110x64xf32>
    %51 = tpu.matmul %48, %50, %cst_45 {dimension_numbers = #tpu.dot_dimension_numbers<[1], [0], [0], [1], [0, 0, 1, 1], [], []>} : vector<110x32xf32>, vector<32x64xf32>, vector<110x64xf32> -> vector<110x64xf32>
    %52 = arith.addf %47, %51 : vector<110x64xf32>
    %c8 = arith.constant 8 : index
    %c0_46 = arith.constant 0 : index
    %53 = vector.load %arg11[%c8, %c0_46] : memref<128x32xf32, #tpu.memory_space<vmem>>, vector<110x32xf32>
    %c3_47 = arith.constant 3 : index
    %c0_48 = arith.constant 0 : index
    %c0_49 = arith.constant 0 : index
    %54 = vector.load %arg3[%c3_47, %c0_48, %c0_49] : memref<9x32x64xf32, #tpu.memory_space<vmem>>, vector<1x32x64xf32>
    %55 = vector.shape_cast %54 : vector<1x32x64xf32> to vector<32x64xf32>
    %cst_50 = arith.constant dense<0.000000e+00> : vector<110x64xf32>
    %56 = tpu.matmul %53, %55, %cst_50 {dimension_numbers = #tpu.dot_dimension_numbers<[1], [0], [0], [1], [0, 0, 1, 1], [], []>} : vector<110x32xf32>, vector<32x64xf32>, vector<110x64xf32> -> vector<110x64xf32>
    %57 = arith.addf %52, %56 : vector<110x64xf32>
    %c9 = arith.constant 9 : index
    %c0_51 = arith.constant 0 : index
    %58 = vector.load %arg11[%c9, %c0_51] : memref<128x32xf32, #tpu.memory_space<vmem>>, vector<110x32xf32>
    %c4 = arith.constant 4 : index
    %c0_52 = arith.constant 0 : index
    %c0_53 = arith.constant 0 : index
    %59 = vector.load %arg3[%c4, %c0_52, %c0_53] : memref<9x32x64xf32, #tpu.memory_space<vmem>>, vector<1x32x64xf32>
    %60 = vector.shape_cast %59 : vector<1x32x64xf32> to vector<32x64xf32>
    %cst_54 = arith.constant dense<0.000000e+00> : vector<110x64xf32>
    %61 = tpu.matmul %58, %60, %cst_54 {dimension_numbers = #tpu.dot_dimension_numbers<[1], [0], [0], [1], [0, 0, 1, 1], [], []>} : vector<110x32xf32>, vector<32x64xf32>, vector<110x64xf32> -> vector<110x64xf32>
    %62 = arith.addf %57, %61 : vector<110x64xf32>
    %c10 = arith.constant 10 : index
    %c0_55 = arith.constant 0 : index
    %63 = vector.load %arg11[%c10, %c0_55] : memref<128x32xf32, #tpu.memory_space<vmem>>, vector<110x32xf32>
    %c5 = arith.constant 5 : index
    %c0_56 = arith.constant 0 : index
    %c0_57 = arith.constant 0 : index
    %64 = vector.load %arg3[%c5, %c0_56, %c0_57] : memref<9x32x64xf32, #tpu.memory_space<vmem>>, vector<1x32x64xf32>
    %65 = vector.shape_cast %64 : vector<1x32x64xf32> to vector<32x64xf32>
    %cst_58 = arith.constant dense<0.000000e+00> : vector<110x64xf32>
    %66 = tpu.matmul %63, %65, %cst_58 {dimension_numbers = #tpu.dot_dimension_numbers<[1], [0], [0], [1], [0, 0, 1, 1], [], []>} : vector<110x32xf32>, vector<32x64xf32>, vector<110x64xf32> -> vector<110x64xf32>
    %67 = arith.addf %62, %66 : vector<110x64xf32>
    %c16 = arith.constant 16 : index
    %c0_59 = arith.constant 0 : index
    %68 = vector.load %arg11[%c16, %c0_59] : memref<128x32xf32, #tpu.memory_space<vmem>>, vector<110x32xf32>
    %c6 = arith.constant 6 : index
    %c0_60 = arith.constant 0 : index
    %c0_61 = arith.constant 0 : index
    %69 = vector.load %arg3[%c6, %c0_60, %c0_61] : memref<9x32x64xf32, #tpu.memory_space<vmem>>, vector<1x32x64xf32>
    %70 = vector.shape_cast %69 : vector<1x32x64xf32> to vector<32x64xf32>
    %cst_62 = arith.constant dense<0.000000e+00> : vector<110x64xf32>
    %71 = tpu.matmul %68, %70, %cst_62 {dimension_numbers = #tpu.dot_dimension_numbers<[1], [0], [0], [1], [0, 0, 1, 1], [], []>} : vector<110x32xf32>, vector<32x64xf32>, vector<110x64xf32> -> vector<110x64xf32>
    %72 = arith.addf %67, %71 : vector<110x64xf32>
    %c17 = arith.constant 17 : index
    %c0_63 = arith.constant 0 : index
    %73 = vector.load %arg11[%c17, %c0_63] : memref<128x32xf32, #tpu.memory_space<vmem>>, vector<110x32xf32>
    %c7 = arith.constant 7 : index
    %c0_64 = arith.constant 0 : index
    %c0_65 = arith.constant 0 : index
    %74 = vector.load %arg3[%c7, %c0_64, %c0_65] : memref<9x32x64xf32, #tpu.memory_space<vmem>>, vector<1x32x64xf32>
    %75 = vector.shape_cast %74 : vector<1x32x64xf32> to vector<32x64xf32>
    %cst_66 = arith.constant dense<0.000000e+00> : vector<110x64xf32>
    %76 = tpu.matmul %73, %75, %cst_66 {dimension_numbers = #tpu.dot_dimension_numbers<[1], [0], [0], [1], [0, 0, 1, 1], [], []>} : vector<110x32xf32>, vector<32x64xf32>, vector<110x64xf32> -> vector<110x64xf32>
    %77 = arith.addf %72, %76 : vector<110x64xf32>
    %c18 = arith.constant 18 : index
    %c0_67 = arith.constant 0 : index
    %78 = vector.load %arg11[%c18, %c0_67] : memref<128x32xf32, #tpu.memory_space<vmem>>, vector<110x32xf32>
    %c8_68 = arith.constant 8 : index
    %c0_69 = arith.constant 0 : index
    %c0_70 = arith.constant 0 : index
    %79 = vector.load %arg3[%c8_68, %c0_69, %c0_70] : memref<9x32x64xf32, #tpu.memory_space<vmem>>, vector<1x32x64xf32>
    %80 = vector.shape_cast %79 : vector<1x32x64xf32> to vector<32x64xf32>
    %cst_71 = arith.constant dense<0.000000e+00> : vector<110x64xf32>
    %81 = tpu.matmul %78, %80, %cst_71 {dimension_numbers = #tpu.dot_dimension_numbers<[1], [0], [0], [1], [0, 0, 1, 1], [], []>} : vector<110x32xf32>, vector<32x64xf32>, vector<110x64xf32> -> vector<110x64xf32>
    %82 = arith.addf %77, %81 : vector<110x64xf32>
    %c0_72 = arith.constant 0 : index
    %c0_73 = arith.constant 0 : index
    %83 = vector.load %arg4[%c0_72, %c0_73] : memref<1x64xf32, #tpu.memory_space<vmem>>, vector<1x64xf32>
    %84 = vector.broadcast %83 : vector<1x64xf32> to vector<110x64xf32>
    %85 = arith.addf %82, %84 : vector<110x64xf32>
    %cst_74 = arith.constant 0.000000e+00 : f32
    %86 = vector.broadcast %cst_74 : f32 to vector<110x64xf32>
    %87 = arith.maximumf %85, %86 : vector<110x64xf32>
    %c0_75 = arith.constant 0 : index
    %c0_76 = arith.constant 0 : index
    %88 = vector.load %arg5[%c0_75, %c0_76] : memref<32x110xf32, #tpu.memory_space<vmem>>, vector<32x110xf32>
    %cst_77 = arith.constant dense<0.000000e+00> : vector<32x64xf32>
    %89 = tpu.matmul %88, %87, %cst_77 {dimension_numbers = #tpu.dot_dimension_numbers<[1], [0], [0], [1], [0, 0, 1, 1], [], []>} : vector<32x110xf32>, vector<110x64xf32>, vector<32x64xf32> -> vector<32x64xf32>
    %c0_78 = arith.constant 0 : index
    %c0_79 = arith.constant 0 : index
    %90 = vector.load %arg12[%c0_78, %c0_79] : memref<32x64xf32, #tpu.memory_space<vmem>>, vector<32x64xf32>
    tpu.vector_store %arg12[%c0_78, %c0_79], %89 {strides = array<i32>} : memref<32x64xf32, #tpu.memory_space<vmem>>, vector<32x64xf32>,
    %cst_80 = arith.constant 0.000000e+00 : f32
    %91 = vector.broadcast %cst_80 : f32 to vector<2x10xf32>
    %c0_81 = arith.constant 0 : index
    %c0_82 = arith.constant 0 : index
    %92 = vector.load %arg12[%c0_81, %c0_82] : memref<32x64xf32, #tpu.memory_space<vmem>>, vector<2x64xf32>
    %c0_83 = arith.constant 0 : index
    %c0_84 = arith.constant 0 : index
    %c0_85 = arith.constant 0 : index
    %93 = vector.load %arg6[%c0_83, %c0_84, %c0_85] : memref<16x64x10xf32, #tpu.memory_space<vmem>>, vector<1x64x10xf32>
    %94 = vector.shape_cast %93 : vector<1x64x10xf32> to vector<64x10xf32>
    %cst_86 = arith.constant dense<0.000000e+00> : vector<2x10xf32>
    %95 = tpu.matmul %92, %94, %cst_86 {dimension_numbers = #tpu.dot_dimension_numbers<[1], [0], [0], [1], [0, 0, 1, 1], [], []>} : vector<2x64xf32>, vector<64x10xf32>, vector<2x10xf32> -> vector<2x10xf32>
    %96 = arith.addf %91, %95 : vector<2x10xf32>
    %c2_87 = arith.constant 2 : index
    %c0_88 = arith.constant 0 : index
    %97 = vector.load %arg12[%c2_87, %c0_88] : memref<32x64xf32, #tpu.memory_space<vmem>>, vector<2x64xf32>
    %c1_89 = arith.constant 1 : index
    %c0_90 = arith.constant 0 : index
    %c0_91 = arith.constant 0 : index
    %98 = vector.load %arg6[%c1_89, %c0_90, %c0_91] : memref<16x64x10xf32, #tpu.memory_space<vmem>>, vector<1x64x10xf32>
    %99 = vector.shape_cast %98 : vector<1x64x10xf32> to vector<64x10xf32>
    %cst_92 = arith.constant dense<0.000000e+00> : vector<2x10xf32>
    %100 = tpu.matmul %97, %99, %cst_92 {dimension_numbers = #tpu.dot_dimension_numbers<[1], [0], [0], [1], [0, 0, 1, 1], [], []>} : vector<2x64xf32>, vector<64x10xf32>, vector<2x10xf32> -> vector<2x10xf32>
    %101 = arith.addf %96, %100 : vector<2x10xf32>
    %c4_93 = arith.constant 4 : index
    %c0_94 = arith.constant 0 : index
    %102 = vector.load %arg12[%c4_93, %c0_94] : memref<32x64xf32, #tpu.memory_space<vmem>>, vector<2x64xf32>
    %c2_95 = arith.constant 2 : index
    %c0_96 = arith.constant 0 : index
    %c0_97 = arith.constant 0 : index
    %103 = vector.load %arg6[%c2_95, %c0_96, %c0_97] : memref<16x64x10xf32, #tpu.memory_space<vmem>>, vector<1x64x10xf32>
    %104 = vector.shape_cast %103 : vector<1x64x10xf32> to vector<64x10xf32>
    %cst_98 = arith.constant dense<0.000000e+00> : vector<2x10xf32>
    %105 = tpu.matmul %102, %104, %cst_98 {dimension_numbers = #tpu.dot_dimension_numbers<[1], [0], [0], [1], [0, 0, 1, 1], [], []>} : vector<2x64xf32>, vector<64x10xf32>, vector<2x10xf32> -> vector<2x10xf32>
    %106 = arith.addf %101, %105 : vector<2x10xf32>
    %c6_99 = arith.constant 6 : index
    %c0_100 = arith.constant 0 : index
    %107 = vector.load %arg12[%c6_99, %c0_100] : memref<32x64xf32, #tpu.memory_space<vmem>>, vector<2x64xf32>
    %c3_101 = arith.constant 3 : index
    %c0_102 = arith.constant 0 : index
    %c0_103 = arith.constant 0 : index
    %108 = vector.load %arg6[%c3_101, %c0_102, %c0_103] : memref<16x64x10xf32, #tpu.memory_space<vmem>>, vector<1x64x10xf32>
    %109 = vector.shape_cast %108 : vector<1x64x10xf32> to vector<64x10xf32>
    %cst_104 = arith.constant dense<0.000000e+00> : vector<2x10xf32>
    %110 = tpu.matmul %107, %109, %cst_104 {dimension_numbers = #tpu.dot_dimension_numbers<[1], [0], [0], [1], [0, 0, 1, 1], [], []>} : vector<2x64xf32>, vector<64x10xf32>, vector<2x10xf32> -> vector<2x10xf32>
    %111 = arith.addf %106, %110 : vector<2x10xf32>
    %c8_105 = arith.constant 8 : index
    %c0_106 = arith.constant 0 : index
    %112 = vector.load %arg12[%c8_105, %c0_106] : memref<32x64xf32, #tpu.memory_space<vmem>>, vector<2x64xf32>
    %c4_107 = arith.constant 4 : index
    %c0_108 = arith.constant 0 : index
    %c0_109 = arith.constant 0 : index
    %113 = vector.load %arg6[%c4_107, %c0_108, %c0_109] : memref<16x64x10xf32, #tpu.memory_space<vmem>>, vector<1x64x10xf32>
    %114 = vector.shape_cast %113 : vector<1x64x10xf32> to vector<64x10xf32>
    %cst_110 = arith.constant dense<0.000000e+00> : vector<2x10xf32>
    %115 = tpu.matmul %112, %114, %cst_110 {dimension_numbers = #tpu.dot_dimension_numbers<[1], [0], [0], [1], [0, 0, 1, 1], [], []>} : vector<2x64xf32>, vector<64x10xf32>, vector<2x10xf32> -> vector<2x10xf32>
    %116 = arith.addf %111, %115 : vector<2x10xf32>
    %c10_111 = arith.constant 10 : index
    %c0_112 = arith.constant 0 : index
    %117 = vector.load %arg12[%c10_111, %c0_112] : memref<32x64xf32, #tpu.memory_space<vmem>>, vector<2x64xf32>
    %c5_113 = arith.constant 5 : index
    %c0_114 = arith.constant 0 : index
    %c0_115 = arith.constant 0 : index
    %118 = vector.load %arg6[%c5_113, %c0_114, %c0_115] : memref<16x64x10xf32, #tpu.memory_space<vmem>>, vector<1x64x10xf32>
    %119 = vector.shape_cast %118 : vector<1x64x10xf32> to vector<64x10xf32>
    %cst_116 = arith.constant dense<0.000000e+00> : vector<2x10xf32>
    %120 = tpu.matmul %117, %119, %cst_116 {dimension_numbers = #tpu.dot_dimension_numbers<[1], [0], [0], [1], [0, 0, 1, 1], [], []>} : vector<2x64xf32>, vector<64x10xf32>, vector<2x10xf32> -> vector<2x10xf32>
    %121 = arith.addf %116, %120 : vector<2x10xf32>
    %c12 = arith.constant 12 : index
    %c0_117 = arith.constant 0 : index
    %122 = vector.load %arg12[%c12, %c0_117] : memref<32x64xf32, #tpu.memory_space<vmem>>, vector<2x64xf32>
    %c6_118 = arith.constant 6 : index
    %c0_119 = arith.constant 0 : index
    %c0_120 = arith.constant 0 : index
    %123 = vector.load %arg6[%c6_118, %c0_119, %c0_120] : memref<16x64x10xf32, #tpu.memory_space<vmem>>, vector<1x64x10xf32>
    %124 = vector.shape_cast %123 : vector<1x64x10xf32> to vector<64x10xf32>
    %cst_121 = arith.constant dense<0.000000e+00> : vector<2x10xf32>
    %125 = tpu.matmul %122, %124, %cst_121 {dimension_numbers = #tpu.dot_dimension_numbers<[1], [0], [0], [1], [0, 0, 1, 1], [], []>} : vector<2x64xf32>, vector<64x10xf32>, vector<2x10xf32> -> vector<2x10xf32>
    %126 = arith.addf %121, %125 : vector<2x10xf32>
    %c14 = arith.constant 14 : index
    %c0_122 = arith.constant 0 : index
    %127 = vector.load %arg12[%c14, %c0_122] : memref<32x64xf32, #tpu.memory_space<vmem>>, vector<2x64xf32>
    %c7_123 = arith.constant 7 : index
    %c0_124 = arith.constant 0 : index
    %c0_125 = arith.constant 0 : index
    %128 = vector.load %arg6[%c7_123, %c0_124, %c0_125] : memref<16x64x10xf32, #tpu.memory_space<vmem>>, vector<1x64x10xf32>
    %129 = vector.shape_cast %128 : vector<1x64x10xf32> to vector<64x10xf32>
    %cst_126 = arith.constant dense<0.000000e+00> : vector<2x10xf32>
    %130 = tpu.matmul %127, %129, %cst_126 {dimension_numbers = #tpu.dot_dimension_numbers<[1], [0], [0], [1], [0, 0, 1, 1], [], []>} : vector<2x64xf32>, vector<64x10xf32>, vector<2x10xf32> -> vector<2x10xf32>
    %131 = arith.addf %126, %130 : vector<2x10xf32>
    %c16_127 = arith.constant 16 : index
    %c0_128 = arith.constant 0 : index
    %132 = vector.load %arg12[%c16_127, %c0_128] : memref<32x64xf32, #tpu.memory_space<vmem>>, vector<2x64xf32>
    %c8_129 = arith.constant 8 : index
    %c0_130 = arith.constant 0 : index
    %c0_131 = arith.constant 0 : index
    %133 = vector.load %arg6[%c8_129, %c0_130, %c0_131] : memref<16x64x10xf32, #tpu.memory_space<vmem>>, vector<1x64x10xf32>
    %134 = vector.shape_cast %133 : vector<1x64x10xf32> to vector<64x10xf32>
    %cst_132 = arith.constant dense<0.000000e+00> : vector<2x10xf32>
    %135 = tpu.matmul %132, %134, %cst_132 {dimension_numbers = #tpu.dot_dimension_numbers<[1], [0], [0], [1], [0, 0, 1, 1], [], []>} : vector<2x64xf32>, vector<64x10xf32>, vector<2x10xf32> -> vector<2x10xf32>
    %136 = arith.addf %131, %135 : vector<2x10xf32>
    %c18_133 = arith.constant 18 : index
    %c0_134 = arith.constant 0 : index
    %137 = vector.load %arg12[%c18_133, %c0_134] : memref<32x64xf32, #tpu.memory_space<vmem>>, vector<2x64xf32>
    %c9_135 = arith.constant 9 : index
    %c0_136 = arith.constant 0 : index
    %c0_137 = arith.constant 0 : index
    %138 = vector.load %arg6[%c9_135, %c0_136, %c0_137] : memref<16x64x10xf32, #tpu.memory_space<vmem>>, vector<1x64x10xf32>
    %139 = vector.shape_cast %138 : vector<1x64x10xf32> to vector<64x10xf32>
    %cst_138 = arith.constant dense<0.000000e+00> : vector<2x10xf32>
    %140 = tpu.matmul %137, %139, %cst_138 {dimension_numbers = #tpu.dot_dimension_numbers<[1], [0], [0], [1], [0, 0, 1, 1], [], []>} : vector<2x64xf32>, vector<64x10xf32>, vector<2x10xf32> -> vector<2x10xf32>
    %141 = arith.addf %136, %140 : vector<2x10xf32>
    %c20 = arith.constant 20 : index
    %c0_139 = arith.constant 0 : index
    %142 = vector.load %arg12[%c20, %c0_139] : memref<32x64xf32, #tpu.memory_space<vmem>>, vector<2x64xf32>
    %c10_140 = arith.constant 10 : index
    %c0_141 = arith.constant 0 : index
    %c0_142 = arith.constant 0 : index
    %143 = vector.load %arg6[%c10_140, %c0_141, %c0_142] : memref<16x64x10xf32, #tpu.memory_space<vmem>>, vector<1x64x10xf32>
    %144 = vector.shape_cast %143 : vector<1x64x10xf32> to vector<64x10xf32>
    %cst_143 = arith.constant dense<0.000000e+00> : vector<2x10xf32>
    %145 = tpu.matmul %142, %144, %cst_143 {dimension_numbers = #tpu.dot_dimension_numbers<[1], [0], [0], [1], [0, 0, 1, 1], [], []>} : vector<2x64xf32>, vector<64x10xf32>, vector<2x10xf32> -> vector<2x10xf32>
    %146 = arith.addf %141, %145 : vector<2x10xf32>
    %c22 = arith.constant 22 : index
    %c0_144 = arith.constant 0 : index
    %147 = vector.load %arg12[%c22, %c0_144] : memref<32x64xf32, #tpu.memory_space<vmem>>, vector<2x64xf32>
    %c11 = arith.constant 11 : index
    %c0_145 = arith.constant 0 : index
    %c0_146 = arith.constant 0 : index
    %148 = vector.load %arg6[%c11, %c0_145, %c0_146] : memref<16x64x10xf32, #tpu.memory_space<vmem>>, vector<1x64x10xf32>
    %149 = vector.shape_cast %148 : vector<1x64x10xf32> to vector<64x10xf32>
    %cst_147 = arith.constant dense<0.000000e+00> : vector<2x10xf32>
    %150 = tpu.matmul %147, %149, %cst_147 {dimension_numbers = #tpu.dot_dimension_numbers<[1], [0], [0], [1], [0, 0, 1, 1], [], []>} : vector<2x64xf32>, vector<64x10xf32>, vector<2x10xf32> -> vector<2x10xf32>
    %151 = arith.addf %146, %150 : vector<2x10xf32>
    %c24 = arith.constant 24 : index
    %c0_148 = arith.constant 0 : index
    %152 = vector.load %arg12[%c24, %c0_148] : memref<32x64xf32, #tpu.memory_space<vmem>>, vector<2x64xf32>
    %c12_149 = arith.constant 12 : index
    %c0_150 = arith.constant 0 : index
    %c0_151 = arith.constant 0 : index
    %153 = vector.load %arg6[%c12_149, %c0_150, %c0_151] : memref<16x64x10xf32, #tpu.memory_space<vmem>>, vector<1x64x10xf32>
    %154 = vector.shape_cast %153 : vector<1x64x10xf32> to vector<64x10xf32>
    %cst_152 = arith.constant dense<0.000000e+00> : vector<2x10xf32>
    %155 = tpu.matmul %152, %154, %cst_152 {dimension_numbers = #tpu.dot_dimension_numbers<[1], [0], [0], [1], [0, 0, 1, 1], [], []>} : vector<2x64xf32>, vector<64x10xf32>, vector<2x10xf32> -> vector<2x10xf32>
    %156 = arith.addf %151, %155 : vector<2x10xf32>
    %c26 = arith.constant 26 : index
    %c0_153 = arith.constant 0 : index
    %157 = vector.load %arg12[%c26, %c0_153] : memref<32x64xf32, #tpu.memory_space<vmem>>, vector<2x64xf32>
    %c13 = arith.constant 13 : index
    %c0_154 = arith.constant 0 : index
    %c0_155 = arith.constant 0 : index
    %158 = vector.load %arg6[%c13, %c0_154, %c0_155] : memref<16x64x10xf32, #tpu.memory_space<vmem>>, vector<1x64x10xf32>
    %159 = vector.shape_cast %158 : vector<1x64x10xf32> to vector<64x10xf32>
    %cst_156 = arith.constant dense<0.000000e+00> : vector<2x10xf32>
    %160 = tpu.matmul %157, %159, %cst_156 {dimension_numbers = #tpu.dot_dimension_numbers<[1], [0], [0], [1], [0, 0, 1, 1], [], []>} : vector<2x64xf32>, vector<64x10xf32>, vector<2x10xf32> -> vector<2x10xf32>
    %161 = arith.addf %156, %160 : vector<2x10xf32>
    %c28 = arith.constant 28 : index
    %c0_157 = arith.constant 0 : index
    %162 = vector.load %arg12[%c28, %c0_157] : memref<32x64xf32, #tpu.memory_space<vmem>>, vector<2x64xf32>
    %c14_158 = arith.constant 14 : index
    %c0_159 = arith.constant 0 : index
    %c0_160 = arith.constant 0 : index
    %163 = vector.load %arg6[%c14_158, %c0_159, %c0_160] : memref<16x64x10xf32, #tpu.memory_space<vmem>>, vector<1x64x10xf32>
    %164 = vector.shape_cast %163 : vector<1x64x10xf32> to vector<64x10xf32>
    %cst_161 = arith.constant dense<0.000000e+00> : vector<2x10xf32>
    %165 = tpu.matmul %162, %164, %cst_161 {dimension_numbers = #tpu.dot_dimension_numbers<[1], [0], [0], [1], [0, 0, 1, 1], [], []>} : vector<2x64xf32>, vector<64x10xf32>, vector<2x10xf32> -> vector<2x10xf32>
    %166 = arith.addf %161, %165 : vector<2x10xf32>
    %c30 = arith.constant 30 : index
    %c0_162 = arith.constant 0 : index
    %167 = vector.load %arg12[%c30, %c0_162] : memref<32x64xf32, #tpu.memory_space<vmem>>, vector<2x64xf32>
    %c15 = arith.constant 15 : index
    %c0_163 = arith.constant 0 : index
    %c0_164 = arith.constant 0 : index
    %168 = vector.load %arg6[%c15, %c0_163, %c0_164] : memref<16x64x10xf32, #tpu.memory_space<vmem>>, vector<1x64x10xf32>
    %169 = vector.shape_cast %168 : vector<1x64x10xf32> to vector<64x10xf32>
    %cst_165 = arith.constant dense<0.000000e+00> : vector<2x10xf32>
    %170 = tpu.matmul %167, %169, %cst_165 {dimension_numbers = #tpu.dot_dimension_numbers<[1], [0], [0], [1], [0, 0, 1, 1], [], []>} : vector<2x64xf32>, vector<64x10xf32>, vector<2x10xf32> -> vector<2x10xf32>
    %171 = arith.addf %166, %170 : vector<2x10xf32>
    %c0_166 = arith.constant 0 : index
    %c0_167 = arith.constant 0 : index
    %172 = vector.load %arg7[%c0_166, %c0_167] : memref<1x10xf32, #tpu.memory_space<vmem>>, vector<1x10xf32>
    %173 = vector.broadcast %172 : vector<1x10xf32> to vector<2x10xf32>
    %174 = arith.addf %171, %173 : vector<2x10xf32>
    %cst_168 = arith.constant 0.000000e+00 : f32
    %175 = vector.broadcast %cst_168 : f32 to vector<2x10xf32>
    %176 = arith.maximumf %174, %175 : vector<2x10xf32>
    %c0_169 = arith.constant 0 : index
    %c0_170 = arith.constant 0 : index
    %177 = vector.load %arg8[%c0_169, %c0_170] : memref<1x10xf32, #tpu.memory_space<vmem>>, vector<1x10xf32>
    %178 = vector.broadcast %177 : vector<1x10xf32> to vector<2x10xf32>
    %179 = arith.mulf %176, %178 : vector<2x10xf32>
    %cst_171 = arith.constant dense<0.000000e+00> : vector<2xf32>
    %180 = vector.multi_reduction <add>, %179, %cst_171 [1] : vector<2x10xf32> to vector<2xf32>
    %181 = vector.shape_cast %180 : vector<2xf32> to vector<2x1xf32>
    %c0_172 = arith.constant 0 : index
    %c0_173 = arith.constant 0 : index
    %182 = vector.load %arg9[%c0_172, %c0_173] : memref<1x1xf32, #tpu.memory_space<vmem>>, vector<1x1xf32>
    %183 = vector.broadcast %182 : vector<1x1xf32> to vector<2x1xf32>
    %184 = arith.addf %181, %183 : vector<2x1xf32>
    %c0_174 = arith.constant 0 : index
    %c0_175 = arith.constant 0 : index
    %185 = vector.load %arg10[%c0_174, %c0_175] : memref<2x1xf32, #tpu.memory_space<vmem>>, vector<2x1xf32>
    tpu.vector_store %arg10[%c0_174, %c0_175], %184 {strides = array<i32>} : memref<2x1xf32, #tpu.memory_space<vmem>>, vector<2x1xf32>,
    return
  }
}

</mosaic_0001>

<llo_original>
// kernel: forward.1
$region0: #{forward.1}
  #allocation0 [shape = 'u32[]', space=smem, size = 0x4, offset = 0x4, fixed_abs, tag = 'smem constant byte address 0x4 - core index']
  #allocation1 [shape = 'u32[144,128]{1,0:T(1,128)}', space=vmem, size = 0x12000, scoped, tag = 'internal scratch']
  #allocation2 [shape = 'f32[128,32]{1,0:T(8,128)}', space=vmem, size = 0x10000, scoped, tag = 'scratch operand']
  #allocation3 [shape = 'f32[32,64]{1,0:T(8,128)}', space=vmem, size = 0x4000, scoped, tag = 'scratch operand']
  #allocation4 [shape = 'f32[1,1]{1,0:T(1,128)S(1)}', space=vmem, size = 0x200, scoped, tag = 'scoped memory for forward.1']
  %s0 = inlined_call_operand.vmem [shape: f32[4,128,9], index: 0, kind: input, shape index: {}]
  %s1 = inlined_call_operand.vmem [shape: f32[9,32], index: 1, kind: input, shape index: {}]
  %s2 = inlined_call_operand.vmem [shape: f32[1,32], index: 2, kind: input, shape index: {}]
  %s3 = inlined_call_operand.vmem [shape: f32[9,32,64], index: 3, kind: input, shape index: {}]
  %s4 = inlined_call_operand.vmem [shape: f32[1,64], index: 4, kind: input, shape index: {}]
  %s5 = inlined_call_operand.vmem [shape: f32[32,110], index: 5, kind: input, shape index: {}]
  %s6 = inlined_call_operand.vmem [shape: f32[16,64,10], index: 6, kind: input, shape index: {}]
  %s7 = inlined_call_operand.vmem [shape: f32[1,10], index: 7, kind: input, shape index: {}]
  %s8 = inlined_call_operand.vmem [shape: f32[1,10], index: 8, kind: input, shape index: {}]
  %s9 = inlined_call_operand.<no memory space> [shape: f32[1,1], index: 9, kind: input, shape index: {}]
  %s10 = inlined_call_operand.vmem [shape: f32[2,1], index: 10, kind: output, shape index: {}]
  %s11 = sld [smem:[#allocation0]]
  $region50: #{forward.1} parent=0
    _
  %s13 = ssub.s32 1, %s11
  %s14 = scalar_select 0, %s13, %s11
  %v15 = vstv %s9
  %16 = vst [vmem:[#allocation4] sm:$0x1] %v15
  // Predicated region
  $region2: #{forward.1} parent=0 // pred_check
    _
  $region3: #{forward.1} parent=0 // pred_check_branch
    %18 = sbr.rel (0) target = $region5
  $region4: #{forward.1} parent=0 // pred_region
    _
  $region5: #{forward.1} parent=0 // pred_fallthru
    _
  // Predicated region
  $region6: #{forward.1} parent=0 // pred_check
    _
  $region7: #{forward.1} parent=0 // pred_check_branch
    %20 = sbr.rel (0) target = $region9
  $region8: #{forward.1} parent=0 // pred_region
    _
  $region9: #{forward.1} parent=0 // pred_fallthru
    _
  // Predicated region
  $region10: #{forward.1} parent=0 // pred_check
    _
  $region11: #{forward.1} parent=0 // pred_check_branch
    %22 = sbr.rel (0) target = $region13
  $region12: #{forward.1} parent=0 // pred_region
    _
  $region13: #{forward.1} parent=0 // pred_fallthru
    _
  // Predicated region
  $region14: #{forward.1} parent=0 // pred_check
    _
  $region15: #{forward.1} parent=0 // pred_check_branch
    %24 = sbr.rel (0) target = $region17
  $region16: #{forward.1} parent=0 // pred_region
    _
  $region17: #{forward.1} parent=0 // pred_fallthru
    _
  // Predicated region
  $region18: #{forward.1} parent=0 // pred_check
    _
  $region19: #{forward.1} parent=0 // pred_check_branch
    %26 = sbr.rel (0) target = $region21
  $region20: #{forward.1} parent=0 // pred_region
    _
  $region21: #{forward.1} parent=0 // pred_fallthru
    _
  // Predicated region
  $region22: #{forward.1} parent=0 // pred_check
    _
  $region23: #{forward.1} parent=0 // pred_check_branch
    %28 = sbr.rel (0) target = $region25
  $region24: #{forward.1} parent=0 // pred_region
    _
  $region25: #{forward.1} parent=0 // pred_fallthru
    _
  // Predicated region
  $region26: #{forward.1} parent=0 // pred_check
    _
  $region27: #{forward.1} parent=0 // pred_check_branch
    %30 = sbr.rel (0) target = $region29
  $region28: #{forward.1} parent=0 // pred_region
    _
  $region29: #{forward.1} parent=0 // pred_fallthru
    _
  // Predicated region
  $region30: #{forward.1} parent=0 // pred_check
    _
  $region31: #{forward.1} parent=0 // pred_check_branch
    %32 = sbr.rel (0) target = $region33
  $region32: #{forward.1} parent=0 // pred_region
    _
  $region33: #{forward.1} parent=0 // pred_fallthru
    _
  // Predicated region
  $region34: #{forward.1} parent=0 // pred_check
    _
  $region35: #{forward.1} parent=0 // pred_check_branch
    %34 = sbr.rel (0) target = $region37
  $region36: #{forward.1} parent=0 // pred_region
    _
  $region37: #{forward.1} parent=0 // pred_fallthru
    _
  // Predicated region
  $region38: #{forward.1} parent=0 // pred_check
    _
  $region39: #{forward.1} parent=0 // pred_check_branch
    %36 = sbr.rel (0) target = $region41
  $region40: #{forward.1} parent=0 // pred_region
    _
  $region41: #{forward.1} parent=0 // pred_fallthru
    _
  %v37 = vld [vmem:[%s2] sm:$0x1]
  %v38 = vld [vmem:[%s0] sm:$0xff]
  %v39 = vld [vmem:[%s0 + $0x8] sm:$0xff]
  %v40 = vld [vmem:[%s0 + $0x10] sm:$0xff]
  %v41 = vld [vmem:[%s0 + $0x18] sm:$0xff]
  %v42 = vld [vmem:[%s0 + $0x20] sm:$0xff]
  %v43 = vld [vmem:[%s0 + $0x28] sm:$0xff]
  %v44 = vld [vmem:[%s0 + $0x30] sm:$0xff]
  %v45 = vld [vmem:[%s0 + $0x38] sm:$0xff]
  %v46 = vld [vmem:[%s0 + $0x40] sm:$0xff]
  %v47 = vld [vmem:[%s0 + $0x48] sm:$0xff]
  %v48 = vld [vmem:[%s0 + $0x50] sm:$0xff]
  %v49 = vld [vmem:[%s0 + $0x58] sm:$0xff]
  %v50 = vld [vmem:[%s0 + $0x60] sm:$0xff]
  %v51 = vld [vmem:[%s0 + $0x68] sm:$0xff]
  %v52 = vld [vmem:[%s0 + $0x70] sm:$0xff]
  %v53 = vld [vmem:[%s0 + $0x78] sm:$0xff]
  %v54 = vld [vmem:[%s1] sm:$0xff]
  %v55 = vld [vmem:[%s1 + $0x8] sm:$0x1]
  %v57 = vlaneseq
  %v58 = vshrl.u32 %v57, 7
  %v59 = vsub.s32 0, %v58
  %v60 = vrot.slane %v37, %v59
  %vm62 = vcmask 72704
  %v64 = vsel %vm62, %v38, 0
  %v67 = vsel %vm62, %v39, 0
  %v70 = vsel %vm62, %v40, 0
  %v73 = vsel %vm62, %v41, 0
  %v76 = vsel %vm62, %v42, 0
  %v79 = vsel %vm62, %v43, 0
  %v82 = vsel %vm62, %v44, 0
  %v85 = vsel %vm62, %v45, 0
  %v88 = vsel %vm62, %v46, 0
  %v91 = vsel %vm62, %v47, 0
  %v94 = vsel %vm62, %v48, 0
  %v97 = vsel %vm62, %v49, 0
  %v100 = vsel %vm62, %v50, 0
  %v103 = vsel %vm62, %v51, 0
  %v106 = vsel %vm62, %v52, 0
  %v109 = vsel %vm62, %v53, 0
  %vm111 = vcmask 1040384
  %v113 = vsel %vm111, %v55, 0
  %115 = vmatprep.subr.mxu0 0.0
  %116 = vmatpush1.msra.mxu0 %v54
  %117 = vmatprep.subr.mxu0 0.0
  %118 = vmatpush1.msra.mxu0 %v113
  %119 = vmatprep.subr.mxu0 0.0
  %120 = vmatpush1.msra.mxu0 0.0
  %121 = vmatprep.subr.mxu0 0.0
  %122 = vmatpush1.msra.mxu0 0.0
  %123 = vmatprep.subr.mxu0 0.0
  %124 = vmatpush1.msra.mxu0 0.0
  %125 = vmatprep.subr.mxu0 0.0
  %126 = vmatpush1.msra.mxu0 0.0
  %127 = vmatprep.subr.mxu0 0.0
  %128 = vmatpush1.msra.mxu0 0.0
  %129 = vmatprep.subr.mxu0 0.0
  %130 = vmatpush1.msra.mxu0 0.0
  %131 = vmatprep.subr.mxu0 0.0
  %132 = vmatpush1.msra.mxu0 0.0
  %133 = vmatprep.subr.mxu0 0.0
  %134 = vmatpush1.msra.mxu0 0.0
  %135 = vmatprep.subr.mxu0 0.0
  %136 = vmatpush1.msra.mxu0 0.0
  %137 = vmatprep.subr.mxu0 0.0
  %138 = vmatpush1.msra.mxu0 0.0
  %139 = vmatprep.subr.mxu0 0.0
  %140 = vmatpush1.msra.mxu0 0.0
  %141 = vmatprep.subr.mxu0 0.0
  %142 = vmatpush1.msra.mxu0 0.0
  %143 = vmatprep.subr.mxu0 0.0
  %144 = vmatpush1.msra.mxu0 0.0
  %145 = vmatprep.subr.mxu0 0.0
  %146 = vmatpush1.msra.mxu0 0.0
  %147 = vmatprep.subr.mxu0 0.0
  %148 = vmatpush1.msra.mxu0 0.0
  %149 = vmatprep.subr.mxu0 0.0
  %150 = vmatpush1.msra.mxu0 0.0
  %151 = vmatprep.subr.mxu0 0.0
  %152 = vmatpush1.msra.mxu0 0.0
  %153 = vmatprep.subr.mxu0 0.0
  %154 = vmatpush1.msra.mxu0 0.0
  %155 = vmatprep.subr.mxu0 0.0
  %156 = vmatpush1.msra.mxu0 0.0
  %157 = vmatprep.subr.mxu0 0.0
  %158 = vmatpush1.msra.mxu0 0.0
  %159 = vmatprep.subr.mxu0 0.0
  %160 = vmatpush1.msra.mxu0 0.0
  %161 = vmatprep.subr.mxu0 0.0
  %162 = vmatpush1.msra.mxu0 0.0
  %163 = vmatprep.subr.mxu0 0.0
  %164 = vmatpush1.msra.mxu0 0.0
  %165 = vmatprep.subr.mxu0 0.0
  %166 = vmatpush1.msra.mxu0 0.0
  %167 = vmatprep.subr.mxu0 0.0
  %168 = vmatpush1.msra.mxu0 0.0
  %169 = vmatprep.subr.mxu0 0.0
  %170 = vmatpush1.msra.mxu0 0.0
  %171 = vmatprep.subr.mxu0 0.0
  %172 = vmatpush1.msra.mxu0 0.0
  %173 = vmatprep.subr.mxu0 0.0
  %174 = vmatpush1.msra.mxu0 0.0
  %175 = vmatprep.subr.mxu0 0.0
  %176 = vmatpush1.msra.mxu0 0.0
  %177 = vmatprep.subr.mxu0 0.0
  %178 = vmatpush1.msra.mxu0 0.0
  %179 = vmatprep.mubr.f32.mxu0 0.0
  %180 = vmatmul.mubr.f32.gmra.mrb[0].mxu0 %v64
  %v181 = vpop.f32.mrb[0].mxu0
  %v182 = vadd.f32 %v60, %v181
  %v183 = vpop.f32.mrb[0].mxu0
  %184 = vmatprep.mubr.f32.mxu0 0.0
  %185 = vmatmul.mubr.f32.gmra.mrb[0].mxu0 %v67
  %v186 = vpop.f32.mrb[0].mxu0
  %v187 = vadd.f32 %v60, %v186
  %v188 = vpop.f32.mrb[0].mxu0
  %189 = vmatprep.mubr.f32.mxu0 0.0
  %190 = vmatmul.mubr.f32.gmra.mrb[0].mxu0 %v70
  %v191 = vpop.f32.mrb[0].mxu0
  %v192 = vadd.f32 %v60, %v191
  %v193 = vpop.f32.mrb[0].mxu0
  %194 = vmatprep.mubr.f32.mxu0 0.0
  %195 = vmatmul.mubr.f32.gmra.mrb[0].mxu0 %v73
  %v196 = vpop.f32.mrb[0].mxu0
  %v197 = vadd.f32 %v60, %v196
  %v198 = vpop.f32.mrb[0].mxu0
  %199 = vmatprep.mubr.f32.mxu0 0.0
  %200 = vmatmul.mubr.f32.gmra.mrb[0].mxu0 %v76
  %v201 = vpop.f32.mrb[0].mxu0
  %v202 = vadd.f32 %v60, %v201
  %v203 = vpop.f32.mrb[0].mxu0
  %204 = vmatprep.mubr.f32.mxu0 0.0
  %205 = vmatmul.mubr.f32.gmra.mrb[0].mxu0 %v79
  %v206 = vpop.f32.mrb[0].mxu0
  %v207 = vadd.f32 %v60, %v206
  %v208 = vpop.f32.mrb[0].mxu0
  %209 = vmatprep.mubr.f32.mxu0 0.0
  %210 = vmatmul.mubr.f32.gmra.mrb[0].mxu0 %v82
  %v211 = vpop.f32.mrb[0].mxu0
  %v212 = vadd.f32 %v60, %v211
  %v213 = vpop.f32.mrb[0].mxu0
  %214 = vmatprep.mubr.f32.mxu0 0.0
  %215 = vmatmul.mubr.f32.gmra.mrb[0].mxu0 %v85
  %v216 = vpop.f32.mrb[0].mxu0
  %v217 = vadd.f32 %v60, %v216
  %v218 = vpop.f32.mrb[0].mxu0
  %219 = vmatprep.mubr.f32.mxu0 0.0
  %220 = vmatmul.mubr.f32.gmra.mrb[0].mxu0 %v88
  %v221 = vpop.f32.mrb[0].mxu0
  %v222 = vadd.f32 %v60, %v221
  %v223 = vpop.f32.mrb[0].mxu0
  %224 = vmatprep.mubr.f32.mxu0 0.0
  %225 = vmatmul.mubr.f32.gmra.mrb[0].mxu0 %v91
  %v226 = vpop.f32.mrb[0].mxu0
  %v227 = vadd.f32 %v60, %v226
  %v228 = vpop.f32.mrb[0].mxu0
  %229 = vmatprep.mubr.f32.mxu0 0.0
  %230 = vmatmul.mubr.f32.gmra.mrb[0].mxu0 %v94
  %v231 = vpop.f32.mrb[0].mxu0
  %v232 = vadd.f32 %v60, %v231
  %v233 = vpop.f32.mrb[0].mxu0
  %234 = vmatprep.mubr.f32.mxu0 0.0
  %235 = vmatmul.mubr.f32.gmra.mrb[0].mxu0 %v97
  %v236 = vpop.f32.mrb[0].mxu0
  %v237 = vadd.f32 %v60, %v236
  %v238 = vpop.f32.mrb[0].mxu0
  %239 = vmatprep.mubr.f32.mxu0 0.0
  %240 = vmatmul.mubr.f32.gmra.mrb[0].mxu0 %v100
  %v241 = vpop.f32.mrb[0].mxu0
  %v242 = vadd.f32 %v60, %v241
  %v243 = vpop.f32.mrb[0].mxu0
  %244 = vmatprep.mubr.f32.mxu0 0.0
  %245 = vmatmul.mubr.f32.gmra.mrb[0].mxu0 %v103
  %v246 = vpop.f32.mrb[0].mxu0
  %v247 = vadd.f32 %v60, %v246
  %v248 = vpop.f32.mrb[0].mxu0
  %249 = vmatprep.mubr.f32.mxu0 0.0
  %250 = vmatmul.mubr.f32.gmra.mrb[0].mxu0 %v106
  %v251 = vpop.f32.mrb[0].mxu0
  %v252 = vadd.f32 %v60, %v251
  %v253 = vpop.f32.mrb[0].mxu0
  %254 = vmatprep.mubr.f32.mxu0 0.0
  %255 = vmatmul.mubr.f32.gmra.mrb[0].mxu0 %v109
  %v256 = vpop.f32.mrb[0].mxu0
  %v257 = vadd.f32 %v60, %v256
  %v258 = vpop.f32.mrb[0].mxu0
  %259 = vdwg.mxu0
  %v260 = vmax.f32 %v182, 0.0
  %v261 = vmax.f32 %v187, 0.0
  %v262 = vmax.f32 %v192, 0.0
  %v263 = vmax.f32 %v197, 0.0
  %v264 = vmax.f32 %v202, 0.0
  %v265 = vmax.f32 %v207, 0.0
  %v266 = vmax.f32 %v212, 0.0
  %v267 = vmax.f32 %v217, 0.0
  %v268 = vmax.f32 %v222, 0.0
  %v269 = vmax.f32 %v227, 0.0
  %v270 = vmax.f32 %v232, 0.0
  %v271 = vmax.f32 %v237, 0.0
  %v272 = vmax.f32 %v242, 0.0
  %v273 = vmax.f32 %v247, 0.0
  %v274 = vmax.f32 %v252, 0.0
  %v275 = vmax.f32 %v257, 0.0
  %s276 = scalar_lea.vmem %s0, 128
  %v277 = vld [vmem:[%s276] sm:$0xff]
  %v278 = vld [vmem:[%s276 + $0x8] sm:$0xff]
  %v279 = vld [vmem:[%s276 + $0x10] sm:$0xff]
  %v280 = vld [vmem:[%s276 + $0x18] sm:$0xff]
  %v281 = vld [vmem:[%s276 + $0x20] sm:$0xff]
  %v282 = vld [vmem:[%s276 + $0x28] sm:$0xff]
  %v283 = vld [vmem:[%s276 + $0x30] sm:$0xff]
  %v284 = vld [vmem:[%s276 + $0x38] sm:$0xff]
  %v285 = vld [vmem:[%s276 + $0x40] sm:$0xff]
  %v286 = vld [vmem:[%s276 + $0x48] sm:$0xff]
  %v287 = vld [vmem:[%s276 + $0x50] sm:$0xff]
  %v288 = vld [vmem:[%s276 + $0x58] sm:$0xff]
  %v289 = vld [vmem:[%s276 + $0x60] sm:$0xff]
  %v290 = vld [vmem:[%s276 + $0x68] sm:$0xff]
  %v291 = vld [vmem:[%s276 + $0x70] sm:$0xff]
  %v292 = vld [vmem:[%s276 + $0x78] sm:$0xff]
  %v294 = vsel %vm62, %v277, 0
  %v297 = vsel %vm62, %v278, 0
  %v300 = vsel %vm62, %v279, 0
  %v303 = vsel %vm62, %v280, 0
  %v306 = vsel %vm62, %v281, 0
  %v309 = vsel %vm62, %v282, 0
  %v312 = vsel %vm62, %v283, 0
  %v315 = vsel %vm62, %v284, 0
  %v318 = vsel %vm62, %v285, 0
  %v321 = vsel %vm62, %v286, 0
  %v324 = vsel %vm62, %v287, 0
  %v327 = vsel %vm62, %v288, 0
  %v330 = vsel %vm62, %v289, 0
  %v333 = vsel %vm62, %v290, 0
  %v336 = vsel %vm62, %v291, 0
  %v339 = vsel %vm62, %v292, 0
  %341 = vmatprep.subr.mxu0 0.0
  %342 = vmatpush1.msra.mxu0 %v54
  %343 = vmatprep.subr.mxu0 0.0
  %344 = vmatpush1.msra.mxu0 %v113
  %345 = vmatprep.subr.mxu0 0.0
  %346 = vmatpush1.msra.mxu0 0.0
  %347 = vmatprep.subr.mxu0 0.0
  %348 = vmatpush1.msra.mxu0 0.0
  %349 = vmatprep.subr.mxu0 0.0
  %350 = vmatpush1.msra.mxu0 0.0
  %351 = vmatprep.subr.mxu0 0.0
  %352 = vmatpush1.msra.mxu0 0.0
  %353 = vmatprep.subr.mxu0 0.0
  %354 = vmatpush1.msra.mxu0 0.0
  %355 = vmatprep.subr.mxu0 0.0
  %356 = vmatpush1.msra.mxu0 0.0
  %357 = vmatprep.subr.mxu0 0.0
  %358 = vmatpush1.msra.mxu0 0.0
  %359 = vmatprep.subr.mxu0 0.0
  %360 = vmatpush1.msra.mxu0 0.0
  %361 = vmatprep.subr.mxu0 0.0
  %362 = vmatpush1.msra.mxu0 0.0
  %363 = vmatprep.subr.mxu0 0.0
  %364 = vmatpush1.msra.mxu0 0.0
  %365 = vmatprep.subr.mxu0 0.0
  %366 = vmatpush1.msra.mxu0 0.0
  %367 = vmatprep.subr.mxu0 0.0
  %368 = vmatpush1.msra.mxu0 0.0
  %369 = vmatprep.subr.mxu0 0.0
  %370 = vmatpush1.msra.mxu0 0.0
  %371 = vmatprep.subr.mxu0 0.0
  %372 = vmatpush1.msra.mxu0 0.0
  %373 = vmatprep.subr.mxu0 0.0
  %374 = vmatpush1.msra.mxu0 0.0
  %375 = vmatprep.subr.mxu0 0.0
  %376 = vmatpush1.msra.mxu0 0.0
  %377 = vmatprep.subr.mxu0 0.0
  %378 = vmatpush1.msra.mxu0 0.0
  %379 = vmatprep.subr.mxu0 0.0
  %380 = vmatpush1.msra.mxu0 0.0
  %381 = vmatprep.subr.mxu0 0.0
  %382 = vmatpush1.msra.mxu0 0.0
  %383 = vmatprep.subr.mxu0 0.0
  %384 = vmatpush1.msra.mxu0 0.0
  %385 = vmatprep.subr.mxu0 0.0
  %386 = vmatpush1.msra.mxu0 0.0
  %387 = vmatprep.subr.mxu0 0.0
  %388 = vmatpush1.msra.mxu0 0.0
  %389 = vmatprep.subr.mxu0 0.0
  %390 = vmatpush1.msra.mxu0 0.0
  %391 = vmatprep.subr.mxu0 0.0
  %392 = vmatpush1.msra.mxu0 0.0
  %393 = vmatprep.subr.mxu0 0.0
  %394 = vmatpush1.msra.mxu0 0.0
  %395 = vmatprep.subr.mxu0 0.0
  %396 = vmatpush1.msra.mxu0 0.0
  %397 = vmatprep.subr.mxu0 0.0
  %398 = vmatpush1.msra.mxu0 0.0
  %399 = vmatprep.subr.mxu0 0.0
  %400 = vmatpush1.msra.mxu0 0.0
  %401 = vmatprep.subr.mxu0 0.0
  %402 = vmatpush1.msra.mxu0 0.0
  %403 = vmatprep.subr.mxu0 0.0
  %404 = vmatpush1.msra.mxu0 0.0
  %405 = vmatprep.mubr.f32.mxu0 0.0
  %406 = vmatmul.mubr.f32.gmra.mrb[0].mxu0 %v294
  %v407 = vpop.f32.mrb[0].mxu0
  %v408 = vadd.f32 %v60, %v407
  %v409 = vpop.f32.mrb[0].mxu0
  %410 = vmatprep.mubr.f32.mxu0 0.0
  %411 = vmatmul.mubr.f32.gmra.mrb[0].mxu0 %v297
  %v412 = vpop.f32.mrb[0].mxu0
  %v413 = vadd.f32 %v60, %v412
  %v414 = vpop.f32.mrb[0].mxu0
  %415 = vmatprep.mubr.f32.mxu0 0.0
  %416 = vmatmul.mubr.f32.gmra.mrb[0].mxu0 %v300
  %v417 = vpop.f32.mrb[0].mxu0
  %v418 = vadd.f32 %v60, %v417
  %v419 = vpop.f32.mrb[0].mxu0
  %420 = vmatprep.mubr.f32.mxu0 0.0
  %421 = vmatmul.mubr.f32.gmra.mrb[0].mxu0 %v303
  %v422 = vpop.f32.mrb[0].mxu0
  %v423 = vadd.f32 %v60, %v422
  %v424 = vpop.f32.mrb[0].mxu0
  %425 = vmatprep.mubr.f32.mxu0 0.0
  %426 = vmatmul.mubr.f32.gmra.mrb[0].mxu0 %v306
  %v427 = vpop.f32.mrb[0].mxu0
  %v428 = vadd.f32 %v60, %v427
  %v429 = vpop.f32.mrb[0].mxu0
  %430 = vmatprep.mubr.f32.mxu0 0.0
  %431 = vmatmul.mubr.f32.gmra.mrb[0].mxu0 %v309
  %v432 = vpop.f32.mrb[0].mxu0
  %v433 = vadd.f32 %v60, %v432
  %v434 = vpop.f32.mrb[0].mxu0
  %435 = vmatprep.mubr.f32.mxu0 0.0
  %436 = vmatmul.mubr.f32.gmra.mrb[0].mxu0 %v312
  %v437 = vpop.f32.mrb[0].mxu0
  %v438 = vadd.f32 %v60, %v437
  %v439 = vpop.f32.mrb[0].mxu0
  %440 = vmatprep.mubr.f32.mxu0 0.0
  %441 = vmatmul.mubr.f32.gmra.mrb[0].mxu0 %v315
  %v442 = vpop.f32.mrb[0].mxu0
  %v443 = vadd.f32 %v60, %v442
  %v444 = vpop.f32.mrb[0].mxu0
  %445 = vmatprep.mubr.f32.mxu0 0.0
  %446 = vmatmul.mubr.f32.gmra.mrb[0].mxu0 %v318
  %v447 = vpop.f32.mrb[0].mxu0
  %v448 = vadd.f32 %v60, %v447
  %v449 = vpop.f32.mrb[0].mxu0
  %450 = vmatprep.mubr.f32.mxu0 0.0
  %451 = vmatmul.mubr.f32.gmra.mrb[0].mxu0 %v321
  %v452 = vpop.f32.mrb[0].mxu0
  %v453 = vadd.f32 %v60, %v452
  %v454 = vpop.f32.mrb[0].mxu0
  %455 = vmatprep.mubr.f32.mxu0 0.0
  %456 = vmatmul.mubr.f32.gmra.mrb[0].mxu0 %v324
  %v457 = vpop.f32.mrb[0].mxu0
  %v458 = vadd.f32 %v60, %v457
  %v459 = vpop.f32.mrb[0].mxu0
  %460 = vmatprep.mubr.f32.mxu0 0.0
  %461 = vmatmul.mubr.f32.gmra.mrb[0].mxu0 %v327
  %v462 = vpop.f32.mrb[0].mxu0
  %v463 = vadd.f32 %v60, %v462
  %v464 = vpop.f32.mrb[0].mxu0
  %465 = vmatprep.mubr.f32.mxu0 0.0
  %466 = vmatmul.mubr.f32.gmra.mrb[0].mxu0 %v330
  %v467 = vpop.f32.mrb[0].mxu0
  %v468 = vadd.f32 %v60, %v467
  %v469 = vpop.f32.mrb[0].mxu0
  %470 = vmatprep.mubr.f32.mxu0 0.0
  %471 = vmatmul.mubr.f32.gmra.mrb[0].mxu0 %v333
  %v472 = vpop.f32.mrb[0].mxu0
  %v473 = vadd.f32 %v60, %v472
  %v474 = vpop.f32.mrb[0].mxu0
  %475 = vmatprep.mubr.f32.mxu0 0.0
  %476 = vmatmul.mubr.f32.gmra.mrb[0].mxu0 %v336
  %v477 = vpop.f32.mrb[0].mxu0
  %v478 = vadd.f32 %v60, %v477
  %v479 = vpop.f32.mrb[0].mxu0
  %480 = vmatprep.mubr.f32.mxu0 0.0
  %481 = vmatmul.mubr.f32.gmra.mrb[0].mxu0 %v339
  %v482 = vpop.f32.mrb[0].mxu0
  %v483 = vadd.f32 %v60, %v482
  %v484 = vpop.f32.mrb[0].mxu0
  %485 = vdwg.mxu0
  %v486 = vmax.f32 %v408, 0.0
  %v487 = vmax.f32 %v413, 0.0
  %v488 = vmax.f32 %v418, 0.0
  %v489 = vmax.f32 %v423, 0.0
  %v490 = vmax.f32 %v428, 0.0
  %v491 = vmax.f32 %v433, 0.0
  %v492 = vmax.f32 %v438, 0.0
  %v493 = vmax.f32 %v443, 0.0
  %v494 = vmax.f32 %v448, 0.0
  %v495 = vmax.f32 %v453, 0.0
  %v496 = vmax.f32 %v458, 0.0
  %v497 = vmax.f32 %v463, 0.0
  %v498 = vmax.f32 %v468, 0.0
  %v499 = vmax.f32 %v473, 0.0
  %v500 = vmax.f32 %v478, 0.0
  %v501 = vmax.f32 %v483, 0.0
  %v502 = vmax.f32 %v260, %v486
  %v503 = vmax.f32 %v261, %v487
  %v504 = vmax.f32 %v262, %v488
  %v505 = vmax.f32 %v263, %v489
  %v506 = vmax.f32 %v264, %v490
  %v507 = vmax.f32 %v265, %v491
  %v508 = vmax.f32 %v266, %v492
  %v509 = vmax.f32 %v267, %v493
  %v510 = vmax.f32 %v268, %v494
  %v511 = vmax.f32 %v269, %v495
  %v512 = vmax.f32 %v270, %v496
  %v513 = vmax.f32 %v271, %v497
  %v514 = vmax.f32 %v272, %v498
  %v515 = vmax.f32 %v273, %v499
  %v516 = vmax.f32 %v274, %v500
  %v517 = vmax.f32 %v275, %v501
  %s518 = scalar_lea.vmem %s0, 256
  %v519 = vld [vmem:[%s518] sm:$0xff]
  %v520 = vld [vmem:[%s518 + $0x8] sm:$0xff]
  %v521 = vld [vmem:[%s518 + $0x10] sm:$0xff]
  %v522 = vld [vmem:[%s518 + $0x18] sm:$0xff]
  %v523 = vld [vmem:[%s518 + $0x20] sm:$0xff]
  %v524 = vld [vmem:[%s518 + $0x28] sm:$0xff]
  %v525 = vld [vmem:[%s518 + $0x30] sm:$0xff]
  %v526 = vld [vmem:[%s518 + $0x38] sm:$0xff]
  %v527 = vld [vmem:[%s518 + $0x40] sm:$0xff]
  %v528 = vld [vmem:[%s518 + $0x48] sm:$0xff]
  %v529 = vld [vmem:[%s518 + $0x50] sm:$0xff]
  %v530 = vld [vmem:[%s518 + $0x58] sm:$0xff]
  %v531 = vld [vmem:[%s518 + $0x60] sm:$0xff]
  %v532 = vld [vmem:[%s518 + $0x68] sm:$0xff]
  %v533 = vld [vmem:[%s518 + $0x70] sm:$0xff]
  %v534 = vld [vmem:[%s518 + $0x78] sm:$0xff]
  %v536 = vsel %vm62, %v519, 0
  %v539 = vsel %vm62, %v520, 0
  %v542 = vsel %vm62, %v521, 0
  %v545 = vsel %vm62, %v522, 0
  %v548 = vsel %vm62, %v523, 0
  %v551 = vsel %vm62, %v524, 0
  %v554 = vsel %vm62, %v525, 0
  %v557 = vsel %vm62, %v526, 0
  %v560 = vsel %vm62, %v527, 0
  %v563 = vsel %vm62, %v528, 0
  %v566 = vsel %vm62, %v529, 0
  %v569 = vsel %vm62, %v530, 0
  %v572 = vsel %vm62, %v531, 0
  %v575 = vsel %vm62, %v532, 0
  %v578 = vsel %vm62, %v533, 0
  %v581 = vsel %vm62, %v534, 0
  %583 = vmatprep.subr.mxu0 0.0
  %584 = vmatpush1.msra.mxu0 %v54
  %585 = vmatprep.subr.mxu0 0.0
  %586 = vmatpush1.msra.mxu0 %v113
  %587 = vmatprep.subr.mxu0 0.0
  %588 = vmatpush1.msra.mxu0 0.0
  %589 = vmatprep.subr.mxu0 0.0
  %590 = vmatpush1.msra.mxu0 0.0
  %591 = vmatprep.subr.mxu0 0.0
  %592 = vmatpush1.msra.mxu0 0.0
  %593 = vmatprep.subr.mxu0 0.0
  %594 = vmatpush1.msra.mxu0 0.0
  %595 = vmatprep.subr.mxu0 0.0
  %596 = vmatpush1.msra.mxu0 0.0
  %597 = vmatprep.subr.mxu0 0.0
  %598 = vmatpush1.msra.mxu0 0.0
  %599 = vmatprep.subr.mxu0 0.0
  %600 = vmatpush1.msra.mxu0 0.0
  %601 = vmatprep.subr.mxu0 0.0
  %602 = vmatpush1.msra.mxu0 0.0
  %603 = vmatprep.subr.mxu0 0.0
  %604 = vmatpush1.msra.mxu0 0.0
  %605 = vmatprep.subr.mxu0 0.0
  %606 = vmatpush1.msra.mxu0 0.0
  %607 = vmatprep.subr.mxu0 0.0
  %608 = vmatpush1.msra.mxu0 0.0
  %609 = vmatprep.subr.mxu0 0.0
  %610 = vmatpush1.msra.mxu0 0.0
  %611 = vmatprep.subr.mxu0 0.0
  %612 = vmatpush1.msra.mxu0 0.0
  %613 = vmatprep.subr.mxu0 0.0
  %614 = vmatpush1.msra.mxu0 0.0
  %615 = vmatprep.subr.mxu0 0.0
  %616 = vmatpush1.msra.mxu0 0.0
  %617 = vmatprep.subr.mxu0 0.0
  %618 = vmatpush1.msra.mxu0 0.0
  %619 = vmatprep.subr.mxu0 0.0
  %620 = vmatpush1.msra.mxu0 0.0
  %621 = vmatprep.subr.mxu0 0.0
  %622 = vmatpush1.msra.mxu0 0.0
  %623 = vmatprep.subr.mxu0 0.0
  %624 = vmatpush1.msra.mxu0 0.0
  %625 = vmatprep.subr.mxu0 0.0
  %626 = vmatpush1.msra.mxu0 0.0
  %627 = vmatprep.subr.mxu0 0.0
  %628 = vmatpush1.msra.mxu0 0.0
  %629 = vmatprep.subr.mxu0 0.0
  %630 = vmatpush1.msra.mxu0 0.0
  %631 = vmatprep.subr.mxu0 0.0
  %632 = vmatpush1.msra.mxu0 0.0
  %633 = vmatprep.subr.mxu0 0.0
  %634 = vmatpush1.msra.mxu0 0.0
  %635 = vmatprep.subr.mxu0 0.0
  %636 = vmatpush1.msra.mxu0 0.0
  %637 = vmatprep.subr.mxu0 0.0
  %638 = vmatpush1.msra.mxu0 0.0
  %639 = vmatprep.subr.mxu0 0.0
  %640 = vmatpush1.msra.mxu0 0.0
  %641 = vmatprep.subr.mxu0 0.0
  %642 = vmatpush1.msra.mxu0 0.0
  %643 = vmatprep.subr.mxu0 0.0
  %644 = vmatpush1.msra.mxu0 0.0
  %645 = vmatprep.subr.mxu0 0.0
  %646 = vmatpush1.msra.mxu0 0.0
  %647 = vmatprep.mubr.f32.mxu0 0.0
  %648 = vmatmul.mubr.f32.gmra.mrb[0].mxu0 %v536
  %v649 = vpop.f32.mrb[0].mxu0
  %v650 = vadd.f32 %v60, %v649
  %v651 = vpop.f32.mrb[0].mxu0
  %652 = vmatprep.mubr.f32.mxu0 0.0
  %653 = vmatmul.mubr.f32.gmra.mrb[0].mxu0 %v539
  %v654 = vpop.f32.mrb[0].mxu0
  %v655 = vadd.f32 %v60, %v654
  %v656 = vpop.f32.mrb[0].mxu0
  %657 = vmatprep.mubr.f32.mxu0 0.0
  %658 = vmatmul.mubr.f32.gmra.mrb[0].mxu0 %v542
  %v659 = vpop.f32.mrb[0].mxu0
  %v660 = vadd.f32 %v60, %v659
  %v661 = vpop.f32.mrb[0].mxu0
  %662 = vmatprep.mubr.f32.mxu0 0.0
  %663 = vmatmul.mubr.f32.gmra.mrb[0].mxu0 %v545
  %v664 = vpop.f32.mrb[0].mxu0
  %v665 = vadd.f32 %v60, %v664
  %v666 = vpop.f32.mrb[0].mxu0
  %667 = vmatprep.mubr.f32.mxu0 0.0
  %668 = vmatmul.mubr.f32.gmra.mrb[0].mxu0 %v548
  %v669 = vpop.f32.mrb[0].mxu0
  %v670 = vadd.f32 %v60, %v669
  %v671 = vpop.f32.mrb[0].mxu0
  %672 = vmatprep.mubr.f32.mxu0 0.0
  %673 = vmatmul.mubr.f32.gmra.mrb[0].mxu0 %v551
  %v674 = vpop.f32.mrb[0].mxu0
  %v675 = vadd.f32 %v60, %v674
  %v676 = vpop.f32.mrb[0].mxu0
  %677 = vmatprep.mubr.f32.mxu0 0.0
  %678 = vmatmul.mubr.f32.gmra.mrb[0].mxu0 %v554
  %v679 = vpop.f32.mrb[0].mxu0
  %v680 = vadd.f32 %v60, %v679
  %v681 = vpop.f32.mrb[0].mxu0
  %682 = vmatprep.mubr.f32.mxu0 0.0
  %683 = vmatmul.mubr.f32.gmra.mrb[0].mxu0 %v557
  %v684 = vpop.f32.mrb[0].mxu0
  %v685 = vadd.f32 %v60, %v684
  %v686 = vpop.f32.mrb[0].mxu0
  %687 = vmatprep.mubr.f32.mxu0 0.0
  %688 = vmatmul.mubr.f32.gmra.mrb[0].mxu0 %v560
  %v689 = vpop.f32.mrb[0].mxu0
  %v690 = vadd.f32 %v60, %v689
  %v691 = vpop.f32.mrb[0].mxu0
  %692 = vmatprep.mubr.f32.mxu0 0.0
  %693 = vmatmul.mubr.f32.gmra.mrb[0].mxu0 %v563
  %v694 = vpop.f32.mrb[0].mxu0
  %v695 = vadd.f32 %v60, %v694
  %v696 = vpop.f32.mrb[0].mxu0
  %697 = vmatprep.mubr.f32.mxu0 0.0
  %698 = vmatmul.mubr.f32.gmra.mrb[0].mxu0 %v566
  %v699 = vpop.f32.mrb[0].mxu0
  %v700 = vadd.f32 %v60, %v699
  %v701 = vpop.f32.mrb[0].mxu0
  %702 = vmatprep.mubr.f32.mxu0 0.0
  %703 = vmatmul.mubr.f32.gmra.mrb[0].mxu0 %v569
  %v704 = vpop.f32.mrb[0].mxu0
  %v705 = vadd.f32 %v60, %v704
  %v706 = vpop.f32.mrb[0].mxu0
  %707 = vmatprep.mubr.f32.mxu0 0.0
  %708 = vmatmul.mubr.f32.gmra.mrb[0].mxu0 %v572
  %v709 = vpop.f32.mrb[0].mxu0
  %v710 = vadd.f32 %v60, %v709
  %v711 = vpop.f32.mrb[0].mxu0
  %712 = vmatprep.mubr.f32.mxu0 0.0
  %713 = vmatmul.mubr.f32.gmra.mrb[0].mxu0 %v575
  %v714 = vpop.f32.mrb[0].mxu0
  %v715 = vadd.f32 %v60, %v714
  %v716 = vpop.f32.mrb[0].mxu0
  %717 = vmatprep.mubr.f32.mxu0 0.0
  %718 = vmatmul.mubr.f32.gmra.mrb[0].mxu0 %v578
  %v719 = vpop.f32.mrb[0].mxu0
  %v720 = vadd.f32 %v60, %v719
  %v721 = vpop.f32.mrb[0].mxu0
  %722 = vmatprep.mubr.f32.mxu0 0.0
  %723 = vmatmul.mubr.f32.gmra.mrb[0].mxu0 %v581
  %v724 = vpop.f32.mrb[0].mxu0
  %v725 = vadd.f32 %v60, %v724
  %v726 = vpop.f32.mrb[0].mxu0
  %727 = vdwg.mxu0
  %v728 = vmax.f32 %v650, 0.0
  %v729 = vmax.f32 %v655, 0.0
  %v730 = vmax.f32 %v660, 0.0
  %v731 = vmax.f32 %v665, 0.0
  %v732 = vmax.f32 %v670, 0.0
  %v733 = vmax.f32 %v675, 0.0
  %v734 = vmax.f32 %v680, 0.0
  %v735 = vmax.f32 %v685, 0.0
  %v736 = vmax.f32 %v690, 0.0
  %v737 = vmax.f32 %v695, 0.0
  %v738 = vmax.f32 %v700, 0.0
  %v739 = vmax.f32 %v705, 0.0
  %v740 = vmax.f32 %v710, 0.0
  %v741 = vmax.f32 %v715, 0.0
  %v742 = vmax.f32 %v720, 0.0
  %v743 = vmax.f32 %v725, 0.0
  %v744 = vmax.f32 %v502, %v728
  %v745 = vmax.f32 %v503, %v729
  %v746 = vmax.f32 %v504, %v730
  %v747 = vmax.f32 %v505, %v731
  %v748 = vmax.f32 %v506, %v732
  %v749 = vmax.f32 %v507, %v733
  %v750 = vmax.f32 %v508, %v734
  %v751 = vmax.f32 %v509, %v735
  %v752 = vmax.f32 %v510, %v736
  %v753 = vmax.f32 %v511, %v737
  %v754 = vmax.f32 %v512, %v738
  %v755 = vmax.f32 %v513, %v739
  %v756 = vmax.f32 %v514, %v740
  %v757 = vmax.f32 %v515, %v741
  %v758 = vmax.f32 %v516, %v742
  %v759 = vmax.f32 %v517, %v743
  %s760 = scalar_lea.vmem %s0, 384
  %v761 = vld [vmem:[%s760] sm:$0xff]
  %v762 = vld [vmem:[%s760 + $0x8] sm:$0xff]
  %v763 = vld [vmem:[%s760 + $0x10] sm:$0xff]
  %v764 = vld [vmem:[%s760 + $0x18] sm:$0xff]
  %v765 = vld [vmem:[%s760 + $0x20] sm:$0xff]
  %v766 = vld [vmem:[%s760 + $0x28] sm:$0xff]
  %v767 = vld [vmem:[%s760 + $0x30] sm:$0xff]
  %v768 = vld [vmem:[%s760 + $0x38] sm:$0xff]
  %v769 = vld [vmem:[%s760 + $0x40] sm:$0xff]
  %v770 = vld [vmem:[%s760 + $0x48] sm:$0xff]
  %v771 = vld [vmem:[%s760 + $0x50] sm:$0xff]
  %v772 = vld [vmem:[%s760 + $0x58] sm:$0xff]
  %v773 = vld [vmem:[%s760 + $0x60] sm:$0xff]
  %v774 = vld [vmem:[%s760 + $0x68] sm:$0xff]
  %v775 = vld [vmem:[%s760 + $0x70] sm:$0xff]
  %v776 = vld [vmem:[%s760 + $0x78] sm:$0xff]
  %v778 = vsel %vm62, %v761, 0
  %v781 = vsel %vm62, %v762, 0
  %v784 = vsel %vm62, %v763, 0
  %v787 = vsel %vm62, %v764, 0
  %v790 = vsel %vm62, %v765, 0
  %v793 = vsel %vm62, %v766, 0
  %v796 = vsel %vm62, %v767, 0
  %v799 = vsel %vm62, %v768, 0
  %v802 = vsel %vm62, %v769, 0
  %v805 = vsel %vm62, %v770, 0
  %v808 = vsel %vm62, %v771, 0
  %v811 = vsel %vm62, %v772, 0
  %v814 = vsel %vm62, %v773, 0
  %v817 = vsel %vm62, %v774, 0
  %v820 = vsel %vm62, %v775, 0
  %v823 = vsel %vm62, %v776, 0
  %825 = vmatprep.subr.mxu0 0.0
  %826 = vmatpush1.msra.mxu0 %v54
  %827 = vmatprep.subr.mxu0 0.0
  %828 = vmatpush1.msra.mxu0 %v113
  %829 = vmatprep.subr.mxu0 0.0
  %830 = vmatpush1.msra.mxu0 0.0
  %831 = vmatprep.subr.mxu0 0.0
  %832 = vmatpush1.msra.mxu0 0.0
  %833 = vmatprep.subr.mxu0 0.0
  %834 = vmatpush1.msra.mxu0 0.0
  %835 = vmatprep.subr.mxu0 0.0
  %836 = vmatpush1.msra.mxu0 0.0
  %837 = vmatprep.subr.mxu0 0.0
  %838 = vmatpush1.msra.mxu0 0.0
  %839 = vmatprep.subr.mxu0 0.0
  %840 = vmatpush1.msra.mxu0 0.0
  %841 = vmatprep.subr.mxu0 0.0
  %842 = vmatpush1.msra.mxu0 0.0
  %843 = vmatprep.subr.mxu0 0.0
  %844 = vmatpush1.msra.mxu0 0.0
  %845 = vmatprep.subr.mxu0 0.0
  %846 = vmatpush1.msra.mxu0 0.0
  %847 = vmatprep.subr.mxu0 0.0
  %848 = vmatpush1.msra.mxu0 0.0
  %849 = vmatprep.subr.mxu0 0.0
  %850 = vmatpush1.msra.mxu0 0.0
  %851 = vmatprep.subr.mxu0 0.0
  %852 = vmatpush1.msra.mxu0 0.0
  %853 = vmatprep.subr.mxu0 0.0
  %854 = vmatpush1.msra.mxu0 0.0
  %855 = vmatprep.subr.mxu0 0.0
  %856 = vmatpush1.msra.mxu0 0.0
  %857 = vmatprep.subr.mxu0 0.0
  %858 = vmatpush1.msra.mxu0 0.0
  %859 = vmatprep.subr.mxu0 0.0
  %860 = vmatpush1.msra.mxu0 0.0
  %861 = vmatprep.subr.mxu0 0.0
  %862 = vmatpush1.msra.mxu0 0.0
  %863 = vmatprep.subr.mxu0 0.0
  %864 = vmatpush1.msra.mxu0 0.0
  %865 = vmatprep.subr.mxu0 0.0
  %866 = vmatpush1.msra.mxu0 0.0
  %867 = vmatprep.subr.mxu0 0.0
  %868 = vmatpush1.msra.mxu0 0.0
  %869 = vmatprep.subr.mxu0 0.0
  %870 = vmatpush1.msra.mxu0 0.0
  %871 = vmatprep.subr.mxu0 0.0
  %872 = vmatpush1.msra.mxu0 0.0
  %873 = vmatprep.subr.mxu0 0.0
  %874 = vmatpush1.msra.mxu0 0.0
  %875 = vmatprep.subr.mxu0 0.0
  %876 = vmatpush1.msra.mxu0 0.0
  %877 = vmatprep.subr.mxu0 0.0
  %878 = vmatpush1.msra.mxu0 0.0
  %879 = vmatprep.subr.mxu0 0.0
  %880 = vmatpush1.msra.mxu0 0.0
  %881 = vmatprep.subr.mxu0 0.0
  %882 = vmatpush1.msra.mxu0 0.0
  %883 = vmatprep.subr.mxu0 0.0
  %884 = vmatpush1.msra.mxu0 0.0
  %885 = vmatprep.subr.mxu0 0.0
  %886 = vmatpush1.msra.mxu0 0.0
  %887 = vmatprep.subr.mxu0 0.0
  %888 = vmatpush1.msra.mxu0 0.0
  %889 = vmatprep.mubr.f32.mxu0 0.0
  %890 = vmatmul.mubr.f32.gmra.mrb[0].mxu0 %v778
  %v891 = vpop.f32.mrb[0].mxu0
  %v892 = vadd.f32 %v60, %v891
  %v893 = vpop.f32.mrb[0].mxu0
  %894 = vmatprep.mubr.f32.mxu0 0.0
  %895 = vmatmul.mubr.f32.gmra.mrb[0].mxu0 %v781
  %v896 = vpop.f32.mrb[0].mxu0
  %v897 = vadd.f32 %v60, %v896
  %v898 = vpop.f32.mrb[0].mxu0
  %899 = vmatprep.mubr.f32.mxu0 0.0
  %900 = vmatmul.mubr.f32.gmra.mrb[0].mxu0 %v784
  %v901 = vpop.f32.mrb[0].mxu0
  %v902 = vadd.f32 %v60, %v901
  %v903 = vpop.f32.mrb[0].mxu0
  %904 = vmatprep.mubr.f32.mxu0 0.0
  %905 = vmatmul.mubr.f32.gmra.mrb[0].mxu0 %v787
  %v906 = vpop.f32.mrb[0].mxu0
  %v907 = vadd.f32 %v60, %v906
  %v908 = vpop.f32.mrb[0].mxu0
  %909 = vmatprep.mubr.f32.mxu0 0.0
  %910 = vmatmul.mubr.f32.gmra.mrb[0].mxu0 %v790
  %v911 = vpop.f32.mrb[0].mxu0
  %v912 = vadd.f32 %v60, %v911
  %v913 = vpop.f32.mrb[0].mxu0
  %914 = vmatprep.mubr.f32.mxu0 0.0
  %915 = vmatmul.mubr.f32.gmra.mrb[0].mxu0 %v793
  %v916 = vpop.f32.mrb[0].mxu0
  %v917 = vadd.f32 %v60, %v916
  %v918 = vpop.f32.mrb[0].mxu0
  %919 = vmatprep.mubr.f32.mxu0 0.0
  %920 = vmatmul.mubr.f32.gmra.mrb[0].mxu0 %v796
  %v921 = vpop.f32.mrb[0].mxu0
  %v922 = vadd.f32 %v60, %v921
  %v923 = vpop.f32.mrb[0].mxu0
  %924 = vmatprep.mubr.f32.mxu0 0.0
  %925 = vmatmul.mubr.f32.gmra.mrb[0].mxu0 %v799
  %v926 = vpop.f32.mrb[0].mxu0
  %v927 = vadd.f32 %v60, %v926
  %v928 = vpop.f32.mrb[0].mxu0
  %929 = vmatprep.mubr.f32.mxu0 0.0
  %930 = vmatmul.mubr.f32.gmra.mrb[0].mxu0 %v802
  %v931 = vpop.f32.mrb[0].mxu0
  %v932 = vadd.f32 %v60, %v931
  %v933 = vpop.f32.mrb[0].mxu0
  %934 = vmatprep.mubr.f32.mxu0 0.0
  %935 = vmatmul.mubr.f32.gmra.mrb[0].mxu0 %v805
  %v936 = vpop.f32.mrb[0].mxu0
  %v937 = vadd.f32 %v60, %v936
  %v938 = vpop.f32.mrb[0].mxu0
  %939 = vmatprep.mubr.f32.mxu0 0.0
  %940 = vmatmul.mubr.f32.gmra.mrb[0].mxu0 %v808
  %v941 = vpop.f32.mrb[0].mxu0
  %v942 = vadd.f32 %v60, %v941
  %v943 = vpop.f32.mrb[0].mxu0
  %944 = vmatprep.mubr.f32.mxu0 0.0
  %945 = vmatmul.mubr.f32.gmra.mrb[0].mxu0 %v811
  %v946 = vpop.f32.mrb[0].mxu0
  %v947 = vadd.f32 %v60, %v946
  %v948 = vpop.f32.mrb[0].mxu0
  %949 = vmatprep.mubr.f32.mxu0 0.0
  %950 = vmatmul.mubr.f32.gmra.mrb[0].mxu0 %v814
  %v951 = vpop.f32.mrb[0].mxu0
  %v952 = vadd.f32 %v60, %v951
  %v953 = vpop.f32.mrb[0].mxu0
  %954 = vmatprep.mubr.f32.mxu0 0.0
  %955 = vmatmul.mubr.f32.gmra.mrb[0].mxu0 %v817
  %v956 = vpop.f32.mrb[0].mxu0
  %v957 = vadd.f32 %v60, %v956
  %v958 = vpop.f32.mrb[0].mxu0
  %959 = vmatprep.mubr.f32.mxu0 0.0
  %960 = vmatmul.mubr.f32.gmra.mrb[0].mxu0 %v820
  %v961 = vpop.f32.mrb[0].mxu0
  %v962 = vadd.f32 %v60, %v961
  %v963 = vpop.f32.mrb[0].mxu0
  %964 = vmatprep.mubr.f32.mxu0 0.0
  %965 = vmatmul.mubr.f32.gmra.mrb[0].mxu0 %v823
  %v966 = vpop.f32.mrb[0].mxu0
  %v967 = vadd.f32 %v60, %v966
  %v968 = vpop.f32.mrb[0].mxu0
  %969 = vdwg.mxu0
  %v970 = vmax.f32 %v892, 0.0
  %v971 = vmax.f32 %v897, 0.0
  %v972 = vmax.f32 %v902, 0.0
  %v973 = vmax.f32 %v907, 0.0
  %v974 = vmax.f32 %v912, 0.0
  %v975 = vmax.f32 %v917, 0.0
  %v976 = vmax.f32 %v922, 0.0
  %v977 = vmax.f32 %v927, 0.0
  %v978 = vmax.f32 %v932, 0.0
  %v979 = vmax.f32 %v937, 0.0
  %v980 = vmax.f32 %v942, 0.0
  %v981 = vmax.f32 %v947, 0.0
  %v982 = vmax.f32 %v952, 0.0
  %v983 = vmax.f32 %v957, 0.0
  %v984 = vmax.f32 %v962, 0.0
  %v985 = vmax.f32 %v967, 0.0
  %v986 = vmax.f32 %v744, %v970
  %v987 = vmax.f32 %v745, %v971
  %v988 = vmax.f32 %v746, %v972
  %v989 = vmax.f32 %v747, %v973
  %v990 = vmax.f32 %v748, %v974
  %v991 = vmax.f32 %v749, %v975
  %v992 = vmax.f32 %v750, %v976
  %v993 = vmax.f32 %v751, %v977
  %v994 = vmax.f32 %v752, %v978
  %v995 = vmax.f32 %v753, %v979
  %v996 = vmax.f32 %v754, %v980
  %v997 = vmax.f32 %v755, %v981
  %v998 = vmax.f32 %v756, %v982
  %v999 = vmax.f32 %v757, %v983
  %v1000 = vmax.f32 %v758, %v984
  %v1001 = vmax.f32 %v759, %v985
  %vm1002 = vcmask 261120
  %1003 = vst.msk [vmem:[#allocation2] sm:$0xff] %vm1002, %v986
  %1004 = vst.msk [vmem:[#allocation2 + $0x8] sm:$0xff] %vm1002, %v987
  %1005 = vst.msk [vmem:[#allocation2 + $0x10] sm:$0xff] %vm1002, %v988
  %1006 = vst.msk [vmem:[#allocation2 + $0x18] sm:$0xff] %vm1002, %v989
  %1007 = vst.msk [vmem:[#allocation2 + $0x20] sm:$0xff] %vm1002, %v990
  %1008 = vst.msk [vmem:[#allocation2 + $0x28] sm:$0xff] %vm1002, %v991
  %1009 = vst.msk [vmem:[#allocation2 + $0x30] sm:$0xff] %vm1002, %v992
  %1010 = vst.msk [vmem:[#allocation2 + $0x38] sm:$0xff] %vm1002, %v993
  %1011 = vst.msk [vmem:[#allocation2 + $0x40] sm:$0xff] %vm1002, %v994
  %1012 = vst.msk [vmem:[#allocation2 + $0x48] sm:$0xff] %vm1002, %v995
  %1013 = vst.msk [vmem:[#allocation2 + $0x50] sm:$0xff] %vm1002, %v996
  %1014 = vst.msk [vmem:[#allocation2 + $0x58] sm:$0xff] %vm1002, %v997
  %1015 = vst.msk [vmem:[#allocation2 + $0x60] sm:$0xff] %vm1002, %v998
  %1016 = vst.msk [vmem:[#allocation2 + $0x68] sm:$0xff] %vm1002, %v999
  %1017 = vst.msk [vmem:[#allocation2 + $0x70] sm:$0xff] %vm1002, %v1000
  %1018 = vst.msk [vmem:[#allocation2 + $0x78] sm:$0xff] %vm1002, %v1001
  %v1019 = vld [vmem:[#allocation2] sm:$0xff]
  %v1020 = vld [vmem:[#allocation2 + $0x8] sm:$0xff]
  %v1021 = vld [vmem:[#allocation2 + $0x10] sm:$0xff]
  %v1022 = vld [vmem:[#allocation2 + $0x18] sm:$0xff]
  %v1023 = vld [vmem:[#allocation2 + $0x20] sm:$0xff]
  %v1024 = vld [vmem:[#allocation2 + $0x28] sm:$0xff]
  %v1025 = vld [vmem:[#allocation2 + $0x30] sm:$0xff]
  %v1026 = vld [vmem:[#allocation2 + $0x38] sm:$0xff]
  %v1027 = vld [vmem:[#allocation2 + $0x40] sm:$0xff]
  %v1028 = vld [vmem:[#allocation2 + $0x48] sm:$0xff]
  %v1029 = vld [vmem:[#allocation2 + $0x50] sm:$0xff]
  %v1030 = vld [vmem:[#allocation2 + $0x58] sm:$0xff]
  %v1031 = vld [vmem:[#allocation2 + $0x60] sm:$0xff]
  %v1032 = vld [vmem:[#allocation2 + $0x68] sm:$0x3f]
  %v1033 = vld [vmem:[%s3] sm:$0xff]
  %v1034 = vld [vmem:[%s3 + $0x8] sm:$0xff]
  %v1035 = vld [vmem:[%s3 + $0x10] sm:$0xff]
  %v1036 = vld [vmem:[%s3 + $0x18] sm:$0xff]
  %v1037 = vld [vmem:[#allocation2 + $0x1] sm:$0xff]
  %v1038 = vld [vmem:[#allocation2 + $0x9] sm:$0xff]
  %v1039 = vld [vmem:[#allocation2 + $0x11] sm:$0xff]
  %v1040 = vld [vmem:[#allocation2 + $0x19] sm:$0xff]
  %v1041 = vld [vmem:[#allocation2 + $0x21] sm:$0xff]
  %v1042 = vld [vmem:[#allocation2 + $0x29] sm:$0xff]
  %v1043 = vld [vmem:[#allocation2 + $0x31] sm:$0xff]
  %v1044 = vld [vmem:[#allocation2 + $0x39] sm:$0xff]
  %v1045 = vld [vmem:[#allocation2 + $0x41] sm:$0xff]
  %v1046 = vld [vmem:[#allocation2 + $0x49] sm:$0xff]
  %v1047 = vld [vmem:[#allocation2 + $0x51] sm:$0xff]
  %v1048 = vld [vmem:[#allocation2 + $0x59] sm:$0xff]
  %v1049 = vld [vmem:[#allocation2 + $0x61] sm:$0xff]
  %v1050 = vld [vmem:[#allocation2 + $0x69] sm:$0x3f]
  %s1051 = scalar_lea.vmem %s3, 32
  %v1052 = vld [vmem:[%s1051] sm:$0xff]
  %v1053 = vld [vmem:[%s1051 + $0x8] sm:$0xff]
  %v1054 = vld [vmem:[%s1051 + $0x10] sm:$0xff]
  %v1055 = vld [vmem:[%s1051 + $0x18] sm:$0xff]
  %v1057 = vsel %vm1002, %v1037, 0
  %v1060 = vsel %vm1002, %v1038, 0
  %v1063 = vsel %vm1002, %v1039, 0
  %v1066 = vsel %vm1002, %v1040, 0
  %v1069 = vsel %vm1002, %v1041, 0
  %v1072 = vsel %vm1002, %v1042, 0
  %v1075 = vsel %vm1002, %v1043, 0
  %v1078 = vsel %vm1002, %v1044, 0
  %v1081 = vsel %vm1002, %v1045, 0
  %v1084 = vsel %vm1002, %v1046, 0
  %v1087 = vsel %vm1002, %v1047, 0
  %v1090 = vsel %vm1002, %v1048, 0
  %v1093 = vsel %vm1002, %v1049, 0
  %v1096 = vsel %vm1002, %v1050, 0
  %1098 = vmatprep.subr.mxu0 0.0
  %1099 = vmatpush1.msra.mxu0 %v1052
  %1100 = vmatprep.subr.mxu0 0.0
  %1101 = vmatpush1.msra.mxu0 %v1053
  %1102 = vmatprep.subr.mxu0 0.0
  %1103 = vmatpush1.msra.mxu0 %v1054
  %1104 = vmatprep.subr.mxu0 0.0
  %1105 = vmatpush1.msra.mxu0 %v1055
  %1106 = vmatprep.subr.mxu0 0.0
  %1107 = vmatpush1.msra.mxu0 0.0
  %1108 = vmatprep.subr.mxu0 0.0
  %1109 = vmatpush1.msra.mxu0 0.0
  %1110 = vmatprep.subr.mxu0 0.0
  %1111 = vmatpush1.msra.mxu0 0.0
  %1112 = vmatprep.subr.mxu0 0.0
  %1113 = vmatpush1.msra.mxu0 0.0
  %1114 = vmatprep.subr.mxu0 0.0
  %1115 = vmatpush1.msra.mxu0 0.0
  %1116 = vmatprep.subr.mxu0 0.0
  %1117 = vmatpush1.msra.mxu0 0.0
  %1118 = vmatprep.subr.mxu0 0.0
  %1119 = vmatpush1.msra.mxu0 0.0
  %1120 = vmatprep.subr.mxu0 0.0
  %1121 = vmatpush1.msra.mxu0 0.0
  %1122 = vmatprep.subr.mxu0 0.0
  %1123 = vmatpush1.msra.mxu0 0.0
  %1124 = vmatprep.subr.mxu0 0.0
  %1125 = vmatpush1.msra.mxu0 0.0
  %1126 = vmatprep.subr.mxu0 0.0
  %1127 = vmatpush1.msra.mxu0 0.0
  %1128 = vmatprep.subr.mxu0 0.0
  %1129 = vmatpush1.msra.mxu0 0.0
  %1130 = vmatprep.subr.mxu0 0.0
  %1131 = vmatpush1.msra.mxu0 0.0
  %1132 = vmatprep.subr.mxu0 0.0
  %1133 = vmatpush1.msra.mxu0 0.0
  %1134 = vmatprep.subr.mxu0 0.0
  %1135 = vmatpush1.msra.mxu0 0.0
  %1136 = vmatprep.subr.mxu0 0.0
  %1137 = vmatpush1.msra.mxu0 0.0
  %1138 = vmatprep.subr.mxu0 0.0
  %1139 = vmatpush1.msra.mxu0 0.0
  %1140 = vmatprep.subr.mxu0 0.0
  %1141 = vmatpush1.msra.mxu0 0.0
  %1142 = vmatprep.subr.mxu0 0.0
  %1143 = vmatpush1.msra.mxu0 0.0
  %1144 = vmatprep.subr.mxu0 0.0
  %1145 = vmatpush1.msra.mxu0 0.0
  %1146 = vmatprep.subr.mxu0 0.0
  %1147 = vmatpush1.msra.mxu0 0.0
  %1148 = vmatprep.subr.mxu0 0.0
  %1149 = vmatpush1.msra.mxu0 0.0
  %1150 = vmatprep.subr.mxu0 0.0
  %1151 = vmatpush1.msra.mxu0 0.0
  %1152 = vmatprep.subr.mxu0 0.0
  %1153 = vmatpush1.msra.mxu0 0.0
  %1154 = vmatprep.subr.mxu0 0.0
  %1155 = vmatpush1.msra.mxu0 0.0
  %1156 = vmatprep.subr.mxu0 0.0
  %1157 = vmatpush1.msra.mxu0 0.0
  %1158 = vmatprep.subr.mxu0 0.0
  %1159 = vmatpush1.msra.mxu0 0.0
  %1160 = vmatprep.subr.mxu0 0.0
  %1161 = vmatpush1.msra.mxu0 0.0
  %1162 = vmatprep.mubr.f32.mxu0 0.0
  %1163 = vmatmul.mubr.f32.gmra.mrb[0].mxu0 %v1057
  %v1164 = vpop.f32.mrb[0].mxu0
  %v1165 = vadd.f32 0.0, %v1164
  %v1166 = vpop.f32.mrb[0].mxu0
  %1167 = vmatprep.mubr.f32.mxu0 0.0
  %1168 = vmatmul.mubr.f32.gmra.mrb[0].mxu0 %v1060
  %v1169 = vpop.f32.mrb[0].mxu0
  %v1170 = vadd.f32 0.0, %v1169
  %v1171 = vpop.f32.mrb[0].mxu0
  %1172 = vmatprep.mubr.f32.mxu0 0.0
  %1173 = vmatmul.mubr.f32.gmra.mrb[0].mxu0 %v1063
  %v1174 = vpop.f32.mrb[0].mxu0
  %v1175 = vadd.f32 0.0, %v1174
  %v1176 = vpop.f32.mrb[0].mxu0
  %1177 = vmatprep.mubr.f32.mxu0 0.0
  %1178 = vmatmul.mubr.f32.gmra.mrb[0].mxu0 %v1066
  %v1179 = vpop.f32.mrb[0].mxu0
  %v1180 = vadd.f32 0.0, %v1179
  %v1181 = vpop.f32.mrb[0].mxu0
  %1182 = vmatprep.mubr.f32.mxu0 0.0
  %1183 = vmatmul.mubr.f32.gmra.mrb[0].mxu0 %v1069
  %v1184 = vpop.f32.mrb[0].mxu0
  %v1185 = vadd.f32 0.0, %v1184
  %v1186 = vpop.f32.mrb[0].mxu0
  %1187 = vmatprep.mubr.f32.mxu0 0.0
  %1188 = vmatmul.mubr.f32.gmra.mrb[0].mxu0 %v1072
  %v1189 = vpop.f32.mrb[0].mxu0
  %v1190 = vadd.f32 0.0, %v1189
  %v1191 = vpop.f32.mrb[0].mxu0
  %1192 = vmatprep.mubr.f32.mxu0 0.0
  %1193 = vmatmul.mubr.f32.gmra.mrb[0].mxu0 %v1075
  %v1194 = vpop.f32.mrb[0].mxu0
  %v1195 = vadd.f32 0.0, %v1194
  %v1196 = vpop.f32.mrb[0].mxu0
  %1197 = vmatprep.mubr.f32.mxu0 0.0
  %1198 = vmatmul.mubr.f32.gmra.mrb[0].mxu0 %v1078
  %v1199 = vpop.f32.mrb[0].mxu0
  %v1200 = vadd.f32 0.0, %v1199
  %v1201 = vpop.f32.mrb[0].mxu0
  %1202 = vmatprep.mubr.f32.mxu0 0.0
  %1203 = vmatmul.mubr.f32.gmra.mrb[0].mxu0 %v1081
  %v1204 = vpop.f32.mrb[0].mxu0
  %v1205 = vadd.f32 0.0, %v1204
  %v1206 = vpop.f32.mrb[0].mxu0
  %1207 = vmatprep.mubr.f32.mxu0 0.0
  %1208 = vmatmul.mubr.f32.gmra.mrb[0].mxu0 %v1084
  %v1209 = vpop.f32.mrb[0].mxu0
  %v1210 = vadd.f32 0.0, %v1209
  %v1211 = vpop.f32.mrb[0].mxu0
  %1212 = vmatprep.mubr.f32.mxu0 0.0
  %1213 = vmatmul.mubr.f32.gmra.mrb[0].mxu0 %v1087
  %v1214 = vpop.f32.mrb[0].mxu0
  %v1215 = vadd.f32 0.0, %v1214
  %v1216 = vpop.f32.mrb[0].mxu0
  %1217 = vmatprep.mubr.f32.mxu0 0.0
  %1218 = vmatmul.mubr.f32.gmra.mrb[0].mxu0 %v1090
  %v1219 = vpop.f32.mrb[0].mxu0
  %v1220 = vadd.f32 0.0, %v1219
  %v1221 = vpop.f32.mrb[0].mxu0
  %1222 = vmatprep.mubr.f32.mxu0 0.0
  %1223 = vmatmul.mubr.f32.gmra.mrb[0].mxu0 %v1093
  %v1224 = vpop.f32.mrb[0].mxu0
  %v1225 = vadd.f32 0.0, %v1224
  %v1226 = vpop.f32.mrb[0].mxu0
  %1227 = vmatprep.mubr.f32.mxu0 0.0
  %1228 = vmatmul.mubr.f32.gmra.mrb[0].mxu0 %v1096
  %v1229 = vpop.f32.mrb[0].mxu0
  %v1230 = vadd.f32 0.0, %v1229
  %v1231 = vpop.f32.mrb[0].mxu0
  %1232 = vdwg.mxu0
  %v1234 = vsel %vm1002, %v1019, 0
  %v1237 = vsel %vm1002, %v1020, 0
  %v1240 = vsel %vm1002, %v1021, 0
  %v1243 = vsel %vm1002, %v1022, 0
  %v1246 = vsel %vm1002, %v1023, 0
  %v1249 = vsel %vm1002, %v1024, 0
  %v1252 = vsel %vm1002, %v1025, 0
  %v1255 = vsel %vm1002, %v1026, 0
  %v1258 = vsel %vm1002, %v1027, 0
  %v1261 = vsel %vm1002, %v1028, 0
  %v1264 = vsel %vm1002, %v1029, 0
  %v1267 = vsel %vm1002, %v1030, 0
  %v1270 = vsel %vm1002, %v1031, 0
  %v1273 = vsel %vm1002, %v1032, 0
  %1275 = vmatprep.subr.mxu0 0.0
  %1276 = vmatpush1.msra.mxu0 %v1033
  %1277 = vmatprep.subr.mxu0 0.0
  %1278 = vmatpush1.msra.mxu0 %v1034
  %1279 = vmatprep.subr.mxu0 0.0
  %1280 = vmatpush1.msra.mxu0 %v1035
  %1281 = vmatprep.subr.mxu0 0.0
  %1282 = vmatpush1.msra.mxu0 %v1036
  %1283 = vmatprep.subr.mxu0 0.0
  %1284 = vmatpush1.msra.mxu0 0.0
  %1285 = vmatprep.subr.mxu0 0.0
  %1286 = vmatpush1.msra.mxu0 0.0
  %1287 = vmatprep.subr.mxu0 0.0
  %1288 = vmatpush1.msra.mxu0 0.0
  %1289 = vmatprep.subr.mxu0 0.0
  %1290 = vmatpush1.msra.mxu0 0.0
  %1291 = vmatprep.subr.mxu0 0.0
  %1292 = vmatpush1.msra.mxu0 0.0
  %1293 = vmatprep.subr.mxu0 0.0
  %1294 = vmatpush1.msra.mxu0 0.0
  %1295 = vmatprep.subr.mxu0 0.0
  %1296 = vmatpush1.msra.mxu0 0.0
  %1297 = vmatprep.subr.mxu0 0.0
  %1298 = vmatpush1.msra.mxu0 0.0
  %1299 = vmatprep.subr.mxu0 0.0
  %1300 = vmatpush1.msra.mxu0 0.0
  %1301 = vmatprep.subr.mxu0 0.0
  %1302 = vmatpush1.msra.mxu0 0.0
  %1303 = vmatprep.subr.mxu0 0.0
  %1304 = vmatpush1.msra.mxu0 0.0
  %1305 = vmatprep.subr.mxu0 0.0
  %1306 = vmatpush1.msra.mxu0 0.0
  %1307 = vmatprep.subr.mxu0 0.0
  %1308 = vmatpush1.msra.mxu0 0.0
  %1309 = vmatprep.subr.mxu0 0.0
  %1310 = vmatpush1.msra.mxu0 0.0
  %1311 = vmatprep.subr.mxu0 0.0
  %1312 = vmatpush1.msra.mxu0 0.0
  %1313 = vmatprep.subr.mxu0 0.0
  %1314 = vmatpush1.msra.mxu0 0.0
  %1315 = vmatprep.subr.mxu0 0.0
  %1316 = vmatpush1.msra.mxu0 0.0
  %1317 = vmatprep.subr.mxu0 0.0
  %1318 = vmatpush1.msra.mxu0 0.0
  %1319 = vmatprep.subr.mxu0 0.0
  %1320 = vmatpush1.msra.mxu0 0.0
  %1321 = vmatprep.subr.mxu0 0.0
  %1322 = vmatpush1.msra.mxu0 0.0
  %1323 = vmatprep.subr.mxu0 0.0
  %1324 = vmatpush1.msra.mxu0 0.0
  %1325 = vmatprep.subr.mxu0 0.0
  %1326 = vmatpush1.msra.mxu0 0.0
  %1327 = vmatprep.subr.mxu0 0.0
  %1328 = vmatpush1.msra.mxu0 0.0
  %1329 = vmatprep.subr.mxu0 0.0
  %1330 = vmatpush1.msra.mxu0 0.0
  %1331 = vmatprep.subr.mxu0 0.0
  %1332 = vmatpush1.msra.mxu0 0.0
  %1333 = vmatprep.subr.mxu0 0.0
  %1334 = vmatpush1.msra.mxu0 0.0
  %1335 = vmatprep.subr.mxu0 0.0
  %1336 = vmatpush1.msra.mxu0 0.0
  %1337 = vmatprep.subr.mxu0 0.0
  %1338 = vmatpush1.msra.mxu0 0.0
  %1339 = vmatprep.mubr.f32.mxu0 0.0
  %1340 = vmatmul.mubr.f32.gmra.mrb[0].mxu0 %v1234
  %v1341 = vpop.f32.mrb[0].mxu0
  %v1342 = vadd.f32 %v1165, %v1341
  %v1343 = vpop.f32.mrb[0].mxu0
  %1344 = vmatprep.mubr.f32.mxu0 0.0
  %1345 = vmatmul.mubr.f32.gmra.mrb[0].mxu0 %v1237
  %v1346 = vpop.f32.mrb[0].mxu0
  %v1347 = vadd.f32 %v1170, %v1346
  %v1348 = vpop.f32.mrb[0].mxu0
  %1349 = vmatprep.mubr.f32.mxu0 0.0
  %1350 = vmatmul.mubr.f32.gmra.mrb[0].mxu0 %v1240
  %v1351 = vpop.f32.mrb[0].mxu0
  %v1352 = vadd.f32 %v1175, %v1351
  %v1353 = vpop.f32.mrb[0].mxu0
  %1354 = vmatprep.mubr.f32.mxu0 0.0
  %1355 = vmatmul.mubr.f32.gmra.mrb[0].mxu0 %v1243
  %v1356 = vpop.f32.mrb[0].mxu0
  %v1357 = vadd.f32 %v1180, %v1356
  %v1358 = vpop.f32.mrb[0].mxu0
  %1359 = vmatprep.mubr.f32.mxu0 0.0
  %1360 = vmatmul.mubr.f32.gmra.mrb[0].mxu0 %v1246
  %v1361 = vpop.f32.mrb[0].mxu0
  %v1362 = vadd.f32 %v1185, %v1361
  %v1363 = vpop.f32.mrb[0].mxu0
  %1364 = vmatprep.mubr.f32.mxu0 0.0
  %1365 = vmatmul.mubr.f32.gmra.mrb[0].mxu0 %v1249
  %v1366 = vpop.f32.mrb[0].mxu0
  %v1367 = vadd.f32 %v1190, %v1366
  %v1368 = vpop.f32.mrb[0].mxu0
  %1369 = vmatprep.mubr.f32.mxu0 0.0
  %1370 = vmatmul.mubr.f32.gmra.mrb[0].mxu0 %v1252
  %v1371 = vpop.f32.mrb[0].mxu0
  %v1372 = vadd.f32 %v1195, %v1371
  %v1373 = vpop.f32.mrb[0].mxu0
  %1374 = vmatprep.mubr.f32.mxu0 0.0
  %1375 = vmatmul.mubr.f32.gmra.mrb[0].mxu0 %v1255
  %v1376 = vpop.f32.mrb[0].mxu0
  %v1377 = vadd.f32 %v1200, %v1376
  %v1378 = vpop.f32.mrb[0].mxu0
  %1379 = vmatprep.mubr.f32.mxu0 0.0
  %1380 = vmatmul.mubr.f32.gmra.mrb[0].mxu0 %v1258
  %v1381 = vpop.f32.mrb[0].mxu0
  %v1382 = vadd.f32 %v1205, %v1381
  %v1383 = vpop.f32.mrb[0].mxu0
  %1384 = vmatprep.mubr.f32.mxu0 0.0
  %1385 = vmatmul.mubr.f32.gmra.mrb[0].mxu0 %v1261
  %v1386 = vpop.f32.mrb[0].mxu0
  %v1387 = vadd.f32 %v1210, %v1386
  %v1388 = vpop.f32.mrb[0].mxu0
  %1389 = vmatprep.mubr.f32.mxu0 0.0
  %1390 = vmatmul.mubr.f32.gmra.mrb[0].mxu0 %v1264
  %v1391 = vpop.f32.mrb[0].mxu0
  %v1392 = vadd.f32 %v1215, %v1391
  %v1393 = vpop.f32.mrb[0].mxu0
  %1394 = vmatprep.mubr.f32.mxu0 0.0
  %1395 = vmatmul.mubr.f32.gmra.mrb[0].mxu0 %v1267
  %v1396 = vpop.f32.mrb[0].mxu0
  %v1397 = vadd.f32 %v1220, %v1396
  %v1398 = vpop.f32.mrb[0].mxu0
  %1399 = vmatprep.mubr.f32.mxu0 0.0
  %1400 = vmatmul.mubr.f32.gmra.mrb[0].mxu0 %v1270
  %v1401 = vpop.f32.mrb[0].mxu0
  %v1402 = vadd.f32 %v1225, %v1401
  %v1403 = vpop.f32.mrb[0].mxu0
  %1404 = vmatprep.mubr.f32.mxu0 0.0
  %1405 = vmatmul.mubr.f32.gmra.mrb[0].mxu0 %v1273
  %v1406 = vpop.f32.mrb[0].mxu0
  %v1407 = vadd.f32 %v1230, %v1406
  %v1408 = vpop.f32.mrb[0].mxu0
  %1409 = vdwg.mxu0
  %v1410 = vld [vmem:[#allocation2 + $0x2] sm:$0xff]
  %v1411 = vld [vmem:[#allocation2 + $0xa] sm:$0xff]
  %v1412 = vld [vmem:[#allocation2 + $0x12] sm:$0xff]
  %v1413 = vld [vmem:[#allocation2 + $0x1a] sm:$0xff]
  %v1414 = vld [vmem:[#allocation2 + $0x22] sm:$0xff]
  %v1415 = vld [vmem:[#allocation2 + $0x2a] sm:$0xff]
  %v1416 = vld [vmem:[#allocation2 + $0x32] sm:$0xff]
  %v1417 = vld [vmem:[#allocation2 + $0x3a] sm:$0xff]
  %v1418 = vld [vmem:[#allocation2 + $0x42] sm:$0xff]
  %v1419 = vld [vmem:[#allocation2 + $0x4a] sm:$0xff]
  %v1420 = vld [vmem:[#allocation2 + $0x52] sm:$0xff]
  %v1421 = vld [vmem:[#allocation2 + $0x5a] sm:$0xff]
  %v1422 = vld [vmem:[#allocation2 + $0x62] sm:$0xff]
  %v1423 = vld [vmem:[#allocation2 + $0x6a] sm:$0x3f]
  %s1424 = scalar_lea.vmem %s3, 64
  %v1425 = vld [vmem:[%s1424] sm:$0xff]
  %v1426 = vld [vmem:[%s1424 + $0x8] sm:$0xff]
  %v1427 = vld [vmem:[%s1424 + $0x10] sm:$0xff]
  %v1428 = vld [vmem:[%s1424 + $0x18] sm:$0xff]
  %v1430 = vsel %vm1002, %v1410, 0
  %v1433 = vsel %vm1002, %v1411, 0
  %v1436 = vsel %vm1002, %v1412, 0
  %v1439 = vsel %vm1002, %v1413, 0
  %v1442 = vsel %vm1002, %v1414, 0
  %v1445 = vsel %vm1002, %v1415, 0
  %v1448 = vsel %vm1002, %v1416, 0
  %v1451 = vsel %vm1002, %v1417, 0
  %v1454 = vsel %vm1002, %v1418, 0
  %v1457 = vsel %vm1002, %v1419, 0
  %v1460 = vsel %vm1002, %v1420, 0
  %v1463 = vsel %vm1002, %v1421, 0
  %v1466 = vsel %vm1002, %v1422, 0
  %v1469 = vsel %vm1002, %v1423, 0
  %1471 = vmatprep.subr.mxu0 0.0
  %1472 = vmatpush1.msra.mxu0 %v1425
  %1473 = vmatprep.subr.mxu0 0.0
  %1474 = vmatpush1.msra.mxu0 %v1426
  %1475 = vmatprep.subr.mxu0 0.0
  %1476 = vmatpush1.msra.mxu0 %v1427
  %1477 = vmatprep.subr.mxu0 0.0
  %1478 = vmatpush1.msra.mxu0 %v1428
  %1479 = vmatprep.subr.mxu0 0.0
  %1480 = vmatpush1.msra.mxu0 0.0
  %1481 = vmatprep.subr.mxu0 0.0
  %1482 = vmatpush1.msra.mxu0 0.0
  %1483 = vmatprep.subr.mxu0 0.0
  %1484 = vmatpush1.msra.mxu0 0.0
  %1485 = vmatprep.subr.mxu0 0.0
  %1486 = vmatpush1.msra.mxu0 0.0
  %1487 = vmatprep.subr.mxu0 0.0
  %1488 = vmatpush1.msra.mxu0 0.0
  %1489 = vmatprep.subr.mxu0 0.0
  %1490 = vmatpush1.msra.mxu0 0.0
  %1491 = vmatprep.subr.mxu0 0.0
  %1492 = vmatpush1.msra.mxu0 0.0
  %1493 = vmatprep.subr.mxu0 0.0
  %1494 = vmatpush1.msra.mxu0 0.0
  %1495 = vmatprep.subr.mxu0 0.0
  %1496 = vmatpush1.msra.mxu0 0.0
  %1497 = vmatprep.subr.mxu0 0.0
  %1498 = vmatpush1.msra.mxu0 0.0
  %1499 = vmatprep.subr.mxu0 0.0
  %1500 = vmatpush1.msra.mxu0 0.0
  %1501 = vmatprep.subr.mxu0 0.0
  %1502 = vmatpush1.msra.mxu0 0.0
  %1503 = vmatprep.subr.mxu0 0.0
  %1504 = vmatpush1.msra.mxu0 0.0
  %1505 = vmatprep.subr.mxu0 0.0
  %1506 = vmatpush1.msra.mxu0 0.0
  %1507 = vmatprep.subr.mxu0 0.0
  %1508 = vmatpush1.msra.mxu0 0.0
  %1509 = vmatprep.subr.mxu0 0.0
  %1510 = vmatpush1.msra.mxu0 0.0
  %1511 = vmatprep.subr.mxu0 0.0
  %1512 = vmatpush1.msra.mxu0 0.0
  %1513 = vmatprep.subr.mxu0 0.0
  %1514 = vmatpush1.msra.mxu0 0.0
  %1515 = vmatprep.subr.mxu0 0.0
  %1516 = vmatpush1.msra.mxu0 0.0
  %1517 = vmatprep.subr.mxu0 0.0
  %1518 = vmatpush1.msra.mxu0 0.0
  %1519 = vmatprep.subr.mxu0 0.0
  %1520 = vmatpush1.msra.mxu0 0.0
  %1521 = vmatprep.subr.mxu0 0.0
  %1522 = vmatpush1.msra.mxu0 0.0
  %1523 = vmatprep.subr.mxu0 0.0
  %1524 = vmatpush1.msra.mxu0 0.0
  %1525 = vmatprep.subr.mxu0 0.0
  %1526 = vmatpush1.msra.mxu0 0.0
  %1527 = vmatprep.subr.mxu0 0.0
  %1528 = vmatpush1.msra.mxu0 0.0
  %1529 = vmatprep.subr.mxu0 0.0
  %1530 = vmatpush1.msra.mxu0 0.0
  %1531 = vmatprep.subr.mxu0 0.0
  %1532 = vmatpush1.msra.mxu0 0.0
  %1533 = vmatprep.subr.mxu0 0.0
  %1534 = vmatpush1.msra.mxu0 0.0
  %1535 = vmatprep.mubr.f32.mxu0 0.0
  %1536 = vmatmul.mubr.f32.gmra.mrb[0].mxu0 %v1430
  %v1537 = vpop.f32.mrb[0].mxu0
  %v1538 = vadd.f32 0.0, %v1537
  %v1539 = vpop.f32.mrb[0].mxu0
  %1540 = vmatprep.mubr.f32.mxu0 0.0
  %1541 = vmatmul.mubr.f32.gmra.mrb[0].mxu0 %v1433
  %v1542 = vpop.f32.mrb[0].mxu0
  %v1543 = vadd.f32 0.0, %v1542
  %v1544 = vpop.f32.mrb[0].mxu0
  %1545 = vmatprep.mubr.f32.mxu0 0.0
  %1546 = vmatmul.mubr.f32.gmra.mrb[0].mxu0 %v1436
  %v1547 = vpop.f32.mrb[0].mxu0
  %v1548 = vadd.f32 0.0, %v1547
  %v1549 = vpop.f32.mrb[0].mxu0
  %1550 = vmatprep.mubr.f32.mxu0 0.0
  %1551 = vmatmul.mubr.f32.gmra.mrb[0].mxu0 %v1439
  %v1552 = vpop.f32.mrb[0].mxu0
  %v1553 = vadd.f32 0.0, %v1552
  %v1554 = vpop.f32.mrb[0].mxu0
  %1555 = vmatprep.mubr.f32.mxu0 0.0
  %1556 = vmatmul.mubr.f32.gmra.mrb[0].mxu0 %v1442
  %v1557 = vpop.f32.mrb[0].mxu0
  %v1558 = vadd.f32 0.0, %v1557
  %v1559 = vpop.f32.mrb[0].mxu0
  %1560 = vmatprep.mubr.f32.mxu0 0.0
  %1561 = vmatmul.mubr.f32.gmra.mrb[0].mxu0 %v1445
  %v1562 = vpop.f32.mrb[0].mxu0
  %v1563 = vadd.f32 0.0, %v1562
  %v1564 = vpop.f32.mrb[0].mxu0
  %1565 = vmatprep.mubr.f32.mxu0 0.0
  %1566 = vmatmul.mubr.f32.gmra.mrb[0].mxu0 %v1448
  %v1567 = vpop.f32.mrb[0].mxu0
  %v1568 = vadd.f32 0.0, %v1567
  %v1569 = vpop.f32.mrb[0].mxu0
  %1570 = vmatprep.mubr.f32.mxu0 0.0
  %1571 = vmatmul.mubr.f32.gmra.mrb[0].mxu0 %v1451
  %v1572 = vpop.f32.mrb[0].mxu0
  %v1573 = vadd.f32 0.0, %v1572
  %v1574 = vpop.f32.mrb[0].mxu0
  %1575 = vmatprep.mubr.f32.mxu0 0.0
  %1576 = vmatmul.mubr.f32.gmra.mrb[0].mxu0 %v1454
  %v1577 = vpop.f32.mrb[0].mxu0
  %v1578 = vadd.f32 0.0, %v1577
  %v1579 = vpop.f32.mrb[0].mxu0
  %1580 = vmatprep.mubr.f32.mxu0 0.0
  %1581 = vmatmul.mubr.f32.gmra.mrb[0].mxu0 %v1457
  %v1582 = vpop.f32.mrb[0].mxu0
  %v1583 = vadd.f32 0.0, %v1582
  %v1584 = vpop.f32.mrb[0].mxu0
  %1585 = vmatprep.mubr.f32.mxu0 0.0
  %1586 = vmatmul.mubr.f32.gmra.mrb[0].mxu0 %v1460
  %v1587 = vpop.f32.mrb[0].mxu0
  %v1588 = vadd.f32 0.0, %v1587
  %v1589 = vpop.f32.mrb[0].mxu0
  %1590 = vmatprep.mubr.f32.mxu0 0.0
  %1591 = vmatmul.mubr.f32.gmra.mrb[0].mxu0 %v1463
  %v1592 = vpop.f32.mrb[0].mxu0
  %v1593 = vadd.f32 0.0, %v1592
  %v1594 = vpop.f32.mrb[0].mxu0
  %1595 = vmatprep.mubr.f32.mxu0 0.0
  %1596 = vmatmul.mubr.f32.gmra.mrb[0].mxu0 %v1466
  %v1597 = vpop.f32.mrb[0].mxu0
  %v1598 = vadd.f32 0.0, %v1597
  %v1599 = vpop.f32.mrb[0].mxu0
  %1600 = vmatprep.mubr.f32.mxu0 0.0
  %1601 = vmatmul.mubr.f32.gmra.mrb[0].mxu0 %v1469
  %v1602 = vpop.f32.mrb[0].mxu0
  %v1603 = vadd.f32 0.0, %v1602
  %v1604 = vpop.f32.mrb[0].mxu0
  %1605 = vdwg.mxu0
  %v1606 = vadd.f32 %v1342, %v1538
  %v1607 = vadd.f32 %v1347, %v1543
  %v1608 = vadd.f32 %v1352, %v1548
  %v1609 = vadd.f32 %v1357, %v1553
  %v1610 = vadd.f32 %v1362, %v1558
  %v1611 = vadd.f32 %v1367, %v1563
  %v1612 = vadd.f32 %v1372, %v1568
  %v1613 = vadd.f32 %v1377, %v1573
  %v1614 = vadd.f32 %v1382, %v1578
  %v1615 = vadd.f32 %v1387, %v1583
  %v1616 = vadd.f32 %v1392, %v1588
  %v1617 = vadd.f32 %v1397, %v1593
  %v1618 = vadd.f32 %v1402, %v1598
  %v1619 = vadd.f32 %v1407, %v1603
  %v1620 = vld [vmem:[#allocation2 + $0x8] sm:$0xff]
  %v1621 = vld [vmem:[#allocation2 + $0x10] sm:$0xff]
  %v1622 = vld [vmem:[#allocation2 + $0x18] sm:$0xff]
  %v1623 = vld [vmem:[#allocation2 + $0x20] sm:$0xff]
  %v1624 = vld [vmem:[#allocation2 + $0x28] sm:$0xff]
  %v1625 = vld [vmem:[#allocation2 + $0x30] sm:$0xff]
  %v1626 = vld [vmem:[#allocation2 + $0x38] sm:$0xff]
  %v1627 = vld [vmem:[#allocation2 + $0x40] sm:$0xff]
  %v1628 = vld [vmem:[#allocation2 + $0x48] sm:$0xff]
  %v1629 = vld [vmem:[#allocation2 + $0x50] sm:$0xff]
  %v1630 = vld [vmem:[#allocation2 + $0x58] sm:$0xff]
  %v1631 = vld [vmem:[#allocation2 + $0x60] sm:$0xff]
  %v1632 = vld [vmem:[#allocation2 + $0x68] sm:$0xff]
  %v1633 = vld [vmem:[#allocation2 + $0x70] sm:$0x3f]
  %s1634 = scalar_lea.vmem %s3, 96
  %v1635 = vld [vmem:[%s1634] sm:$0xff]
  %v1636 = vld [vmem:[%s1634 + $0x8] sm:$0xff]
  %v1637 = vld [vmem:[%s1634 + $0x10] sm:$0xff]
  %v1638 = vld [vmem:[%s1634 + $0x18] sm:$0xff]
  %v1640 = vsel %vm1002, %v1620, 0
  %v1643 = vsel %vm1002, %v1621, 0
  %v1646 = vsel %vm1002, %v1622, 0
  %v1649 = vsel %vm1002, %v1623, 0
  %v1652 = vsel %vm1002, %v1624, 0
  %v1655 = vsel %vm1002, %v1625, 0
  %v1658 = vsel %vm1002, %v1626, 0
  %v1661 = vsel %vm1002, %v1627, 0
  %v1664 = vsel %vm1002, %v1628, 0
  %v1667 = vsel %vm1002, %v1629, 0
  %v1670 = vsel %vm1002, %v1630, 0
  %v1673 = vsel %vm1002, %v1631, 0
  %v1676 = vsel %vm1002, %v1632, 0
  %v1679 = vsel %vm1002, %v1633, 0
  %1681 = vmatprep.subr.mxu0 0.0
  %1682 = vmatpush1.msra.mxu0 %v1635
  %1683 = vmatprep.subr.mxu0 0.0
  %1684 = vmatpush1.msra.mxu0 %v1636
  %1685 = vmatprep.subr.mxu0 0.0
  %1686 = vmatpush1.msra.mxu0 %v1637
  %1687 = vmatprep.subr.mxu0 0.0
  %1688 = vmatpush1.msra.mxu0 %v1638
  %1689 = vmatprep.subr.mxu0 0.0
  %1690 = vmatpush1.msra.mxu0 0.0
  %1691 = vmatprep.subr.mxu0 0.0
  %1692 = vmatpush1.msra.mxu0 0.0
  %1693 = vmatprep.subr.mxu0 0.0
  %1694 = vmatpush1.msra.mxu0 0.0
  %1695 = vmatprep.subr.mxu0 0.0
  %1696 = vmatpush1.msra.mxu0 0.0
  %1697 = vmatprep.subr.mxu0 0.0
  %1698 = vmatpush1.msra.mxu0 0.0
  %1699 = vmatprep.subr.mxu0 0.0
  %1700 = vmatpush1.msra.mxu0 0.0
  %1701 = vmatprep.subr.mxu0 0.0
  %1702 = vmatpush1.msra.mxu0 0.0
  %1703 = vmatprep.subr.mxu0 0.0
  %1704 = vmatpush1.msra.mxu0 0.0
  %1705 = vmatprep.subr.mxu0 0.0
  %1706 = vmatpush1.msra.mxu0 0.0
  %1707 = vmatprep.subr.mxu0 0.0
  %1708 = vmatpush1.msra.mxu0 0.0
  %1709 = vmatprep.subr.mxu0 0.0
  %1710 = vmatpush1.msra.mxu0 0.0
  %1711 = vmatprep.subr.mxu0 0.0
  %1712 = vmatpush1.msra.mxu0 0.0
  %1713 = vmatprep.subr.mxu0 0.0
  %1714 = vmatpush1.msra.mxu0 0.0
  %1715 = vmatprep.subr.mxu0 0.0
  %1716 = vmatpush1.msra.mxu0 0.0
  %1717 = vmatprep.subr.mxu0 0.0
  %1718 = vmatpush1.msra.mxu0 0.0
  %1719 = vmatprep.subr.mxu0 0.0
  %1720 = vmatpush1.msra.mxu0 0.0
  %1721 = vmatprep.subr.mxu0 0.0
  %1722 = vmatpush1.msra.mxu0 0.0
  %1723 = vmatprep.subr.mxu0 0.0
  %1724 = vmatpush1.msra.mxu0 0.0
  %1725 = vmatprep.subr.mxu0 0.0
  %1726 = vmatpush1.msra.mxu0 0.0
  %1727 = vmatprep.subr.mxu0 0.0
  %1728 = vmatpush1.msra.mxu0 0.0
  %1729 = vmatprep.subr.mxu0 0.0
  %1730 = vmatpush1.msra.mxu0 0.0
  %1731 = vmatprep.subr.mxu0 0.0
  %1732 = vmatpush1.msra.mxu0 0.0
  %1733 = vmatprep.subr.mxu0 0.0
  %1734 = vmatpush1.msra.mxu0 0.0
  %1735 = vmatprep.subr.mxu0 0.0
  %1736 = vmatpush1.msra.mxu0 0.0
  %1737 = vmatprep.subr.mxu0 0.0
  %1738 = vmatpush1.msra.mxu0 0.0
  %1739 = vmatprep.subr.mxu0 0.0
  %1740 = vmatpush1.msra.mxu0 0.0
  %1741 = vmatprep.subr.mxu0 0.0
  %1742 = vmatpush1.msra.mxu0 0.0
  %1743 = vmatprep.subr.mxu0 0.0
  %1744 = vmatpush1.msra.mxu0 0.0
  %1745 = vmatprep.mubr.f32.mxu0 0.0
  %1746 = vmatmul.mubr.f32.gmra.mrb[0].mxu0 %v1640
  %v1747 = vpop.f32.mrb[0].mxu0
  %v1748 = vadd.f32 0.0, %v1747
  %v1749 = vpop.f32.mrb[0].mxu0
  %1750 = vmatprep.mubr.f32.mxu0 0.0
  %1751 = vmatmul.mubr.f32.gmra.mrb[0].mxu0 %v1643
  %v1752 = vpop.f32.mrb[0].mxu0
  %v1753 = vadd.f32 0.0, %v1752
  %v1754 = vpop.f32.mrb[0].mxu0
  %1755 = vmatprep.mubr.f32.mxu0 0.0
  %1756 = vmatmul.mubr.f32.gmra.mrb[0].mxu0 %v1646
  %v1757 = vpop.f32.mrb[0].mxu0
  %v1758 = vadd.f32 0.0, %v1757
  %v1759 = vpop.f32.mrb[0].mxu0
  %1760 = vmatprep.mubr.f32.mxu0 0.0
  %1761 = vmatmul.mubr.f32.gmra.mrb[0].mxu0 %v1649
  %v1762 = vpop.f32.mrb[0].mxu0
  %v1763 = vadd.f32 0.0, %v1762
  %v1764 = vpop.f32.mrb[0].mxu0
  %1765 = vmatprep.mubr.f32.mxu0 0.0
  %1766 = vmatmul.mubr.f32.gmra.mrb[0].mxu0 %v1652
  %v1767 = vpop.f32.mrb[0].mxu0
  %v1768 = vadd.f32 0.0, %v1767
  %v1769 = vpop.f32.mrb[0].mxu0
  %1770 = vmatprep.mubr.f32.mxu0 0.0
  %1771 = vmatmul.mubr.f32.gmra.mrb[0].mxu0 %v1655
  %v1772 = vpop.f32.mrb[0].mxu0
  %v1773 = vadd.f32 0.0, %v1772
  %v1774 = vpop.f32.mrb[0].mxu0
  %1775 = vmatprep.mubr.f32.mxu0 0.0
  %1776 = vmatmul.mubr.f32.gmra.mrb[0].mxu0 %v1658
  %v1777 = vpop.f32.mrb[0].mxu0
  %v1778 = vadd.f32 0.0, %v1777
  %v1779 = vpop.f32.mrb[0].mxu0
  %1780 = vmatprep.mubr.f32.mxu0 0.0
  %1781 = vmatmul.mubr.f32.gmra.mrb[0].mxu0 %v1661
  %v1782 = vpop.f32.mrb[0].mxu0
  %v1783 = vadd.f32 0.0, %v1782
  %v1784 = vpop.f32.mrb[0].mxu0
  %1785 = vmatprep.mubr.f32.mxu0 0.0
  %1786 = vmatmul.mubr.f32.gmra.mrb[0].mxu0 %v1664
  %v1787 = vpop.f32.mrb[0].mxu0
  %v1788 = vadd.f32 0.0, %v1787
  %v1789 = vpop.f32.mrb[0].mxu0
  %1790 = vmatprep.mubr.f32.mxu0 0.0
  %1791 = vmatmul.mubr.f32.gmra.mrb[0].mxu0 %v1667
  %v1792 = vpop.f32.mrb[0].mxu0
  %v1793 = vadd.f32 0.0, %v1792
  %v1794 = vpop.f32.mrb[0].mxu0
  %1795 = vmatprep.mubr.f32.mxu0 0.0
  %1796 = vmatmul.mubr.f32.gmra.mrb[0].mxu0 %v1670
  %v1797 = vpop.f32.mrb[0].mxu0
  %v1798 = vadd.f32 0.0, %v1797
  %v1799 = vpop.f32.mrb[0].mxu0
  %1800 = vmatprep.mubr.f32.mxu0 0.0
  %1801 = vmatmul.mubr.f32.gmra.mrb[0].mxu0 %v1673
  %v1802 = vpop.f32.mrb[0].mxu0
  %v1803 = vadd.f32 0.0, %v1802
  %v1804 = vpop.f32.mrb[0].mxu0
  %1805 = vmatprep.mubr.f32.mxu0 0.0
  %1806 = vmatmul.mubr.f32.gmra.mrb[0].mxu0 %v1676
  %v1807 = vpop.f32.mrb[0].mxu0
  %v1808 = vadd.f32 0.0, %v1807
  %v1809 = vpop.f32.mrb[0].mxu0
  %1810 = vmatprep.mubr.f32.mxu0 0.0
  %1811 = vmatmul.mubr.f32.gmra.mrb[0].mxu0 %v1679
  %v1812 = vpop.f32.mrb[0].mxu0
  %v1813 = vadd.f32 0.0, %v1812
  %v1814 = vpop.f32.mrb[0].mxu0
  %1815 = vdwg.mxu0
  %v1816 = vadd.f32 %v1606, %v1748
  %v1817 = vadd.f32 %v1607, %v1753
  %v1818 = vadd.f32 %v1608, %v1758
  %v1819 = vadd.f32 %v1609, %v1763
  %v1820 = vadd.f32 %v1610, %v1768
  %v1821 = vadd.f32 %v1611, %v1773
  %v1822 = vadd.f32 %v1612, %v1778
  %v1823 = vadd.f32 %v1613, %v1783
  %v1824 = vadd.f32 %v1614, %v1788
  %v1825 = vadd.f32 %v1615, %v1793
  %v1826 = vadd.f32 %v1616, %v1798
  %v1827 = vadd.f32 %v1617, %v1803
  %v1828 = vadd.f32 %v1618, %v1808
  %v1829 = vadd.f32 %v1619, %v1813
  %v1830 = vld [vmem:[#allocation2 + $0x9] sm:$0xff]
  %v1831 = vld [vmem:[#allocation2 + $0x11] sm:$0xff]
  %v1832 = vld [vmem:[#allocation2 + $0x19] sm:$0xff]
  %v1833 = vld [vmem:[#allocation2 + $0x21] sm:$0xff]
  %v1834 = vld [vmem:[#allocation2 + $0x29] sm:$0xff]
  %v1835 = vld [vmem:[#allocation2 + $0x31] sm:$0xff]
  %v1836 = vld [vmem:[#allocation2 + $0x39] sm:$0xff]
  %v1837 = vld [vmem:[#allocation2 + $0x41] sm:$0xff]
  %v1838 = vld [vmem:[#allocation2 + $0x49] sm:$0xff]
  %v1839 = vld [vmem:[#allocation2 + $0x51] sm:$0xff]
  %v1840 = vld [vmem:[#allocation2 + $0x59] sm:$0xff]
  %v1841 = vld [vmem:[#allocation2 + $0x61] sm:$0xff]
  %v1842 = vld [vmem:[#allocation2 + $0x69] sm:$0xff]
  %v1843 = vld [vmem:[#allocation2 + $0x71] sm:$0x3f]
  %s1844 = scalar_lea.vmem %s3, 128
  %v1845 = vld [vmem:[%s1844] sm:$0xff]
  %v1846 = vld [vmem:[%s1844 + $0x8] sm:$0xff]
  %v1847 = vld [vmem:[%s1844 + $0x10] sm:$0xff]
  %v1848 = vld [vmem:[%s1844 + $0x18] sm:$0xff]
  %v1850 = vsel %vm1002, %v1830, 0
  %v1853 = vsel %vm1002, %v1831, 0
  %v1856 = vsel %vm1002, %v1832, 0
  %v1859 = vsel %vm1002, %v1833, 0
  %v1862 = vsel %vm1002, %v1834, 0
  %v1865 = vsel %vm1002, %v1835, 0
  %v1868 = vsel %vm1002, %v1836, 0
  %v1871 = vsel %vm1002, %v1837, 0
  %v1874 = vsel %vm1002, %v1838, 0
  %v1877 = vsel %vm1002, %v1839, 0
  %v1880 = vsel %vm1002, %v1840, 0
  %v1883 = vsel %vm1002, %v1841, 0
  %v1886 = vsel %vm1002, %v1842, 0
  %v1889 = vsel %vm1002, %v1843, 0
  %1891 = vmatprep.subr.mxu0 0.0
  %1892 = vmatpush1.msra.mxu0 %v1845
  %1893 = vmatprep.subr.mxu0 0.0
  %1894 = vmatpush1.msra.mxu0 %v1846
  %1895 = vmatprep.subr.mxu0 0.0
  %1896 = vmatpush1.msra.mxu0 %v1847
  %1897 = vmatprep.subr.mxu0 0.0
  %1898 = vmatpush1.msra.mxu0 %v1848
  %1899 = vmatprep.subr.mxu0 0.0
  %1900 = vmatpush1.msra.mxu0 0.0
  %1901 = vmatprep.subr.mxu0 0.0
  %1902 = vmatpush1.msra.mxu0 0.0
  %1903 = vmatprep.subr.mxu0 0.0
  %1904 = vmatpush1.msra.mxu0 0.0
  %1905 = vmatprep.subr.mxu0 0.0
  %1906 = vmatpush1.msra.mxu0 0.0
  %1907 = vmatprep.subr.mxu0 0.0
  %1908 = vmatpush1.msra.mxu0 0.0
  %1909 = vmatprep.subr.mxu0 0.0
  %1910 = vmatpush1.msra.mxu0 0.0
  %1911 = vmatprep.subr.mxu0 0.0
  %1912 = vmatpush1.msra.mxu0 0.0
  %1913 = vmatprep.subr.mxu0 0.0
  %1914 = vmatpush1.msra.mxu0 0.0
  %1915 = vmatprep.subr.mxu0 0.0
  %1916 = vmatpush1.msra.mxu0 0.0
  %1917 = vmatprep.subr.mxu0 0.0
  %1918 = vmatpush1.msra.mxu0 0.0
  %1919 = vmatprep.subr.mxu0 0.0
  %1920 = vmatpush1.msra.mxu0 0.0
  %1921 = vmatprep.subr.mxu0 0.0
  %1922 = vmatpush1.msra.mxu0 0.0
  %1923 = vmatprep.subr.mxu0 0.0
  %1924 = vmatpush1.msra.mxu0 0.0
  %1925 = vmatprep.subr.mxu0 0.0
  %1926 = vmatpush1.msra.mxu0 0.0
  %1927 = vmatprep.subr.mxu0 0.0
  %1928 = vmatpush1.msra.mxu0 0.0
  %1929 = vmatprep.subr.mxu0 0.0
  %1930 = vmatpush1.msra.mxu0 0.0
  %1931 = vmatprep.subr.mxu0 0.0
  %1932 = vmatpush1.msra.mxu0 0.0
  %1933 = vmatprep.subr.mxu0 0.0
  %1934 = vmatpush1.msra.mxu0 0.0
  %1935 = vmatprep.subr.mxu0 0.0
  %1936 = vmatpush1.msra.mxu0 0.0
  %1937 = vmatprep.subr.mxu0 0.0
  %1938 = vmatpush1.msra.mxu0 0.0
  %1939 = vmatprep.subr.mxu0 0.0
  %1940 = vmatpush1.msra.mxu0 0.0
  %1941 = vmatprep.subr.mxu0 0.0
  %1942 = vmatpush1.msra.mxu0 0.0
  %1943 = vmatprep.subr.mxu0 0.0
  %1944 = vmatpush1.msra.mxu0 0.0
  %1945 = vmatprep.subr.mxu0 0.0
  %1946 = vmatpush1.msra.mxu0 0.0
  %1947 = vmatprep.subr.mxu0 0.0
  %1948 = vmatpush1.msra.mxu0 0.0
  %1949 = vmatprep.subr.mxu0 0.0
  %1950 = vmatpush1.msra.mxu0 0.0
  %1951 = vmatprep.subr.mxu0 0.0
  %1952 = vmatpush1.msra.mxu0 0.0
  %1953 = vmatprep.subr.mxu0 0.0
  %1954 = vmatpush1.msra.mxu0 0.0
  %1955 = vmatprep.mubr.f32.mxu0 0.0
  %1956 = vmatmul.mubr.f32.gmra.mrb[0].mxu0 %v1850
  %v1957 = vpop.f32.mrb[0].mxu0
  %v1958 = vadd.f32 0.0, %v1957
  %v1959 = vpop.f32.mrb[0].mxu0
  %1960 = vmatprep.mubr.f32.mxu0 0.0
  %1961 = vmatmul.mubr.f32.gmra.mrb[0].mxu0 %v1853
  %v1962 = vpop.f32.mrb[0].mxu0
  %v1963 = vadd.f32 0.0, %v1962
  %v1964 = vpop.f32.mrb[0].mxu0
  %1965 = vmatprep.mubr.f32.mxu0 0.0
  %1966 = vmatmul.mubr.f32.gmra.mrb[0].mxu0 %v1856
  %v1967 = vpop.f32.mrb[0].mxu0
  %v1968 = vadd.f32 0.0, %v1967
  %v1969 = vpop.f32.mrb[0].mxu0
  %1970 = vmatprep.mubr.f32.mxu0 0.0
  %1971 = vmatmul.mubr.f32.gmra.mrb[0].mxu0 %v1859
  %v1972 = vpop.f32.mrb[0].mxu0
  %v1973 = vadd.f32 0.0, %v1972
  %v1974 = vpop.f32.mrb[0].mxu0
  %1975 = vmatprep.mubr.f32.mxu0 0.0
  %1976 = vmatmul.mubr.f32.gmra.mrb[0].mxu0 %v1862
  %v1977 = vpop.f32.mrb[0].mxu0
  %v1978 = vadd.f32 0.0, %v1977
  %v1979 = vpop.f32.mrb[0].mxu0
  %1980 = vmatprep.mubr.f32.mxu0 0.0
  %1981 = vmatmul.mubr.f32.gmra.mrb[0].mxu0 %v1865
  %v1982 = vpop.f32.mrb[0].mxu0
  %v1983 = vadd.f32 0.0, %v1982
  %v1984 = vpop.f32.mrb[0].mxu0
  %1985 = vmatprep.mubr.f32.mxu0 0.0
  %1986 = vmatmul.mubr.f32.gmra.mrb[0].mxu0 %v1868
  %v1987 = vpop.f32.mrb[0].mxu0
  %v1988 = vadd.f32 0.0, %v1987
  %v1989 = vpop.f32.mrb[0].mxu0
  %1990 = vmatprep.mubr.f32.mxu0 0.0
  %1991 = vmatmul.mubr.f32.gmra.mrb[0].mxu0 %v1871
  %v1992 = vpop.f32.mrb[0].mxu0
  %v1993 = vadd.f32 0.0, %v1992
  %v1994 = vpop.f32.mrb[0].mxu0
  %1995 = vmatprep.mubr.f32.mxu0 0.0
  %1996 = vmatmul.mubr.f32.gmra.mrb[0].mxu0 %v1874
  %v1997 = vpop.f32.mrb[0].mxu0
  %v1998 = vadd.f32 0.0, %v1997
  %v1999 = vpop.f32.mrb[0].mxu0
  %2000 = vmatprep.mubr.f32.mxu0 0.0
  %2001 = vmatmul.mubr.f32.gmra.mrb[0].mxu0 %v1877
  %v2002 = vpop.f32.mrb[0].mxu0
  %v2003 = vadd.f32 0.0, %v2002
  %v2004 = vpop.f32.mrb[0].mxu0
  %2005 = vmatprep.mubr.f32.mxu0 0.0
  %2006 = vmatmul.mubr.f32.gmra.mrb[0].mxu0 %v1880
  %v2007 = vpop.f32.mrb[0].mxu0
  %v2008 = vadd.f32 0.0, %v2007
  %v2009 = vpop.f32.mrb[0].mxu0
  %2010 = vmatprep.mubr.f32.mxu0 0.0
  %2011 = vmatmul.mubr.f32.gmra.mrb[0].mxu0 %v1883
  %v2012 = vpop.f32.mrb[0].mxu0
  %v2013 = vadd.f32 0.0, %v2012
  %v2014 = vpop.f32.mrb[0].mxu0
  %2015 = vmatprep.mubr.f32.mxu0 0.0
  %2016 = vmatmul.mubr.f32.gmra.mrb[0].mxu0 %v1886
  %v2017 = vpop.f32.mrb[0].mxu0
  %v2018 = vadd.f32 0.0, %v2017
  %v2019 = vpop.f32.mrb[0].mxu0
  %2020 = vmatprep.mubr.f32.mxu0 0.0
  %2021 = vmatmul.mubr.f32.gmra.mrb[0].mxu0 %v1889
  %v2022 = vpop.f32.mrb[0].mxu0
  %v2023 = vadd.f32 0.0, %v2022
  %v2024 = vpop.f32.mrb[0].mxu0
  %2025 = vdwg.mxu0
  %v2026 = vadd.f32 %v1816, %v1958
  %v2027 = vadd.f32 %v1817, %v1963
  %v2028 = vadd.f32 %v1818, %v1968
  %v2029 = vadd.f32 %v1819, %v1973
  %v2030 = vadd.f32 %v1820, %v1978
  %v2031 = vadd.f32 %v1821, %v1983
  %v2032 = vadd.f32 %v1822, %v1988
  %v2033 = vadd.f32 %v1823, %v1993
  %v2034 = vadd.f32 %v1824, %v1998
  %v2035 = vadd.f32 %v1825, %v2003
  %v2036 = vadd.f32 %v1826, %v2008
  %v2037 = vadd.f32 %v1827, %v2013
  %v2038 = vadd.f32 %v1828, %v2018
  %v2039 = vadd.f32 %v1829, %v2023
  %v2040 = vld [vmem:[#allocation2 + $0xa] sm:$0xff]
  %v2041 = vld [vmem:[#allocation2 + $0x12] sm:$0xff]
  %v2042 = vld [vmem:[#allocation2 + $0x1a] sm:$0xff]
  %v2043 = vld [vmem:[#allocation2 + $0x22] sm:$0xff]
  %v2044 = vld [vmem:[#allocation2 + $0x2a] sm:$0xff]
  %v2045 = vld [vmem:[#allocation2 + $0x32] sm:$0xff]
  %v2046 = vld [vmem:[#allocation2 + $0x3a] sm:$0xff]
  %v2047 = vld [vmem:[#allocation2 + $0x42] sm:$0xff]
  %v2048 = vld [vmem:[#allocation2 + $0x4a] sm:$0xff]
  %v2049 = vld [vmem:[#allocation2 + $0x52] sm:$0xff]
  %v2050 = vld [vmem:[#allocation2 + $0x5a] sm:$0xff]
  %v2051 = vld [vmem:[#allocation2 + $0x62] sm:$0xff]
  %v2052 = vld [vmem:[#allocation2 + $0x6a] sm:$0xff]
  %v2053 = vld [vmem:[#allocation2 + $0x72] sm:$0x3f]
  %s2054 = scalar_lea.vmem %s3, 160
  %v2055 = vld [vmem:[%s2054] sm:$0xff]
  %v2056 = vld [vmem:[%s2054 + $0x8] sm:$0xff]
  %v2057 = vld [vmem:[%s2054 + $0x10] sm:$0xff]
  %v2058 = vld [vmem:[%s2054 + $0x18] sm:$0xff]
  %v2060 = vsel %vm1002, %v2040, 0
  %v2063 = vsel %vm1002, %v2041, 0
  %v2066 = vsel %vm1002, %v2042, 0
  %v2069 = vsel %vm1002, %v2043, 0
  %v2072 = vsel %vm1002, %v2044, 0
  %v2075 = vsel %vm1002, %v2045, 0
  %v2078 = vsel %vm1002, %v2046, 0
  %v2081 = vsel %vm1002, %v2047, 0
  %v2084 = vsel %vm1002, %v2048, 0
  %v2087 = vsel %vm1002, %v2049, 0
  %v2090 = vsel %vm1002, %v2050, 0
  %v2093 = vsel %vm1002, %v2051, 0
  %v2096 = vsel %vm1002, %v2052, 0
  %v2099 = vsel %vm1002, %v2053, 0
  %2101 = vmatprep.subr.mxu0 0.0
  %2102 = vmatpush1.msra.mxu0 %v2055
  %2103 = vmatprep.subr.mxu0 0.0
  %2104 = vmatpush1.msra.mxu0 %v2056
  %2105 = vmatprep.subr.mxu0 0.0
  %2106 = vmatpush1.msra.mxu0 %v2057
  %2107 = vmatprep.subr.mxu0 0.0
  %2108 = vmatpush1.msra.mxu0 %v2058
  %2109 = vmatprep.subr.mxu0 0.0
  %2110 = vmatpush1.msra.mxu0 0.0
  %2111 = vmatprep.subr.mxu0 0.0
  %2112 = vmatpush1.msra.mxu0 0.0
  %2113 = vmatprep.subr.mxu0 0.0
  %2114 = vmatpush1.msra.mxu0 0.0
  %2115 = vmatprep.subr.mxu0 0.0
  %2116 = vmatpush1.msra.mxu0 0.0
  %2117 = vmatprep.subr.mxu0 0.0
  %2118 = vmatpush1.msra.mxu0 0.0
  %2119 = vmatprep.subr.mxu0 0.0
  %2120 = vmatpush1.msra.mxu0 0.0
  %2121 = vmatprep.subr.mxu0 0.0
  %2122 = vmatpush1.msra.mxu0 0.0
  %2123 = vmatprep.subr.mxu0 0.0
  %2124 = vmatpush1.msra.mxu0 0.0
  %2125 = vmatprep.subr.mxu0 0.0
  %2126 = vmatpush1.msra.mxu0 0.0
  %2127 = vmatprep.subr.mxu0 0.0
  %2128 = vmatpush1.msra.mxu0 0.0
  %2129 = vmatprep.subr.mxu0 0.0
  %2130 = vmatpush1.msra.mxu0 0.0
  %2131 = vmatprep.subr.mxu0 0.0
  %2132 = vmatpush1.msra.mxu0 0.0
  %2133 = vmatprep.subr.mxu0 0.0
  %2134 = vmatpush1.msra.mxu0 0.0
  %2135 = vmatprep.subr.mxu0 0.0
  %2136 = vmatpush1.msra.mxu0 0.0
  %2137 = vmatprep.subr.mxu0 0.0
  %2138 = vmatpush1.msra.mxu0 0.0
  %2139 = vmatprep.subr.mxu0 0.0
  %2140 = vmatpush1.msra.mxu0 0.0
  %2141 = vmatprep.subr.mxu0 0.0
  %2142 = vmatpush1.msra.mxu0 0.0
  %2143 = vmatprep.subr.mxu0 0.0
  %2144 = vmatpush1.msra.mxu0 0.0
  %2145 = vmatprep.subr.mxu0 0.0
  %2146 = vmatpush1.msra.mxu0 0.0
  %2147 = vmatprep.subr.mxu0 0.0
  %2148 = vmatpush1.msra.mxu0 0.0
  %2149 = vmatprep.subr.mxu0 0.0
  %2150 = vmatpush1.msra.mxu0 0.0
  %2151 = vmatprep.subr.mxu0 0.0
  %2152 = vmatpush1.msra.mxu0 0.0
  %2153 = vmatprep.subr.mxu0 0.0
  %2154 = vmatpush1.msra.mxu0 0.0
  %2155 = vmatprep.subr.mxu0 0.0
  %2156 = vmatpush1.msra.mxu0 0.0
  %2157 = vmatprep.subr.mxu0 0.0
  %2158 = vmatpush1.msra.mxu0 0.0
  %2159 = vmatprep.subr.mxu0 0.0
  %2160 = vmatpush1.msra.mxu0 0.0
  %2161 = vmatprep.subr.mxu0 0.0
  %2162 = vmatpush1.msra.mxu0 0.0
  %2163 = vmatprep.subr.mxu0 0.0
  %2164 = vmatpush1.msra.mxu0 0.0
  %2165 = vmatprep.mubr.f32.mxu0 0.0
  %2166 = vmatmul.mubr.f32.gmra.mrb[0].mxu0 %v2060
  %v2167 = vpop.f32.mrb[0].mxu0
  %v2168 = vadd.f32 0.0, %v2167
  %v2169 = vpop.f32.mrb[0].mxu0
  %2170 = vmatprep.mubr.f32.mxu0 0.0
  %2171 = vmatmul.mubr.f32.gmra.mrb[0].mxu0 %v2063
  %v2172 = vpop.f32.mrb[0].mxu0
  %v2173 = vadd.f32 0.0, %v2172
  %v2174 = vpop.f32.mrb[0].mxu0
  %2175 = vmatprep.mubr.f32.mxu0 0.0
  %2176 = vmatmul.mubr.f32.gmra.mrb[0].mxu0 %v2066
  %v2177 = vpop.f32.mrb[0].mxu0
  %v2178 = vadd.f32 0.0, %v2177
  %v2179 = vpop.f32.mrb[0].mxu0
  %2180 = vmatprep.mubr.f32.mxu0 0.0
  %2181 = vmatmul.mubr.f32.gmra.mrb[0].mxu0 %v2069
  %v2182 = vpop.f32.mrb[0].mxu0
  %v2183 = vadd.f32 0.0, %v2182
  %v2184 = vpop.f32.mrb[0].mxu0
  %2185 = vmatprep.mubr.f32.mxu0 0.0
  %2186 = vmatmul.mubr.f32.gmra.mrb[0].mxu0 %v2072
  %v2187 = vpop.f32.mrb[0].mxu0
  %v2188 = vadd.f32 0.0, %v2187
  %v2189 = vpop.f32.mrb[0].mxu0
  %2190 = vmatprep.mubr.f32.mxu0 0.0
  %2191 = vmatmul.mubr.f32.gmra.mrb[0].mxu0 %v2075
  %v2192 = vpop.f32.mrb[0].mxu0
  %v2193 = vadd.f32 0.0, %v2192
  %v2194 = vpop.f32.mrb[0].mxu0
  %2195 = vmatprep.mubr.f32.mxu0 0.0
  %2196 = vmatmul.mubr.f32.gmra.mrb[0].mxu0 %v2078
  %v2197 = vpop.f32.mrb[0].mxu0
  %v2198 = vadd.f32 0.0, %v2197
  %v2199 = vpop.f32.mrb[0].mxu0
  %2200 = vmatprep.mubr.f32.mxu0 0.0
  %2201 = vmatmul.mubr.f32.gmra.mrb[0].mxu0 %v2081
  %v2202 = vpop.f32.mrb[0].mxu0
  %v2203 = vadd.f32 0.0, %v2202
  %v2204 = vpop.f32.mrb[0].mxu0
  %2205 = vmatprep.mubr.f32.mxu0 0.0
  %2206 = vmatmul.mubr.f32.gmra.mrb[0].mxu0 %v2084
  %v2207 = vpop.f32.mrb[0].mxu0
  %v2208 = vadd.f32 0.0, %v2207
  %v2209 = vpop.f32.mrb[0].mxu0
  %2210 = vmatprep.mubr.f32.mxu0 0.0
  %2211 = vmatmul.mubr.f32.gmra.mrb[0].mxu0 %v2087
  %v2212 = vpop.f32.mrb[0].mxu0
  %v2213 = vadd.f32 0.0, %v2212
  %v2214 = vpop.f32.mrb[0].mxu0
  %2215 = vmatprep.mubr.f32.mxu0 0.0
  %2216 = vmatmul.mubr.f32.gmra.mrb[0].mxu0 %v2090
  %v2217 = vpop.f32.mrb[0].mxu0
  %v2218 = vadd.f32 0.0, %v2217
  %v2219 = vpop.f32.mrb[0].mxu0
  %2220 = vmatprep.mubr.f32.mxu0 0.0
  %2221 = vmatmul.mubr.f32.gmra.mrb[0].mxu0 %v2093
  %v2222 = vpop.f32.mrb[0].mxu0
  %v2223 = vadd.f32 0.0, %v2222
  %v2224 = vpop.f32.mrb[0].mxu0
  %2225 = vmatprep.mubr.f32.mxu0 0.0
  %2226 = vmatmul.mubr.f32.gmra.mrb[0].mxu0 %v2096
  %v2227 = vpop.f32.mrb[0].mxu0
  %v2228 = vadd.f32 0.0, %v2227
  %v2229 = vpop.f32.mrb[0].mxu0
  %2230 = vmatprep.mubr.f32.mxu0 0.0
  %2231 = vmatmul.mubr.f32.gmra.mrb[0].mxu0 %v2099
  %v2232 = vpop.f32.mrb[0].mxu0
  %v2233 = vadd.f32 0.0, %v2232
  %v2234 = vpop.f32.mrb[0].mxu0
  %2235 = vdwg.mxu0
  %v2236 = vadd.f32 %v2026, %v2168
  %v2237 = vadd.f32 %v2027, %v2173
  %v2238 = vadd.f32 %v2028, %v2178
  %v2239 = vadd.f32 %v2029, %v2183
  %v2240 = vadd.f32 %v2030, %v2188
  %v2241 = vadd.f32 %v2031, %v2193
  %v2242 = vadd.f32 %v2032, %v2198
  %v2243 = vadd.f32 %v2033, %v2203
  %v2244 = vadd.f32 %v2034, %v2208
  %v2245 = vadd.f32 %v2035, %v2213
  %v2246 = vadd.f32 %v2036, %v2218
  %v2247 = vadd.f32 %v2037, %v2223
  %v2248 = vadd.f32 %v2038, %v2228
  %v2249 = vadd.f32 %v2039, %v2233
  %v2250 = vld [vmem:[#allocation2 + $0x10] sm:$0xff]
  %v2251 = vld [vmem:[#allocation2 + $0x18] sm:$0xff]
  %v2252 = vld [vmem:[#allocation2 + $0x20] sm:$0xff]
  %v2253 = vld [vmem:[#allocation2 + $0x28] sm:$0xff]
  %v2254 = vld [vmem:[#allocation2 + $0x30] sm:$0xff]
  %v2255 = vld [vmem:[#allocation2 + $0x38] sm:$0xff]
  %v2256 = vld [vmem:[#allocation2 + $0x40] sm:$0xff]
  %v2257 = vld [vmem:[#allocation2 + $0x48] sm:$0xff]
  %v2258 = vld [vmem:[#allocation2 + $0x50] sm:$0xff]
  %v2259 = vld [vmem:[#allocation2 + $0x58] sm:$0xff]
  %v2260 = vld [vmem:[#allocation2 + $0x60] sm:$0xff]
  %v2261 = vld [vmem:[#allocation2 + $0x68] sm:$0xff]
  %v2262 = vld [vmem:[#allocation2 + $0x70] sm:$0xff]
  %v2263 = vld [vmem:[#allocation2 + $0x78] sm:$0x3f]
  %s2264 = scalar_lea.vmem %s3, 192
  %v2265 = vld [vmem:[%s2264] sm:$0xff]
  %v2266 = vld [vmem:[%s2264 + $0x8] sm:$0xff]
  %v2267 = vld [vmem:[%s2264 + $0x10] sm:$0xff]
  %v2268 = vld [vmem:[%s2264 + $0x18] sm:$0xff]
  %v2270 = vsel %vm1002, %v2250, 0
  %v2273 = vsel %vm1002, %v2251, 0
  %v2276 = vsel %vm1002, %v2252, 0
  %v2279 = vsel %vm1002, %v2253, 0
  %v2282 = vsel %vm1002, %v2254, 0
  %v2285 = vsel %vm1002, %v2255, 0
  %v2288 = vsel %vm1002, %v2256, 0
  %v2291 = vsel %vm1002, %v2257, 0
  %v2294 = vsel %vm1002, %v2258, 0
  %v2297 = vsel %vm1002, %v2259, 0
  %v2300 = vsel %vm1002, %v2260, 0
  %v2303 = vsel %vm1002, %v2261, 0
  %v2306 = vsel %vm1002, %v2262, 0
  %v2309 = vsel %vm1002, %v2263, 0
  %2311 = vmatprep.subr.mxu0 0.0
  %2312 = vmatpush1.msra.mxu0 %v2265
  %2313 = vmatprep.subr.mxu0 0.0
  %2314 = vmatpush1.msra.mxu0 %v2266
  %2315 = vmatprep.subr.mxu0 0.0
  %2316 = vmatpush1.msra.mxu0 %v2267
  %2317 = vmatprep.subr.mxu0 0.0
  %2318 = vmatpush1.msra.mxu0 %v2268
  %2319 = vmatprep.subr.mxu0 0.0
  %2320 = vmatpush1.msra.mxu0 0.0
  %2321 = vmatprep.subr.mxu0 0.0
  %2322 = vmatpush1.msra.mxu0 0.0
  %2323 = vmatprep.subr.mxu0 0.0
  %2324 = vmatpush1.msra.mxu0 0.0
  %2325 = vmatprep.subr.mxu0 0.0
  %2326 = vmatpush1.msra.mxu0 0.0
  %2327 = vmatprep.subr.mxu0 0.0
  %2328 = vmatpush1.msra.mxu0 0.0
  %2329 = vmatprep.subr.mxu0 0.0
  %2330 = vmatpush1.msra.mxu0 0.0
  %2331 = vmatprep.subr.mxu0 0.0
  %2332 = vmatpush1.msra.mxu0 0.0
  %2333 = vmatprep.subr.mxu0 0.0
  %2334 = vmatpush1.msra.mxu0 0.0
  %2335 = vmatprep.subr.mxu0 0.0
  %2336 = vmatpush1.msra.mxu0 0.0
  %2337 = vmatprep.subr.mxu0 0.0
  %2338 = vmatpush1.msra.mxu0 0.0
  %2339 = vmatprep.subr.mxu0 0.0
  %2340 = vmatpush1.msra.mxu0 0.0
  %2341 = vmatprep.subr.mxu0 0.0
  %2342 = vmatpush1.msra.mxu0 0.0
  %2343 = vmatprep.subr.mxu0 0.0
  %2344 = vmatpush1.msra.mxu0 0.0
  %2345 = vmatprep.subr.mxu0 0.0
  %2346 = vmatpush1.msra.mxu0 0.0
  %2347 = vmatprep.subr.mxu0 0.0
  %2348 = vmatpush1.msra.mxu0 0.0
  %2349 = vmatprep.subr.mxu0 0.0
  %2350 = vmatpush1.msra.mxu0 0.0
  %2351 = vmatprep.subr.mxu0 0.0
  %2352 = vmatpush1.msra.mxu0 0.0
  %2353 = vmatprep.subr.mxu0 0.0
  %2354 = vmatpush1.msra.mxu0 0.0
  %2355 = vmatprep.subr.mxu0 0.0
  %2356 = vmatpush1.msra.mxu0 0.0
  %2357 = vmatprep.subr.mxu0 0.0
  %2358 = vmatpush1.msra.mxu0 0.0
  %2359 = vmatprep.subr.mxu0 0.0
  %2360 = vmatpush1.msra.mxu0 0.0
  %2361 = vmatprep.subr.mxu0 0.0
  %2362 = vmatpush1.msra.mxu0 0.0
  %2363 = vmatprep.subr.mxu0 0.0
  %2364 = vmatpush1.msra.mxu0 0.0
  %2365 = vmatprep.subr.mxu0 0.0
  %2366 = vmatpush1.msra.mxu0 0.0
  %2367 = vmatprep.subr.mxu0 0.0
  %2368 = vmatpush1.msra.mxu0 0.0
  %2369 = vmatprep.subr.mxu0 0.0
  %2370 = vmatpush1.msra.mxu0 0.0
  %2371 = vmatprep.subr.mxu0 0.0
  %2372 = vmatpush1.msra.mxu0 0.0
  %2373 = vmatprep.subr.mxu0 0.0
  %2374 = vmatpush1.msra.mxu0 0.0
  %2375 = vmatprep.mubr.f32.mxu0 0.0
  %2376 = vmatmul.mubr.f32.gmra.mrb[0].mxu0 %v2270
  %v2377 = vpop.f32.mrb[0].mxu0
  %v2378 = vadd.f32 0.0, %v2377
  %v2379 = vpop.f32.mrb[0].mxu0
  %2380 = vmatprep.mubr.f32.mxu0 0.0
  %2381 = vmatmul.mubr.f32.gmra.mrb[0].mxu0 %v2273
  %v2382 = vpop.f32.mrb[0].mxu0
  %v2383 = vadd.f32 0.0, %v2382
  %v2384 = vpop.f32.mrb[0].mxu0
  %2385 = vmatprep.mubr.f32.mxu0 0.0
  %2386 = vmatmul.mubr.f32.gmra.mrb[0].mxu0 %v2276
  %v2387 = vpop.f32.mrb[0].mxu0
  %v2388 = vadd.f32 0.0, %v2387
  %v2389 = vpop.f32.mrb[0].mxu0
  %2390 = vmatprep.mubr.f32.mxu0 0.0
  %2391 = vmatmul.mubr.f32.gmra.mrb[0].mxu0 %v2279
  %v2392 = vpop.f32.mrb[0].mxu0
  %v2393 = vadd.f32 0.0, %v2392
  %v2394 = vpop.f32.mrb[0].mxu0
  %2395 = vmatprep.mubr.f32.mxu0 0.0
  %2396 = vmatmul.mubr.f32.gmra.mrb[0].mxu0 %v2282
  %v2397 = vpop.f32.mrb[0].mxu0
  %v2398 = vadd.f32 0.0, %v2397
  %v2399 = vpop.f32.mrb[0].mxu0
  %2400 = vmatprep.mubr.f32.mxu0 0.0
  %2401 = vmatmul.mubr.f32.gmra.mrb[0].mxu0 %v2285
  %v2402 = vpop.f32.mrb[0].mxu0
  %v2403 = vadd.f32 0.0, %v2402
  %v2404 = vpop.f32.mrb[0].mxu0
  %2405 = vmatprep.mubr.f32.mxu0 0.0
  %2406 = vmatmul.mubr.f32.gmra.mrb[0].mxu0 %v2288
  %v2407 = vpop.f32.mrb[0].mxu0
  %v2408 = vadd.f32 0.0, %v2407
  %v2409 = vpop.f32.mrb[0].mxu0
  %2410 = vmatprep.mubr.f32.mxu0 0.0
  %2411 = vmatmul.mubr.f32.gmra.mrb[0].mxu0 %v2291
  %v2412 = vpop.f32.mrb[0].mxu0
  %v2413 = vadd.f32 0.0, %v2412
  %v2414 = vpop.f32.mrb[0].mxu0
  %2415 = vmatprep.mubr.f32.mxu0 0.0
  %2416 = vmatmul.mubr.f32.gmra.mrb[0].mxu0 %v2294
  %v2417 = vpop.f32.mrb[0].mxu0
  %v2418 = vadd.f32 0.0, %v2417
  %v2419 = vpop.f32.mrb[0].mxu0
  %2420 = vmatprep.mubr.f32.mxu0 0.0
  %2421 = vmatmul.mubr.f32.gmra.mrb[0].mxu0 %v2297
  %v2422 = vpop.f32.mrb[0].mxu0
  %v2423 = vadd.f32 0.0, %v2422
  %v2424 = vpop.f32.mrb[0].mxu0
  %2425 = vmatprep.mubr.f32.mxu0 0.0
  %2426 = vmatmul.mubr.f32.gmra.mrb[0].mxu0 %v2300
  %v2427 = vpop.f32.mrb[0].mxu0
  %v2428 = vadd.f32 0.0, %v2427
  %v2429 = vpop.f32.mrb[0].mxu0
  %2430 = vmatprep.mubr.f32.mxu0 0.0
  %2431 = vmatmul.mubr.f32.gmra.mrb[0].mxu0 %v2303
  %v2432 = vpop.f32.mrb[0].mxu0
  %v2433 = vadd.f32 0.0, %v2432
  %v2434 = vpop.f32.mrb[0].mxu0
  %2435 = vmatprep.mubr.f32.mxu0 0.0
  %2436 = vmatmul.mubr.f32.gmra.mrb[0].mxu0 %v2306
  %v2437 = vpop.f32.mrb[0].mxu0
  %v2438 = vadd.f32 0.0, %v2437
  %v2439 = vpop.f32.mrb[0].mxu0
  %2440 = vmatprep.mubr.f32.mxu0 0.0
  %2441 = vmatmul.mubr.f32.gmra.mrb[0].mxu0 %v2309
  %v2442 = vpop.f32.mrb[0].mxu0
  %v2443 = vadd.f32 0.0, %v2442
  %v2444 = vpop.f32.mrb[0].mxu0
  %2445 = vdwg.mxu0
  %v2446 = vadd.f32 %v2236, %v2378
  %v2447 = vadd.f32 %v2237, %v2383
  %v2448 = vadd.f32 %v2238, %v2388
  %v2449 = vadd.f32 %v2239, %v2393
  %v2450 = vadd.f32 %v2240, %v2398
  %v2451 = vadd.f32 %v2241, %v2403
  %v2452 = vadd.f32 %v2242, %v2408
  %v2453 = vadd.f32 %v2243, %v2413
  %v2454 = vadd.f32 %v2244, %v2418
  %v2455 = vadd.f32 %v2245, %v2423
  %v2456 = vadd.f32 %v2246, %v2428
  %v2457 = vadd.f32 %v2247, %v2433
  %v2458 = vadd.f32 %v2248, %v2438
  %v2459 = vadd.f32 %v2249, %v2443
  %v2460 = vld [vmem:[#allocation2 + $0x11] sm:$0xff]
  %v2461 = vld [vmem:[#allocation2 + $0x19] sm:$0xff]
  %v2462 = vld [vmem:[#allocation2 + $0x21] sm:$0xff]
  %v2463 = vld [vmem:[#allocation2 + $0x29] sm:$0xff]
  %v2464 = vld [vmem:[#allocation2 + $0x31] sm:$0xff]
  %v2465 = vld [vmem:[#allocation2 + $0x39] sm:$0xff]
  %v2466 = vld [vmem:[#allocation2 + $0x41] sm:$0xff]
  %v2467 = vld [vmem:[#allocation2 + $0x49] sm:$0xff]
  %v2468 = vld [vmem:[#allocation2 + $0x51] sm:$0xff]
  %v2469 = vld [vmem:[#allocation2 + $0x59] sm:$0xff]
  %v2470 = vld [vmem:[#allocation2 + $0x61] sm:$0xff]
  %v2471 = vld [vmem:[#allocation2 + $0x69] sm:$0xff]
  %v2472 = vld [vmem:[#allocation2 + $0x71] sm:$0xff]
  %v2473 = vld [vmem:[#allocation2 + $0x79] sm:$0x3f]
  %s2474 = scalar_lea.vmem %s3, 224
  %v2475 = vld [vmem:[%s2474] sm:$0xff]
  %v2476 = vld [vmem:[%s2474 + $0x8] sm:$0xff]
  %v2477 = vld [vmem:[%s2474 + $0x10] sm:$0xff]
  %v2478 = vld [vmem:[%s2474 + $0x18] sm:$0xff]
  %v2480 = vsel %vm1002, %v2460, 0
  %v2483 = vsel %vm1002, %v2461, 0
  %v2486 = vsel %vm1002, %v2462, 0
  %v2489 = vsel %vm1002, %v2463, 0
  %v2492 = vsel %vm1002, %v2464, 0
  %v2495 = vsel %vm1002, %v2465, 0
  %v2498 = vsel %vm1002, %v2466, 0
  %v2501 = vsel %vm1002, %v2467, 0
  %v2504 = vsel %vm1002, %v2468, 0
  %v2507 = vsel %vm1002, %v2469, 0
  %v2510 = vsel %vm1002, %v2470, 0
  %v2513 = vsel %vm1002, %v2471, 0
  %v2516 = vsel %vm1002, %v2472, 0
  %v2519 = vsel %vm1002, %v2473, 0
  %2521 = vmatprep.subr.mxu0 0.0
  %2522 = vmatpush1.msra.mxu0 %v2475
  %2523 = vmatprep.subr.mxu0 0.0
  %2524 = vmatpush1.msra.mxu0 %v2476
  %2525 = vmatprep.subr.mxu0 0.0
  %2526 = vmatpush1.msra.mxu0 %v2477
  %2527 = vmatprep.subr.mxu0 0.0
  %2528 = vmatpush1.msra.mxu0 %v2478
  %2529 = vmatprep.subr.mxu0 0.0
  %2530 = vmatpush1.msra.mxu0 0.0
  %2531 = vmatprep.subr.mxu0 0.0
  %2532 = vmatpush1.msra.mxu0 0.0
  %2533 = vmatprep.subr.mxu0 0.0
  %2534 = vmatpush1.msra.mxu0 0.0
  %2535 = vmatprep.subr.mxu0 0.0
  %2536 = vmatpush1.msra.mxu0 0.0
  %2537 = vmatprep.subr.mxu0 0.0
  %2538 = vmatpush1.msra.mxu0 0.0
  %2539 = vmatprep.subr.mxu0 0.0
  %2540 = vmatpush1.msra.mxu0 0.0
  %2541 = vmatprep.subr.mxu0 0.0
  %2542 = vmatpush1.msra.mxu0 0.0
  %2543 = vmatprep.subr.mxu0 0.0
  %2544 = vmatpush1.msra.mxu0 0.0
  %2545 = vmatprep.subr.mxu0 0.0
  %2546 = vmatpush1.msra.mxu0 0.0
  %2547 = vmatprep.subr.mxu0 0.0
  %2548 = vmatpush1.msra.mxu0 0.0
  %2549 = vmatprep.subr.mxu0 0.0
  %2550 = vmatpush1.msra.mxu0 0.0
  %2551 = vmatprep.subr.mxu0 0.0
  %2552 = vmatpush1.msra.mxu0 0.0
  %2553 = vmatprep.subr.mxu0 0.0
  %2554 = vmatpush1.msra.mxu0 0.0
  %2555 = vmatprep.subr.mxu0 0.0
  %2556 = vmatpush1.msra.mxu0 0.0
  %2557 = vmatprep.subr.mxu0 0.0
  %2558 = vmatpush1.msra.mxu0 0.0
  %2559 = vmatprep.subr.mxu0 0.0
  %2560 = vmatpush1.msra.mxu0 0.0
  %2561 = vmatprep.subr.mxu0 0.0
  %2562 = vmatpush1.msra.mxu0 0.0
  %2563 = vmatprep.subr.mxu0 0.0
  %2564 = vmatpush1.msra.mxu0 0.0
  %2565 = vmatprep.subr.mxu0 0.0
  %2566 = vmatpush1.msra.mxu0 0.0
  %2567 = vmatprep.subr.mxu0 0.0
  %2568 = vmatpush1.msra.mxu0 0.0
  %2569 = vmatprep.subr.mxu0 0.0
  %2570 = vmatpush1.msra.mxu0 0.0
  %2571 = vmatprep.subr.mxu0 0.0
  %2572 = vmatpush1.msra.mxu0 0.0
  %2573 = vmatprep.subr.mxu0 0.0
  %2574 = vmatpush1.msra.mxu0 0.0
  %2575 = vmatprep.subr.mxu0 0.0
  %2576 = vmatpush1.msra.mxu0 0.0
  %2577 = vmatprep.subr.mxu0 0.0
  %2578 = vmatpush1.msra.mxu0 0.0
  %2579 = vmatprep.subr.mxu0 0.0
  %2580 = vmatpush1.msra.mxu0 0.0
  %2581 = vmatprep.subr.mxu0 0.0
  %2582 = vmatpush1.msra.mxu0 0.0
  %2583 = vmatprep.subr.mxu0 0.0
  %2584 = vmatpush1.msra.mxu0 0.0
  %2585 = vmatprep.mubr.f32.mxu0 0.0
  %2586 = vmatmul.mubr.f32.gmra.mrb[0].mxu0 %v2480
  %v2587 = vpop.f32.mrb[0].mxu0
  %v2588 = vadd.f32 0.0, %v2587
  %v2589 = vpop.f32.mrb[0].mxu0
  %2590 = vmatprep.mubr.f32.mxu0 0.0
  %2591 = vmatmul.mubr.f32.gmra.mrb[0].mxu0 %v2483
  %v2592 = vpop.f32.mrb[0].mxu0
  %v2593 = vadd.f32 0.0, %v2592
  %v2594 = vpop.f32.mrb[0].mxu0
  %2595 = vmatprep.mubr.f32.mxu0 0.0
  %2596 = vmatmul.mubr.f32.gmra.mrb[0].mxu0 %v2486
  %v2597 = vpop.f32.mrb[0].mxu0
  %v2598 = vadd.f32 0.0, %v2597
  %v2599 = vpop.f32.mrb[0].mxu0
  %2600 = vmatprep.mubr.f32.mxu0 0.0
  %2601 = vmatmul.mubr.f32.gmra.mrb[0].mxu0 %v2489
  %v2602 = vpop.f32.mrb[0].mxu0
  %v2603 = vadd.f32 0.0, %v2602
  %v2604 = vpop.f32.mrb[0].mxu0
  %2605 = vmatprep.mubr.f32.mxu0 0.0
  %2606 = vmatmul.mubr.f32.gmra.mrb[0].mxu0 %v2492
  %v2607 = vpop.f32.mrb[0].mxu0
  %v2608 = vadd.f32 0.0, %v2607
  %v2609 = vpop.f32.mrb[0].mxu0
  %2610 = vmatprep.mubr.f32.mxu0 0.0
  %2611 = vmatmul.mubr.f32.gmra.mrb[0].mxu0 %v2495
  %v2612 = vpop.f32.mrb[0].mxu0
  %v2613 = vadd.f32 0.0, %v2612
  %v2614 = vpop.f32.mrb[0].mxu0
  %2615 = vmatprep.mubr.f32.mxu0 0.0
  %2616 = vmatmul.mubr.f32.gmra.mrb[0].mxu0 %v2498
  %v2617 = vpop.f32.mrb[0].mxu0
  %v2618 = vadd.f32 0.0, %v2617
  %v2619 = vpop.f32.mrb[0].mxu0
  %2620 = vmatprep.mubr.f32.mxu0 0.0
  %2621 = vmatmul.mubr.f32.gmra.mrb[0].mxu0 %v2501
  %v2622 = vpop.f32.mrb[0].mxu0
  %v2623 = vadd.f32 0.0, %v2622
  %v2624 = vpop.f32.mrb[0].mxu0
  %2625 = vmatprep.mubr.f32.mxu0 0.0
  %2626 = vmatmul.mubr.f32.gmra.mrb[0].mxu0 %v2504
  %v2627 = vpop.f32.mrb[0].mxu0
  %v2628 = vadd.f32 0.0, %v2627
  %v2629 = vpop.f32.mrb[0].mxu0
  %2630 = vmatprep.mubr.f32.mxu0 0.0
  %2631 = vmatmul.mubr.f32.gmra.mrb[0].mxu0 %v2507
  %v2632 = vpop.f32.mrb[0].mxu0
  %v2633 = vadd.f32 0.0, %v2632
  %v2634 = vpop.f32.mrb[0].mxu0
  %2635 = vmatprep.mubr.f32.mxu0 0.0
  %2636 = vmatmul.mubr.f32.gmra.mrb[0].mxu0 %v2510
  %v2637 = vpop.f32.mrb[0].mxu0
  %v2638 = vadd.f32 0.0, %v2637
  %v2639 = vpop.f32.mrb[0].mxu0
  %2640 = vmatprep.mubr.f32.mxu0 0.0
  %2641 = vmatmul.mubr.f32.gmra.mrb[0].mxu0 %v2513
  %v2642 = vpop.f32.mrb[0].mxu0
  %v2643 = vadd.f32 0.0, %v2642
  %v2644 = vpop.f32.mrb[0].mxu0
  %2645 = vmatprep.mubr.f32.mxu0 0.0
  %2646 = vmatmul.mubr.f32.gmra.mrb[0].mxu0 %v2516
  %v2647 = vpop.f32.mrb[0].mxu0
  %v2648 = vadd.f32 0.0, %v2647
  %v2649 = vpop.f32.mrb[0].mxu0
  %2650 = vmatprep.mubr.f32.mxu0 0.0
  %2651 = vmatmul.mubr.f32.gmra.mrb[0].mxu0 %v2519
  %v2652 = vpop.f32.mrb[0].mxu0
  %v2653 = vadd.f32 0.0, %v2652
  %v2654 = vpop.f32.mrb[0].mxu0
  %2655 = vdwg.mxu0
  %v2656 = vadd.f32 %v2446, %v2588
  %v2657 = vadd.f32 %v2447, %v2593
  %v2658 = vadd.f32 %v2448, %v2598
  %v2659 = vadd.f32 %v2449, %v2603
  %v2660 = vadd.f32 %v2450, %v2608
  %v2661 = vadd.f32 %v2451, %v2613
  %v2662 = vadd.f32 %v2452, %v2618
  %v2663 = vadd.f32 %v2453, %v2623
  %v2664 = vadd.f32 %v2454, %v2628
  %v2665 = vadd.f32 %v2455, %v2633
  %v2666 = vadd.f32 %v2456, %v2638
  %v2667 = vadd.f32 %v2457, %v2643
  %v2668 = vadd.f32 %v2458, %v2648
  %v2669 = vadd.f32 %v2459, %v2653
  %v2670 = vld [vmem:[#allocation2 + $0x12] sm:$0xff]
  %v2671 = vld [vmem:[#allocation2 + $0x1a] sm:$0xff]
  %v2672 = vld [vmem:[#allocation2 + $0x22] sm:$0xff]
  %v2673 = vld [vmem:[#allocation2 + $0x2a] sm:$0xff]
  %v2674 = vld [vmem:[#allocation2 + $0x32] sm:$0xff]
  %v2675 = vld [vmem:[#allocation2 + $0x3a] sm:$0xff]
  %v2676 = vld [vmem:[#allocation2 + $0x42] sm:$0xff]
  %v2677 = vld [vmem:[#allocation2 + $0x4a] sm:$0xff]
  %v2678 = vld [vmem:[#allocation2 + $0x52] sm:$0xff]
  %v2679 = vld [vmem:[#allocation2 + $0x5a] sm:$0xff]
  %v2680 = vld [vmem:[#allocation2 + $0x62] sm:$0xff]
  %v2681 = vld [vmem:[#allocation2 + $0x6a] sm:$0xff]
  %v2682 = vld [vmem:[#allocation2 + $0x72] sm:$0xff]
  %v2683 = vld [vmem:[#allocation2 + $0x7a] sm:$0x3f]
  %s2684 = scalar_lea.vmem %s3, 256
  %v2685 = vld [vmem:[%s2684] sm:$0xff]
  %v2686 = vld [vmem:[%s2684 + $0x8] sm:$0xff]
  %v2687 = vld [vmem:[%s2684 + $0x10] sm:$0xff]
  %v2688 = vld [vmem:[%s2684 + $0x18] sm:$0xff]
  %v2690 = vsel %vm1002, %v2670, 0
  %v2693 = vsel %vm1002, %v2671, 0
  %v2696 = vsel %vm1002, %v2672, 0
  %v2699 = vsel %vm1002, %v2673, 0
  %v2702 = vsel %vm1002, %v2674, 0
  %v2705 = vsel %vm1002, %v2675, 0
  %v2708 = vsel %vm1002, %v2676, 0
  %v2711 = vsel %vm1002, %v2677, 0
  %v2714 = vsel %vm1002, %v2678, 0
  %v2717 = vsel %vm1002, %v2679, 0
  %v2720 = vsel %vm1002, %v2680, 0
  %v2723 = vsel %vm1002, %v2681, 0
  %v2726 = vsel %vm1002, %v2682, 0
  %v2729 = vsel %vm1002, %v2683, 0
  %2731 = vmatprep.subr.mxu0 0.0
  %2732 = vmatpush1.msra.mxu0 %v2685
  %2733 = vmatprep.subr.mxu0 0.0
  %2734 = vmatpush1.msra.mxu0 %v2686
  %2735 = vmatprep.subr.mxu0 0.0
  %2736 = vmatpush1.msra.mxu0 %v2687
  %2737 = vmatprep.subr.mxu0 0.0
  %2738 = vmatpush1.msra.mxu0 %v2688
  %2739 = vmatprep.subr.mxu0 0.0
  %2740 = vmatpush1.msra.mxu0 0.0
  %2741 = vmatprep.subr.mxu0 0.0
  %2742 = vmatpush1.msra.mxu0 0.0
  %2743 = vmatprep.subr.mxu0 0.0
  %2744 = vmatpush1.msra.mxu0 0.0
  %2745 = vmatprep.subr.mxu0 0.0
  %2746 = vmatpush1.msra.mxu0 0.0
  %2747 = vmatprep.subr.mxu0 0.0
  %2748 = vmatpush1.msra.mxu0 0.0
  %2749 = vmatprep.subr.mxu0 0.0
  %2750 = vmatpush1.msra.mxu0 0.0
  %2751 = vmatprep.subr.mxu0 0.0
  %2752 = vmatpush1.msra.mxu0 0.0
  %2753 = vmatprep.subr.mxu0 0.0
  %2754 = vmatpush1.msra.mxu0 0.0
  %2755 = vmatprep.subr.mxu0 0.0
  %2756 = vmatpush1.msra.mxu0 0.0
  %2757 = vmatprep.subr.mxu0 0.0
  %2758 = vmatpush1.msra.mxu0 0.0
  %2759 = vmatprep.subr.mxu0 0.0
  %2760 = vmatpush1.msra.mxu0 0.0
  %2761 = vmatprep.subr.mxu0 0.0
  %2762 = vmatpush1.msra.mxu0 0.0
  %2763 = vmatprep.subr.mxu0 0.0
  %2764 = vmatpush1.msra.mxu0 0.0
  %2765 = vmatprep.subr.mxu0 0.0
  %2766 = vmatpush1.msra.mxu0 0.0
  %2767 = vmatprep.subr.mxu0 0.0
  %2768 = vmatpush1.msra.mxu0 0.0
  %2769 = vmatprep.subr.mxu0 0.0
  %2770 = vmatpush1.msra.mxu0 0.0
  %2771 = vmatprep.subr.mxu0 0.0
  %2772 = vmatpush1.msra.mxu0 0.0
  %2773 = vmatprep.subr.mxu0 0.0
  %2774 = vmatpush1.msra.mxu0 0.0
  %2775 = vmatprep.subr.mxu0 0.0
  %2776 = vmatpush1.msra.mxu0 0.0
  %2777 = vmatprep.subr.mxu0 0.0
  %2778 = vmatpush1.msra.mxu0 0.0
  %2779 = vmatprep.subr.mxu0 0.0
  %2780 = vmatpush1.msra.mxu0 0.0
  %2781 = vmatprep.subr.mxu0 0.0
  %2782 = vmatpush1.msra.mxu0 0.0
  %2783 = vmatprep.subr.mxu0 0.0
  %2784 = vmatpush1.msra.mxu0 0.0
  %2785 = vmatprep.subr.mxu0 0.0
  %2786 = vmatpush1.msra.mxu0 0.0
  %2787 = vmatprep.subr.mxu0 0.0
  %2788 = vmatpush1.msra.mxu0 0.0
  %2789 = vmatprep.subr.mxu0 0.0
  %2790 = vmatpush1.msra.mxu0 0.0
  %2791 = vmatprep.subr.mxu0 0.0
  %2792 = vmatpush1.msra.mxu0 0.0
  %2793 = vmatprep.subr.mxu0 0.0
  %2794 = vmatpush1.msra.mxu0 0.0
  %2795 = vmatprep.mubr.f32.mxu0 0.0
  %2796 = vmatmul.mubr.f32.gmra.mrb[0].mxu0 %v2690
  %v2797 = vpop.f32.mrb[0].mxu0
  %v2798 = vadd.f32 0.0, %v2797
  %v2799 = vpop.f32.mrb[0].mxu0
  %2800 = vmatprep.mubr.f32.mxu0 0.0
  %2801 = vmatmul.mubr.f32.gmra.mrb[0].mxu0 %v2693
  %v2802 = vpop.f32.mrb[0].mxu0
  %v2803 = vadd.f32 0.0, %v2802
  %v2804 = vpop.f32.mrb[0].mxu0
  %2805 = vmatprep.mubr.f32.mxu0 0.0
  %2806 = vmatmul.mubr.f32.gmra.mrb[0].mxu0 %v2696
  %v2807 = vpop.f32.mrb[0].mxu0
  %v2808 = vadd.f32 0.0, %v2807
  %v2809 = vpop.f32.mrb[0].mxu0
  %2810 = vmatprep.mubr.f32.mxu0 0.0
  %2811 = vmatmul.mubr.f32.gmra.mrb[0].mxu0 %v2699
  %v2812 = vpop.f32.mrb[0].mxu0
  %v2813 = vadd.f32 0.0, %v2812
  %v2814 = vpop.f32.mrb[0].mxu0
  %2815 = vmatprep.mubr.f32.mxu0 0.0
  %2816 = vmatmul.mubr.f32.gmra.mrb[0].mxu0 %v2702
  %v2817 = vpop.f32.mrb[0].mxu0
  %v2818 = vadd.f32 0.0, %v2817
  %v2819 = vpop.f32.mrb[0].mxu0
  %2820 = vmatprep.mubr.f32.mxu0 0.0
  %2821 = vmatmul.mubr.f32.gmra.mrb[0].mxu0 %v2705
  %v2822 = vpop.f32.mrb[0].mxu0
  %v2823 = vadd.f32 0.0, %v2822
  %v2824 = vpop.f32.mrb[0].mxu0
  %2825 = vmatprep.mubr.f32.mxu0 0.0
  %2826 = vmatmul.mubr.f32.gmra.mrb[0].mxu0 %v2708
  %v2827 = vpop.f32.mrb[0].mxu0
  %v2828 = vadd.f32 0.0, %v2827
  %v2829 = vpop.f32.mrb[0].mxu0
  %2830 = vmatprep.mubr.f32.mxu0 0.0
  %2831 = vmatmul.mubr.f32.gmra.mrb[0].mxu0 %v2711
  %v2832 = vpop.f32.mrb[0].mxu0
  %v2833 = vadd.f32 0.0, %v2832
  %v2834 = vpop.f32.mrb[0].mxu0
  %2835 = vmatprep.mubr.f32.mxu0 0.0
  %2836 = vmatmul.mubr.f32.gmra.mrb[0].mxu0 %v2714
  %v2837 = vpop.f32.mrb[0].mxu0
  %v2838 = vadd.f32 0.0, %v2837
  %v2839 = vpop.f32.mrb[0].mxu0
  %2840 = vmatprep.mubr.f32.mxu0 0.0
  %2841 = vmatmul.mubr.f32.gmra.mrb[0].mxu0 %v2717
  %v2842 = vpop.f32.mrb[0].mxu0
  %v2843 = vadd.f32 0.0, %v2842
  %v2844 = vpop.f32.mrb[0].mxu0
  %2845 = vmatprep.mubr.f32.mxu0 0.0
  %2846 = vmatmul.mubr.f32.gmra.mrb[0].mxu0 %v2720
  %v2847 = vpop.f32.mrb[0].mxu0
  %v2848 = vadd.f32 0.0, %v2847
  %v2849 = vpop.f32.mrb[0].mxu0
  %2850 = vmatprep.mubr.f32.mxu0 0.0
  %2851 = vmatmul.mubr.f32.gmra.mrb[0].mxu0 %v2723
  %v2852 = vpop.f32.mrb[0].mxu0
  %v2853 = vadd.f32 0.0, %v2852
  %v2854 = vpop.f32.mrb[0].mxu0
  %2855 = vmatprep.mubr.f32.mxu0 0.0
  %2856 = vmatmul.mubr.f32.gmra.mrb[0].mxu0 %v2726
  %v2857 = vpop.f32.mrb[0].mxu0
  %v2858 = vadd.f32 0.0, %v2857
  %v2859 = vpop.f32.mrb[0].mxu0
  %2860 = vmatprep.mubr.f32.mxu0 0.0
  %2861 = vmatmul.mubr.f32.gmra.mrb[0].mxu0 %v2729
  %v2862 = vpop.f32.mrb[0].mxu0
  %v2863 = vadd.f32 0.0, %v2862
  %v2864 = vpop.f32.mrb[0].mxu0
  %2865 = vdwg.mxu0
  %v2866 = vadd.f32 %v2656, %v2798
  %v2867 = vadd.f32 %v2657, %v2803
  %v2868 = vadd.f32 %v2658, %v2808
  %v2869 = vadd.f32 %v2659, %v2813
  %v2870 = vadd.f32 %v2660, %v2818
  %v2871 = vadd.f32 %v2661, %v2823
  %v2872 = vadd.f32 %v2662, %v2828
  %v2873 = vadd.f32 %v2663, %v2833
  %v2874 = vadd.f32 %v2664, %v2838
  %v2875 = vadd.f32 %v2665, %v2843
  %v2876 = vadd.f32 %v2666, %v2848
  %v2877 = vadd.f32 %v2667, %v2853
  %v2878 = vadd.f32 %v2668, %v2858
  %v2879 = vadd.f32 %v2669, %v2863
  %v2880 = vld [vmem:[%s4] sm:$0x1]
  %v2882 = vlaneseq
  %v2883 = vshrl.u32 %v2882, 7
  %v2884 = vsub.s32 0, %v2883
  %v2885 = vrot.slane %v2880, %v2884
  %v2887 = vadd.f32 %v2866, %v2885
  %v2888 = vadd.f32 %v2867, %v2885
  %v2889 = vadd.f32 %v2868, %v2885
  %v2890 = vadd.f32 %v2869, %v2885
  %v2891 = vadd.f32 %v2870, %v2885
  %v2892 = vadd.f32 %v2871, %v2885
  %v2893 = vadd.f32 %v2872, %v2885
  %v2894 = vadd.f32 %v2873, %v2885
  %v2895 = vadd.f32 %v2874, %v2885
  %v2896 = vadd.f32 %v2875, %v2885
  %v2897 = vadd.f32 %v2876, %v2885
  %v2898 = vadd.f32 %v2877, %v2885
  %v2899 = vadd.f32 %v2878, %v2885
  %v2900 = vadd.f32 %v2879, %v2885
  %v2901 = vmax.f32 %v2887, 0.0
  %v2902 = vmax.f32 %v2888, 0.0
  %v2903 = vmax.f32 %v2889, 0.0
  %v2904 = vmax.f32 %v2890, 0.0
  %v2905 = vmax.f32 %v2891, 0.0
  %v2906 = vmax.f32 %v2892, 0.0
  %v2907 = vmax.f32 %v2893, 0.0
  %v2908 = vmax.f32 %v2894, 0.0
  %v2909 = vmax.f32 %v2895, 0.0
  %v2910 = vmax.f32 %v2896, 0.0
  %v2911 = vmax.f32 %v2897, 0.0
  %v2912 = vmax.f32 %v2898, 0.0
  %v2913 = vmax.f32 %v2899, 0.0
  %v2914 = vmax.f32 %v2900, 0.0
  %v2915 = vld [vmem:[%s5] sm:$0xff]
  %v2916 = vld [vmem:[%s5 + $0x8] sm:$0xff]
  %v2917 = vld [vmem:[%s5 + $0x10] sm:$0xff]
  %v2918 = vld [vmem:[%s5 + $0x18] sm:$0xff]
  %vm2919 = vcmask 900096
  %v2921 = vsel %vm2919, %v2915, 0
  %v2924 = vsel %vm2919, %v2916, 0
  %v2927 = vsel %vm2919, %v2917, 0
  %v2930 = vsel %vm2919, %v2918, 0
  %vm2932 = vcmask 1045504
  %v2934 = vsel %vm2932, %v2914, 0
  %2936 = vmatprep.subr.mxu0 0.0
  %2937 = vmatpush1.msra.mxu0 %v2901
  %2938 = vmatprep.subr.mxu0 0.0
  %2939 = vmatpush1.msra.mxu0 %v2902
  %2940 = vmatprep.subr.mxu0 0.0
  %2941 = vmatpush1.msra.mxu0 %v2903
  %2942 = vmatprep.subr.mxu0 0.0
  %2943 = vmatpush1.msra.mxu0 %v2904
  %2944 = vmatprep.subr.mxu0 0.0
  %2945 = vmatpush1.msra.mxu0 %v2905
  %2946 = vmatprep.subr.mxu0 0.0
  %2947 = vmatpush1.msra.mxu0 %v2906
  %2948 = vmatprep.subr.mxu0 0.0
  %2949 = vmatpush1.msra.mxu0 %v2907
  %2950 = vmatprep.subr.mxu0 0.0
  %2951 = vmatpush1.msra.mxu0 %v2908
  %2952 = vmatprep.subr.mxu0 0.0
  %2953 = vmatpush1.msra.mxu0 %v2909
  %2954 = vmatprep.subr.mxu0 0.0
  %2955 = vmatpush1.msra.mxu0 %v2910
  %2956 = vmatprep.subr.mxu0 0.0
  %2957 = vmatpush1.msra.mxu0 %v2911
  %2958 = vmatprep.subr.mxu0 0.0
  %2959 = vmatpush1.msra.mxu0 %v2912
  %2960 = vmatprep.subr.mxu0 0.0
  %2961 = vmatpush1.msra.mxu0 %v2913
  %2962 = vmatprep.subr.mxu0 0.0
  %2963 = vmatpush1.msra.mxu0 %v2934
  %2964 = vmatprep.subr.mxu0 0.0
  %2965 = vmatpush1.msra.mxu0 0.0
  %2966 = vmatprep.subr.mxu0 0.0
  %2967 = vmatpush1.msra.mxu0 0.0
  %2968 = vmatprep.subr.mxu0 0.0
  %2969 = vmatpush1.msra.mxu0 0.0
  %2970 = vmatprep.subr.mxu0 0.0
  %2971 = vmatpush1.msra.mxu0 0.0
  %2972 = vmatprep.subr.mxu0 0.0
  %2973 = vmatpush1.msra.mxu0 0.0
  %2974 = vmatprep.subr.mxu0 0.0
  %2975 = vmatpush1.msra.mxu0 0.0
  %2976 = vmatprep.subr.mxu0 0.0
  %2977 = vmatpush1.msra.mxu0 0.0
  %2978 = vmatprep.subr.mxu0 0.0
  %2979 = vmatpush1.msra.mxu0 0.0
  %2980 = vmatprep.subr.mxu0 0.0
  %2981 = vmatpush1.msra.mxu0 0.0
  %2982 = vmatprep.subr.mxu0 0.0
  %2983 = vmatpush1.msra.mxu0 0.0
  %2984 = vmatprep.subr.mxu0 0.0
  %2985 = vmatpush1.msra.mxu0 0.0
  %2986 = vmatprep.subr.mxu0 0.0
  %2987 = vmatpush1.msra.mxu0 0.0
  %2988 = vmatprep.subr.mxu0 0.0
  %2989 = vmatpush1.msra.mxu0 0.0
  %2990 = vmatprep.subr.mxu0 0.0
  %2991 = vmatpush1.msra.mxu0 0.0
  %2992 = vmatprep.subr.mxu0 0.0
  %2993 = vmatpush1.msra.mxu0 0.0
  %2994 = vmatprep.subr.mxu0 0.0
  %2995 = vmatpush1.msra.mxu0 0.0
  %2996 = vmatprep.subr.mxu0 0.0
  %2997 = vmatpush1.msra.mxu0 0.0
  %2998 = vmatprep.subr.mxu0 0.0
  %2999 = vmatpush1.msra.mxu0 0.0
  %3000 = vmatprep.mubr.f32.mxu0 0.0
  %3001 = vmatmul.mubr.f32.gmra.mrb[0].mxu0 %v2921
  %v3002 = vpop.f32.mrb[0].mxu0
  %v3003 = vadd.f32 0.0, %v3002
  %v3004 = vpop.f32.mrb[0].mxu0
  %3005 = vmatprep.mubr.f32.mxu0 0.0
  %3006 = vmatmul.mubr.f32.gmra.mrb[0].mxu0 %v2924
  %v3007 = vpop.f32.mrb[0].mxu0
  %v3008 = vadd.f32 0.0, %v3007
  %v3009 = vpop.f32.mrb[0].mxu0
  %3010 = vmatprep.mubr.f32.mxu0 0.0
  %3011 = vmatmul.mubr.f32.gmra.mrb[0].mxu0 %v2927
  %v3012 = vpop.f32.mrb[0].mxu0
  %v3013 = vadd.f32 0.0, %v3012
  %v3014 = vpop.f32.mrb[0].mxu0
  %3015 = vmatprep.mubr.f32.mxu0 0.0
  %3016 = vmatmul.mubr.f32.gmra.mrb[0].mxu0 %v2930
  %v3017 = vpop.f32.mrb[0].mxu0
  %v3018 = vadd.f32 0.0, %v3017
  %v3019 = vpop.f32.mrb[0].mxu0
  %3020 = vdwg.mxu0
  %vm3021 = vcmask 523264
  %3022 = vst.msk [vmem:[#allocation3] sm:$0xff] %vm3021, %v3003
  %3023 = vst.msk [vmem:[#allocation3 + $0x8] sm:$0xff] %vm3021, %v3008
  %3024 = vst.msk [vmem:[#allocation3 + $0x10] sm:$0xff] %vm3021, %v3013
  %3025 = vst.msk [vmem:[#allocation3 + $0x18] sm:$0xff] %vm3021, %v3018
  %v3026 = vld [vmem:[#allocation3] sm:$0x3]
  %v3027 = vld [vmem:[%s6] sm:$0xff]
  %v3028 = vld [vmem:[%s6 + $0x8] sm:$0xff]
  %v3029 = vld [vmem:[%s6 + $0x10] sm:$0xff]
  %v3030 = vld [vmem:[%s6 + $0x18] sm:$0xff]
  %v3031 = vld [vmem:[%s6 + $0x20] sm:$0xff]
  %v3032 = vld [vmem:[%s6 + $0x28] sm:$0xff]
  %v3033 = vld [vmem:[%s6 + $0x30] sm:$0xff]
  %v3034 = vld [vmem:[%s6 + $0x38] sm:$0xff]
  %v3035 = vld [vmem:[#allocation3 + $0x2] sm:$0x3]
  %s3036 = scalar_lea.vmem %s6, 64
  %v3037 = vld [vmem:[%s3036] sm:$0xff]
  %v3038 = vld [vmem:[%s3036 + $0x8] sm:$0xff]
  %v3039 = vld [vmem:[%s3036 + $0x10] sm:$0xff]
  %v3040 = vld [vmem:[%s3036 + $0x18] sm:$0xff]
  %v3041 = vld [vmem:[%s3036 + $0x20] sm:$0xff]
  %v3042 = vld [vmem:[%s3036 + $0x28] sm:$0xff]
  %v3043 = vld [vmem:[%s3036 + $0x30] sm:$0xff]
  %v3044 = vld [vmem:[%s3036 + $0x38] sm:$0xff]
  %v3046 = vsel %vm3021, %v3035, 0
  %3048 = vmatprep.subr.mxu0 0.0
  %3049 = vmatpush1.msra.mxu0 %v3037
  %3050 = vmatprep.subr.mxu0 0.0
  %3051 = vmatpush1.msra.mxu0 %v3038
  %3052 = vmatprep.subr.mxu0 0.0
  %3053 = vmatpush1.msra.mxu0 %v3039
  %3054 = vmatprep.subr.mxu0 0.0
  %3055 = vmatpush1.msra.mxu0 %v3040
  %3056 = vmatprep.subr.mxu0 0.0
  %3057 = vmatpush1.msra.mxu0 %v3041
  %3058 = vmatprep.subr.mxu0 0.0
  %3059 = vmatpush1.msra.mxu0 %v3042
  %3060 = vmatprep.subr.mxu0 0.0
  %3061 = vmatpush1.msra.mxu0 %v3043
  %3062 = vmatprep.subr.mxu0 0.0
  %3063 = vmatpush1.msra.mxu0 %v3044
  %3064 = vmatprep.subr.mxu0 0.0
  %3065 = vmatpush1.msra.mxu0 0.0
  %3066 = vmatprep.subr.mxu0 0.0
  %3067 = vmatpush1.msra.mxu0 0.0
  %3068 = vmatprep.subr.mxu0 0.0
  %3069 = vmatpush1.msra.mxu0 0.0
  %3070 = vmatprep.subr.mxu0 0.0
  %3071 = vmatpush1.msra.mxu0 0.0
  %3072 = vmatprep.subr.mxu0 0.0
  %3073 = vmatpush1.msra.mxu0 0.0
  %3074 = vmatprep.subr.mxu0 0.0
  %3075 = vmatpush1.msra.mxu0 0.0
  %3076 = vmatprep.subr.mxu0 0.0
  %3077 = vmatpush1.msra.mxu0 0.0
  %3078 = vmatprep.subr.mxu0 0.0
  %3079 = vmatpush1.msra.mxu0 0.0
  %3080 = vmatprep.subr.mxu0 0.0
  %3081 = vmatpush1.msra.mxu0 0.0
  %3082 = vmatprep.subr.mxu0 0.0
  %3083 = vmatpush1.msra.mxu0 0.0
  %3084 = vmatprep.subr.mxu0 0.0
  %3085 = vmatpush1.msra.mxu0 0.0
  %3086 = vmatprep.subr.mxu0 0.0
  %3087 = vmatpush1.msra.mxu0 0.0
  %3088 = vmatprep.subr.mxu0 0.0
  %3089 = vmatpush1.msra.mxu0 0.0
  %3090 = vmatprep.subr.mxu0 0.0
  %3091 = vmatpush1.msra.mxu0 0.0
  %3092 = vmatprep.subr.mxu0 0.0
  %3093 = vmatpush1.msra.mxu0 0.0
  %3094 = vmatprep.subr.mxu0 0.0
  %3095 = vmatpush1.msra.mxu0 0.0
  %3096 = vmatprep.subr.mxu0 0.0
  %3097 = vmatpush1.msra.mxu0 0.0
  %3098 = vmatprep.subr.mxu0 0.0
  %3099 = vmatpush1.msra.mxu0 0.0
  %3100 = vmatprep.subr.mxu0 0.0
  %3101 = vmatpush1.msra.mxu0 0.0
  %3102 = vmatprep.subr.mxu0 0.0
  %3103 = vmatpush1.msra.mxu0 0.0
  %3104 = vmatprep.subr.mxu0 0.0
  %3105 = vmatpush1.msra.mxu0 0.0
  %3106 = vmatprep.subr.mxu0 0.0
  %3107 = vmatpush1.msra.mxu0 0.0
  %3108 = vmatprep.subr.mxu0 0.0
  %3109 = vmatpush1.msra.mxu0 0.0
  %3110 = vmatprep.subr.mxu0 0.0
  %3111 = vmatpush1.msra.mxu0 0.0
  %3112 = vmatprep.mubr.f32.mxu0 0.0
  %3113 = vmatmul.mubr.f32.gmra.mrb[0].mxu0 %v3046
  %v3114 = vpop.f32.mrb[0].mxu0
  %v3115 = vadd.f32 0.0, %v3114
  %v3116 = vpop.f32.mrb[0].mxu0
  %3117 = vdwg.mxu0
  %v3119 = vsel %vm3021, %v3026, 0
  %3121 = vmatprep.subr.mxu0 0.0
  %3122 = vmatpush1.msra.mxu0 %v3027
  %3123 = vmatprep.subr.mxu0 0.0
  %3124 = vmatpush1.msra.mxu0 %v3028
  %3125 = vmatprep.subr.mxu0 0.0
  %3126 = vmatpush1.msra.mxu0 %v3029
  %3127 = vmatprep.subr.mxu0 0.0
  %3128 = vmatpush1.msra.mxu0 %v3030
  %3129 = vmatprep.subr.mxu0 0.0
  %3130 = vmatpush1.msra.mxu0 %v3031
  %3131 = vmatprep.subr.mxu0 0.0
  %3132 = vmatpush1.msra.mxu0 %v3032
  %3133 = vmatprep.subr.mxu0 0.0
  %3134 = vmatpush1.msra.mxu0 %v3033
  %3135 = vmatprep.subr.mxu0 0.0
  %3136 = vmatpush1.msra.mxu0 %v3034
  %3137 = vmatprep.subr.mxu0 0.0
  %3138 = vmatpush1.msra.mxu0 0.0
  %3139 = vmatprep.subr.mxu0 0.0
  %3140 = vmatpush1.msra.mxu0 0.0
  %3141 = vmatprep.subr.mxu0 0.0
  %3142 = vmatpush1.msra.mxu0 0.0
  %3143 = vmatprep.subr.mxu0 0.0
  %3144 = vmatpush1.msra.mxu0 0.0
  %3145 = vmatprep.subr.mxu0 0.0
  %3146 = vmatpush1.msra.mxu0 0.0
  %3147 = vmatprep.subr.mxu0 0.0
  %3148 = vmatpush1.msra.mxu0 0.0
  %3149 = vmatprep.subr.mxu0 0.0
  %3150 = vmatpush1.msra.mxu0 0.0
  %3151 = vmatprep.subr.mxu0 0.0
  %3152 = vmatpush1.msra.mxu0 0.0
  %3153 = vmatprep.subr.mxu0 0.0
  %3154 = vmatpush1.msra.mxu0 0.0
  %3155 = vmatprep.subr.mxu0 0.0
  %3156 = vmatpush1.msra.mxu0 0.0
  %3157 = vmatprep.subr.mxu0 0.0
  %3158 = vmatpush1.msra.mxu0 0.0
  %3159 = vmatprep.subr.mxu0 0.0
  %3160 = vmatpush1.msra.mxu0 0.0
  %3161 = vmatprep.subr.mxu0 0.0
  %3162 = vmatpush1.msra.mxu0 0.0
  %3163 = vmatprep.subr.mxu0 0.0
  %3164 = vmatpush1.msra.mxu0 0.0
  %3165 = vmatprep.subr.mxu0 0.0
  %3166 = vmatpush1.msra.mxu0 0.0
  %3167 = vmatprep.subr.mxu0 0.0
  %3168 = vmatpush1.msra.mxu0 0.0
  %3169 = vmatprep.subr.mxu0 0.0
  %3170 = vmatpush1.msra.mxu0 0.0
  %3171 = vmatprep.subr.mxu0 0.0
  %3172 = vmatpush1.msra.mxu0 0.0
  %3173 = vmatprep.subr.mxu0 0.0
  %3174 = vmatpush1.msra.mxu0 0.0
  %3175 = vmatprep.subr.mxu0 0.0
  %3176 = vmatpush1.msra.mxu0 0.0
  %3177 = vmatprep.subr.mxu0 0.0
  %3178 = vmatpush1.msra.mxu0 0.0
  %3179 = vmatprep.subr.mxu0 0.0
  %3180 = vmatpush1.msra.mxu0 0.0
  %3181 = vmatprep.subr.mxu0 0.0
  %3182 = vmatpush1.msra.mxu0 0.0
  %3183 = vmatprep.subr.mxu0 0.0
  %3184 = vmatpush1.msra.mxu0 0.0
  %3185 = vmatprep.mubr.f32.mxu0 0.0
  %3186 = vmatmul.mubr.f32.gmra.mrb[0].mxu0 %v3119
  %v3187 = vpop.f32.mrb[0].mxu0
  %v3188 = vadd.f32 %v3115, %v3187
  %v3189 = vpop.f32.mrb[0].mxu0
  %3190 = vdwg.mxu0
  %v3191 = vld [vmem:[#allocation3 + $0x4] sm:$0x3]
  %s3192 = scalar_lea.vmem %s6, 128
  %v3193 = vld [vmem:[%s3192] sm:$0xff]
  %v3194 = vld [vmem:[%s3192 + $0x8] sm:$0xff]
  %v3195 = vld [vmem:[%s3192 + $0x10] sm:$0xff]
  %v3196 = vld [vmem:[%s3192 + $0x18] sm:$0xff]
  %v3197 = vld [vmem:[%s3192 + $0x20] sm:$0xff]
  %v3198 = vld [vmem:[%s3192 + $0x28] sm:$0xff]
  %v3199 = vld [vmem:[%s3192 + $0x30] sm:$0xff]
  %v3200 = vld [vmem:[%s3192 + $0x38] sm:$0xff]
  %v3202 = vsel %vm3021, %v3191, 0
  %3204 = vmatprep.subr.mxu0 0.0
  %3205 = vmatpush1.msra.mxu0 %v3193
  %3206 = vmatprep.subr.mxu0 0.0
  %3207 = vmatpush1.msra.mxu0 %v3194
  %3208 = vmatprep.subr.mxu0 0.0
  %3209 = vmatpush1.msra.mxu0 %v3195
  %3210 = vmatprep.subr.mxu0 0.0
  %3211 = vmatpush1.msra.mxu0 %v3196
  %3212 = vmatprep.subr.mxu0 0.0
  %3213 = vmatpush1.msra.mxu0 %v3197
  %3214 = vmatprep.subr.mxu0 0.0
  %3215 = vmatpush1.msra.mxu0 %v3198
  %3216 = vmatprep.subr.mxu0 0.0
  %3217 = vmatpush1.msra.mxu0 %v3199
  %3218 = vmatprep.subr.mxu0 0.0
  %3219 = vmatpush1.msra.mxu0 %v3200
  %3220 = vmatprep.subr.mxu0 0.0
  %3221 = vmatpush1.msra.mxu0 0.0
  %3222 = vmatprep.subr.mxu0 0.0
  %3223 = vmatpush1.msra.mxu0 0.0
  %3224 = vmatprep.subr.mxu0 0.0
  %3225 = vmatpush1.msra.mxu0 0.0
  %3226 = vmatprep.subr.mxu0 0.0
  %3227 = vmatpush1.msra.mxu0 0.0
  %3228 = vmatprep.subr.mxu0 0.0
  %3229 = vmatpush1.msra.mxu0 0.0
  %3230 = vmatprep.subr.mxu0 0.0
  %3231 = vmatpush1.msra.mxu0 0.0
  %3232 = vmatprep.subr.mxu0 0.0
  %3233 = vmatpush1.msra.mxu0 0.0
  %3234 = vmatprep.subr.mxu0 0.0
  %3235 = vmatpush1.msra.mxu0 0.0
  %3236 = vmatprep.subr.mxu0 0.0
  %3237 = vmatpush1.msra.mxu0 0.0
  %3238 = vmatprep.subr.mxu0 0.0
  %3239 = vmatpush1.msra.mxu0 0.0
  %3240 = vmatprep.subr.mxu0 0.0
  %3241 = vmatpush1.msra.mxu0 0.0
  %3242 = vmatprep.subr.mxu0 0.0
  %3243 = vmatpush1.msra.mxu0 0.0
  %3244 = vmatprep.subr.mxu0 0.0
  %3245 = vmatpush1.msra.mxu0 0.0
  %3246 = vmatprep.subr.mxu0 0.0
  %3247 = vmatpush1.msra.mxu0 0.0
  %3248 = vmatprep.subr.mxu0 0.0
  %3249 = vmatpush1.msra.mxu0 0.0
  %3250 = vmatprep.subr.mxu0 0.0
  %3251 = vmatpush1.msra.mxu0 0.0
  %3252 = vmatprep.subr.mxu0 0.0
  %3253 = vmatpush1.msra.mxu0 0.0
  %3254 = vmatprep.subr.mxu0 0.0
  %3255 = vmatpush1.msra.mxu0 0.0
  %3256 = vmatprep.subr.mxu0 0.0
  %3257 = vmatpush1.msra.mxu0 0.0
  %3258 = vmatprep.subr.mxu0 0.0
  %3259 = vmatpush1.msra.mxu0 0.0
  %3260 = vmatprep.subr.mxu0 0.0
  %3261 = vmatpush1.msra.mxu0 0.0
  %3262 = vmatprep.subr.mxu0 0.0
  %3263 = vmatpush1.msra.mxu0 0.0
  %3264 = vmatprep.subr.mxu0 0.0
  %3265 = vmatpush1.msra.mxu0 0.0
  %3266 = vmatprep.subr.mxu0 0.0
  %3267 = vmatpush1.msra.mxu0 0.0
  %3268 = vmatprep.mubr.f32.mxu0 0.0
  %3269 = vmatmul.mubr.f32.gmra.mrb[0].mxu0 %v3202
  %v3270 = vpop.f32.mrb[0].mxu0
  %v3271 = vadd.f32 0.0, %v3270
  %v3272 = vpop.f32.mrb[0].mxu0
  %3273 = vdwg.mxu0
  %v3274 = vadd.f32 %v3188, %v3271
  %v3275 = vld [vmem:[#allocation3 + $0x6] sm:$0x3]
  %s3276 = scalar_lea.vmem %s6, 192
  %v3277 = vld [vmem:[%s3276] sm:$0xff]
  %v3278 = vld [vmem:[%s3276 + $0x8] sm:$0xff]
  %v3279 = vld [vmem:[%s3276 + $0x10] sm:$0xff]
  %v3280 = vld [vmem:[%s3276 + $0x18] sm:$0xff]
  %v3281 = vld [vmem:[%s3276 + $0x20] sm:$0xff]
  %v3282 = vld [vmem:[%s3276 + $0x28] sm:$0xff]
  %v3283 = vld [vmem:[%s3276 + $0x30] sm:$0xff]
  %v3284 = vld [vmem:[%s3276 + $0x38] sm:$0xff]
  %v3286 = vsel %vm3021, %v3275, 0
  %3288 = vmatprep.subr.mxu0 0.0
  %3289 = vmatpush1.msra.mxu0 %v3277
  %3290 = vmatprep.subr.mxu0 0.0
  %3291 = vmatpush1.msra.mxu0 %v3278
  %3292 = vmatprep.subr.mxu0 0.0
  %3293 = vmatpush1.msra.mxu0 %v3279
  %3294 = vmatprep.subr.mxu0 0.0
  %3295 = vmatpush1.msra.mxu0 %v3280
  %3296 = vmatprep.subr.mxu0 0.0
  %3297 = vmatpush1.msra.mxu0 %v3281
  %3298 = vmatprep.subr.mxu0 0.0
  %3299 = vmatpush1.msra.mxu0 %v3282
  %3300 = vmatprep.subr.mxu0 0.0
  %3301 = vmatpush1.msra.mxu0 %v3283
  %3302 = vmatprep.subr.mxu0 0.0
  %3303 = vmatpush1.msra.mxu0 %v3284
  %3304 = vmatprep.subr.mxu0 0.0
  %3305 = vmatpush1.msra.mxu0 0.0
  %3306 = vmatprep.subr.mxu0 0.0
  %3307 = vmatpush1.msra.mxu0 0.0
  %3308 = vmatprep.subr.mxu0 0.0
  %3309 = vmatpush1.msra.mxu0 0.0
  %3310 = vmatprep.subr.mxu0 0.0
  %3311 = vmatpush1.msra.mxu0 0.0
  %3312 = vmatprep.subr.mxu0 0.0
  %3313 = vmatpush1.msra.mxu0 0.0
  %3314 = vmatprep.subr.mxu0 0.0
  %3315 = vmatpush1.msra.mxu0 0.0
  %3316 = vmatprep.subr.mxu0 0.0
  %3317 = vmatpush1.msra.mxu0 0.0
  %3318 = vmatprep.subr.mxu0 0.0
  %3319 = vmatpush1.msra.mxu0 0.0
  %3320 = vmatprep.subr.mxu0 0.0
  %3321 = vmatpush1.msra.mxu0 0.0
  %3322 = vmatprep.subr.mxu0 0.0
  %3323 = vmatpush1.msra.mxu0 0.0
  %3324 = vmatprep.subr.mxu0 0.0
  %3325 = vmatpush1.msra.mxu0 0.0
  %3326 = vmatprep.subr.mxu0 0.0
  %3327 = vmatpush1.msra.mxu0 0.0
  %3328 = vmatprep.subr.mxu0 0.0
  %3329 = vmatpush1.msra.mxu0 0.0
  %3330 = vmatprep.subr.mxu0 0.0
  %3331 = vmatpush1.msra.mxu0 0.0
  %3332 = vmatprep.subr.mxu0 0.0
  %3333 = vmatpush1.msra.mxu0 0.0
  %3334 = vmatprep.subr.mxu0 0.0
  %3335 = vmatpush1.msra.mxu0 0.0
  %3336 = vmatprep.subr.mxu0 0.0
  %3337 = vmatpush1.msra.mxu0 0.0
  %3338 = vmatprep.subr.mxu0 0.0
  %3339 = vmatpush1.msra.mxu0 0.0
  %3340 = vmatprep.subr.mxu0 0.0
  %3341 = vmatpush1.msra.mxu0 0.0
  %3342 = vmatprep.subr.mxu0 0.0
  %3343 = vmatpush1.msra.mxu0 0.0
  %3344 = vmatprep.subr.mxu0 0.0
  %3345 = vmatpush1.msra.mxu0 0.0
  %3346 = vmatprep.subr.mxu0 0.0
  %3347 = vmatpush1.msra.mxu0 0.0
  %3348 = vmatprep.subr.mxu0 0.0
  %3349 = vmatpush1.msra.mxu0 0.0
  %3350 = vmatprep.subr.mxu0 0.0
  %3351 = vmatpush1.msra.mxu0 0.0
  %3352 = vmatprep.mubr.f32.mxu0 0.0
  %3353 = vmatmul.mubr.f32.gmra.mrb[0].mxu0 %v3286
  %v3354 = vpop.f32.mrb[0].mxu0
  %v3355 = vadd.f32 0.0, %v3354
  %v3356 = vpop.f32.mrb[0].mxu0
  %3357 = vdwg.mxu0
  %v3358 = vadd.f32 %v3274, %v3355
  %v3359 = vld [vmem:[#allocation3 + $0x8] sm:$0x3]
  %s3360 = scalar_lea.vmem %s6, 256
  %v3361 = vld [vmem:[%s3360] sm:$0xff]
  %v3362 = vld [vmem:[%s3360 + $0x8] sm:$0xff]
  %v3363 = vld [vmem:[%s3360 + $0x10] sm:$0xff]
  %v3364 = vld [vmem:[%s3360 + $0x18] sm:$0xff]
  %v3365 = vld [vmem:[%s3360 + $0x20] sm:$0xff]
  %v3366 = vld [vmem:[%s3360 + $0x28] sm:$0xff]
  %v3367 = vld [vmem:[%s3360 + $0x30] sm:$0xff]
  %v3368 = vld [vmem:[%s3360 + $0x38] sm:$0xff]
  %v3370 = vsel %vm3021, %v3359, 0
  %3372 = vmatprep.subr.mxu0 0.0
  %3373 = vmatpush1.msra.mxu0 %v3361
  %3374 = vmatprep.subr.mxu0 0.0
  %3375 = vmatpush1.msra.mxu0 %v3362
  %3376 = vmatprep.subr.mxu0 0.0
  %3377 = vmatpush1.msra.mxu0 %v3363
  %3378 = vmatprep.subr.mxu0 0.0
  %3379 = vmatpush1.msra.mxu0 %v3364
  %3380 = vmatprep.subr.mxu0 0.0
  %3381 = vmatpush1.msra.mxu0 %v3365
  %3382 = vmatprep.subr.mxu0 0.0
  %3383 = vmatpush1.msra.mxu0 %v3366
  %3384 = vmatprep.subr.mxu0 0.0
  %3385 = vmatpush1.msra.mxu0 %v3367
  %3386 = vmatprep.subr.mxu0 0.0
  %3387 = vmatpush1.msra.mxu0 %v3368
  %3388 = vmatprep.subr.mxu0 0.0
  %3389 = vmatpush1.msra.mxu0 0.0
  %3390 = vmatprep.subr.mxu0 0.0
  %3391 = vmatpush1.msra.mxu0 0.0
  %3392 = vmatprep.subr.mxu0 0.0
  %3393 = vmatpush1.msra.mxu0 0.0
  %3394 = vmatprep.subr.mxu0 0.0
  %3395 = vmatpush1.msra.mxu0 0.0
  %3396 = vmatprep.subr.mxu0 0.0
  %3397 = vmatpush1.msra.mxu0 0.0
  %3398 = vmatprep.subr.mxu0 0.0
  %3399 = vmatpush1.msra.mxu0 0.0
  %3400 = vmatprep.subr.mxu0 0.0
  %3401 = vmatpush1.msra.mxu0 0.0
  %3402 = vmatprep.subr.mxu0 0.0
  %3403 = vmatpush1.msra.mxu0 0.0
  %3404 = vmatprep.subr.mxu0 0.0
  %3405 = vmatpush1.msra.mxu0 0.0
  %3406 = vmatprep.subr.mxu0 0.0
  %3407 = vmatpush1.msra.mxu0 0.0
  %3408 = vmatprep.subr.mxu0 0.0
  %3409 = vmatpush1.msra.mxu0 0.0
  %3410 = vmatprep.subr.mxu0 0.0
  %3411 = vmatpush1.msra.mxu0 0.0
  %3412 = vmatprep.subr.mxu0 0.0
  %3413 = vmatpush1.msra.mxu0 0.0
  %3414 = vmatprep.subr.mxu0 0.0
  %3415 = vmatpush1.msra.mxu0 0.0
  %3416 = vmatprep.subr.mxu0 0.0
  %3417 = vmatpush1.msra.mxu0 0.0
  %3418 = vmatprep.subr.mxu0 0.0
  %3419 = vmatpush1.msra.mxu0 0.0
  %3420 = vmatprep.subr.mxu0 0.0
  %3421 = vmatpush1.msra.mxu0 0.0
  %3422 = vmatprep.subr.mxu0 0.0
  %3423 = vmatpush1.msra.mxu0 0.0
  %3424 = vmatprep.subr.mxu0 0.0
  %3425 = vmatpush1.msra.mxu0 0.0
  %3426 = vmatprep.subr.mxu0 0.0
  %3427 = vmatpush1.msra.mxu0 0.0
  %3428 = vmatprep.subr.mxu0 0.0
  %3429 = vmatpush1.msra.mxu0 0.0
  %3430 = vmatprep.subr.mxu0 0.0
  %3431 = vmatpush1.msra.mxu0 0.0
  %3432 = vmatprep.subr.mxu0 0.0
  %3433 = vmatpush1.msra.mxu0 0.0
  %3434 = vmatprep.subr.mxu0 0.0
  %3435 = vmatpush1.msra.mxu0 0.0
  %3436 = vmatprep.mubr.f32.mxu0 0.0
  %3437 = vmatmul.mubr.f32.gmra.mrb[0].mxu0 %v3370
  %v3438 = vpop.f32.mrb[0].mxu0
  %v3439 = vadd.f32 0.0, %v3438
  %v3440 = vpop.f32.mrb[0].mxu0
  %3441 = vdwg.mxu0
  %v3442 = vadd.f32 %v3358, %v3439
  %v3443 = vld [vmem:[#allocation3 + $0xa] sm:$0x3]
  %s3444 = scalar_lea.vmem %s6, 320
  %v3445 = vld [vmem:[%s3444] sm:$0xff]
  %v3446 = vld [vmem:[%s3444 + $0x8] sm:$0xff]
  %v3447 = vld [vmem:[%s3444 + $0x10] sm:$0xff]
  %v3448 = vld [vmem:[%s3444 + $0x18] sm:$0xff]
  %v3449 = vld [vmem:[%s3444 + $0x20] sm:$0xff]
  %v3450 = vld [vmem:[%s3444 + $0x28] sm:$0xff]
  %v3451 = vld [vmem:[%s3444 + $0x30] sm:$0xff]
  %v3452 = vld [vmem:[%s3444 + $0x38] sm:$0xff]
  %v3454 = vsel %vm3021, %v3443, 0
  %3456 = vmatprep.subr.mxu0 0.0
  %3457 = vmatpush1.msra.mxu0 %v3445
  %3458 = vmatprep.subr.mxu0 0.0
  %3459 = vmatpush1.msra.mxu0 %v3446
  %3460 = vmatprep.subr.mxu0 0.0
  %3461 = vmatpush1.msra.mxu0 %v3447
  %3462 = vmatprep.subr.mxu0 0.0
  %3463 = vmatpush1.msra.mxu0 %v3448
  %3464 = vmatprep.subr.mxu0 0.0
  %3465 = vmatpush1.msra.mxu0 %v3449
  %3466 = vmatprep.subr.mxu0 0.0
  %3467 = vmatpush1.msra.mxu0 %v3450
  %3468 = vmatprep.subr.mxu0 0.0
  %3469 = vmatpush1.msra.mxu0 %v3451
  %3470 = vmatprep.subr.mxu0 0.0
  %3471 = vmatpush1.msra.mxu0 %v3452
  %3472 = vmatprep.subr.mxu0 0.0
  %3473 = vmatpush1.msra.mxu0 0.0
  %3474 = vmatprep.subr.mxu0 0.0
  %3475 = vmatpush1.msra.mxu0 0.0
  %3476 = vmatprep.subr.mxu0 0.0
  %3477 = vmatpush1.msra.mxu0 0.0
  %3478 = vmatprep.subr.mxu0 0.0
  %3479 = vmatpush1.msra.mxu0 0.0
  %3480 = vmatprep.subr.mxu0 0.0
  %3481 = vmatpush1.msra.mxu0 0.0
  %3482 = vmatprep.subr.mxu0 0.0
  %3483 = vmatpush1.msra.mxu0 0.0
  %3484 = vmatprep.subr.mxu0 0.0
  %3485 = vmatpush1.msra.mxu0 0.0
  %3486 = vmatprep.subr.mxu0 0.0
  %3487 = vmatpush1.msra.mxu0 0.0
  %3488 = vmatprep.subr.mxu0 0.0
  %3489 = vmatpush1.msra.mxu0 0.0
  %3490 = vmatprep.subr.mxu0 0.0
  %3491 = vmatpush1.msra.mxu0 0.0
  %3492 = vmatprep.subr.mxu0 0.0
  %3493 = vmatpush1.msra.mxu0 0.0
  %3494 = vmatprep.subr.mxu0 0.0
  %3495 = vmatpush1.msra.mxu0 0.0
  %3496 = vmatprep.subr.mxu0 0.0
  %3497 = vmatpush1.msra.mxu0 0.0
  %3498 = vmatprep.subr.mxu0 0.0
  %3499 = vmatpush1.msra.mxu0 0.0
  %3500 = vmatprep.subr.mxu0 0.0
  %3501 = vmatpush1.msra.mxu0 0.0
  %3502 = vmatprep.subr.mxu0 0.0
  %3503 = vmatpush1.msra.mxu0 0.0
  %3504 = vmatprep.subr.mxu0 0.0
  %3505 = vmatpush1.msra.mxu0 0.0
  %3506 = vmatprep.subr.mxu0 0.0
  %3507 = vmatpush1.msra.mxu0 0.0
  %3508 = vmatprep.subr.mxu0 0.0
  %3509 = vmatpush1.msra.mxu0 0.0
  %3510 = vmatprep.subr.mxu0 0.0
  %3511 = vmatpush1.msra.mxu0 0.0
  %3512 = vmatprep.subr.mxu0 0.0
  %3513 = vmatpush1.msra.mxu0 0.0
  %3514 = vmatprep.subr.mxu0 0.0
  %3515 = vmatpush1.msra.mxu0 0.0
  %3516 = vmatprep.subr.mxu0 0.0
  %3517 = vmatpush1.msra.mxu0 0.0
  %3518 = vmatprep.subr.mxu0 0.0
  %3519 = vmatpush1.msra.mxu0 0.0
  %3520 = vmatprep.mubr.f32.mxu0 0.0
  %3521 = vmatmul.mubr.f32.gmra.mrb[0].mxu0 %v3454
  %v3522 = vpop.f32.mrb[0].mxu0
  %v3523 = vadd.f32 0.0, %v3522
  %v3524 = vpop.f32.mrb[0].mxu0
  %3525 = vdwg.mxu0
  %v3526 = vadd.f32 %v3442, %v3523
  %v3527 = vld [vmem:[#allocation3 + $0xc] sm:$0x3]
  %s3528 = scalar_lea.vmem %s6, 384
  %v3529 = vld [vmem:[%s3528] sm:$0xff]
  %v3530 = vld [vmem:[%s3528 + $0x8] sm:$0xff]
  %v3531 = vld [vmem:[%s3528 + $0x10] sm:$0xff]
  %v3532 = vld [vmem:[%s3528 + $0x18] sm:$0xff]
  %v3533 = vld [vmem:[%s3528 + $0x20] sm:$0xff]
  %v3534 = vld [vmem:[%s3528 + $0x28] sm:$0xff]
  %v3535 = vld [vmem:[%s3528 + $0x30] sm:$0xff]
  %v3536 = vld [vmem:[%s3528 + $0x38] sm:$0xff]
  %v3538 = vsel %vm3021, %v3527, 0
  %3540 = vmatprep.subr.mxu0 0.0
  %3541 = vmatpush1.msra.mxu0 %v3529
  %3542 = vmatprep.subr.mxu0 0.0
  %3543 = vmatpush1.msra.mxu0 %v3530
  %3544 = vmatprep.subr.mxu0 0.0
  %3545 = vmatpush1.msra.mxu0 %v3531
  %3546 = vmatprep.subr.mxu0 0.0
  %3547 = vmatpush1.msra.mxu0 %v3532
  %3548 = vmatprep.subr.mxu0 0.0
  %3549 = vmatpush1.msra.mxu0 %v3533
  %3550 = vmatprep.subr.mxu0 0.0
  %3551 = vmatpush1.msra.mxu0 %v3534
  %3552 = vmatprep.subr.mxu0 0.0
  %3553 = vmatpush1.msra.mxu0 %v3535
  %3554 = vmatprep.subr.mxu0 0.0
  %3555 = vmatpush1.msra.mxu0 %v3536
  %3556 = vmatprep.subr.mxu0 0.0
  %3557 = vmatpush1.msra.mxu0 0.0
  %3558 = vmatprep.subr.mxu0 0.0
  %3559 = vmatpush1.msra.mxu0 0.0
  %3560 = vmatprep.subr.mxu0 0.0
  %3561 = vmatpush1.msra.mxu0 0.0
  %3562 = vmatprep.subr.mxu0 0.0
  %3563 = vmatpush1.msra.mxu0 0.0
  %3564 = vmatprep.subr.mxu0 0.0
  %3565 = vmatpush1.msra.mxu0 0.0
  %3566 = vmatprep.subr.mxu0 0.0
  %3567 = vmatpush1.msra.mxu0 0.0
  %3568 = vmatprep.subr.mxu0 0.0
  %3569 = vmatpush1.msra.mxu0 0.0
  %3570 = vmatprep.subr.mxu0 0.0
  %3571 = vmatpush1.msra.mxu0 0.0
  %3572 = vmatprep.subr.mxu0 0.0
  %3573 = vmatpush1.msra.mxu0 0.0
  %3574 = vmatprep.subr.mxu0 0.0
  %3575 = vmatpush1.msra.mxu0 0.0
  %3576 = vmatprep.subr.mxu0 0.0
  %3577 = vmatpush1.msra.mxu0 0.0
  %3578 = vmatprep.subr.mxu0 0.0
  %3579 = vmatpush1.msra.mxu0 0.0
  %3580 = vmatprep.subr.mxu0 0.0
  %3581 = vmatpush1.msra.mxu0 0.0
  %3582 = vmatprep.subr.mxu0 0.0
  %3583 = vmatpush1.msra.mxu0 0.0
  %3584 = vmatprep.subr.mxu0 0.0
  %3585 = vmatpush1.msra.mxu0 0.0
  %3586 = vmatprep.subr.mxu0 0.0
  %3587 = vmatpush1.msra.mxu0 0.0
  %3588 = vmatprep.subr.mxu0 0.0
  %3589 = vmatpush1.msra.mxu0 0.0
  %3590 = vmatprep.subr.mxu0 0.0
  %3591 = vmatpush1.msra.mxu0 0.0
  %3592 = vmatprep.subr.mxu0 0.0
  %3593 = vmatpush1.msra.mxu0 0.0
  %3594 = vmatprep.subr.mxu0 0.0
  %3595 = vmatpush1.msra.mxu0 0.0
  %3596 = vmatprep.subr.mxu0 0.0
  %3597 = vmatpush1.msra.mxu0 0.0
  %3598 = vmatprep.subr.mxu0 0.0
  %3599 = vmatpush1.msra.mxu0 0.0
  %3600 = vmatprep.subr.mxu0 0.0
  %3601 = vmatpush1.msra.mxu0 0.0
  %3602 = vmatprep.subr.mxu0 0.0
  %3603 = vmatpush1.msra.mxu0 0.0
  %3604 = vmatprep.mubr.f32.mxu0 0.0
  %3605 = vmatmul.mubr.f32.gmra.mrb[0].mxu0 %v3538
  %v3606 = vpop.f32.mrb[0].mxu0
  %v3607 = vadd.f32 0.0, %v3606
  %v3608 = vpop.f32.mrb[0].mxu0
  %3609 = vdwg.mxu0
  %v3610 = vadd.f32 %v3526, %v3607
  %v3611 = vld [vmem:[#allocation3 + $0xe] sm:$0x3]
  %s3612 = scalar_lea.vmem %s6, 448
  %v3613 = vld [vmem:[%s3612] sm:$0xff]
  %v3614 = vld [vmem:[%s3612 + $0x8] sm:$0xff]
  %v3615 = vld [vmem:[%s3612 + $0x10] sm:$0xff]
  %v3616 = vld [vmem:[%s3612 + $0x18] sm:$0xff]
  %v3617 = vld [vmem:[%s3612 + $0x20] sm:$0xff]
  %v3618 = vld [vmem:[%s3612 + $0x28] sm:$0xff]
  %v3619 = vld [vmem:[%s3612 + $0x30] sm:$0xff]
  %v3620 = vld [vmem:[%s3612 + $0x38] sm:$0xff]
  %v3622 = vsel %vm3021, %v3611, 0
  %3624 = vmatprep.subr.mxu0 0.0
  %3625 = vmatpush1.msra.mxu0 %v3613
  %3626 = vmatprep.subr.mxu0 0.0
  %3627 = vmatpush1.msra.mxu0 %v3614
  %3628 = vmatprep.subr.mxu0 0.0
  %3629 = vmatpush1.msra.mxu0 %v3615
  %3630 = vmatprep.subr.mxu0 0.0
  %3631 = vmatpush1.msra.mxu0 %v3616
  %3632 = vmatprep.subr.mxu0 0.0
  %3633 = vmatpush1.msra.mxu0 %v3617
  %3634 = vmatprep.subr.mxu0 0.0
  %3635 = vmatpush1.msra.mxu0 %v3618
  %3636 = vmatprep.subr.mxu0 0.0
  %3637 = vmatpush1.msra.mxu0 %v3619
  %3638 = vmatprep.subr.mxu0 0.0
  %3639 = vmatpush1.msra.mxu0 %v3620
  %3640 = vmatprep.subr.mxu0 0.0
  %3641 = vmatpush1.msra.mxu0 0.0
  %3642 = vmatprep.subr.mxu0 0.0
  %3643 = vmatpush1.msra.mxu0 0.0
  %3644 = vmatprep.subr.mxu0 0.0
  %3645 = vmatpush1.msra.mxu0 0.0
  %3646 = vmatprep.subr.mxu0 0.0
  %3647 = vmatpush1.msra.mxu0 0.0
  %3648 = vmatprep.subr.mxu0 0.0
  %3649 = vmatpush1.msra.mxu0 0.0
  %3650 = vmatprep.subr.mxu0 0.0
  %3651 = vmatpush1.msra.mxu0 0.0
  %3652 = vmatprep.subr.mxu0 0.0
  %3653 = vmatpush1.msra.mxu0 0.0
  %3654 = vmatprep.subr.mxu0 0.0
  %3655 = vmatpush1.msra.mxu0 0.0
  %3656 = vmatprep.subr.mxu0 0.0
  %3657 = vmatpush1.msra.mxu0 0.0
  %3658 = vmatprep.subr.mxu0 0.0
  %3659 = vmatpush1.msra.mxu0 0.0
  %3660 = vmatprep.subr.mxu0 0.0
  %3661 = vmatpush1.msra.mxu0 0.0
  %3662 = vmatprep.subr.mxu0 0.0
  %3663 = vmatpush1.msra.mxu0 0.0
  %3664 = vmatprep.subr.mxu0 0.0
  %3665 = vmatpush1.msra.mxu0 0.0
  %3666 = vmatprep.subr.mxu0 0.0
  %3667 = vmatpush1.msra.mxu0 0.0
  %3668 = vmatprep.subr.mxu0 0.0
  %3669 = vmatpush1.msra.mxu0 0.0
  %3670 = vmatprep.subr.mxu0 0.0
  %3671 = vmatpush1.msra.mxu0 0.0
  %3672 = vmatprep.subr.mxu0 0.0
  %3673 = vmatpush1.msra.mxu0 0.0
  %3674 = vmatprep.subr.mxu0 0.0
  %3675 = vmatpush1.msra.mxu0 0.0
  %3676 = vmatprep.subr.mxu0 0.0
  %3677 = vmatpush1.msra.mxu0 0.0
  %3678 = vmatprep.subr.mxu0 0.0
  %3679 = vmatpush1.msra.mxu0 0.0
  %3680 = vmatprep.subr.mxu0 0.0
  %3681 = vmatpush1.msra.mxu0 0.0
  %3682 = vmatprep.subr.mxu0 0.0
  %3683 = vmatpush1.msra.mxu0 0.0
  %3684 = vmatprep.subr.mxu0 0.0
  %3685 = vmatpush1.msra.mxu0 0.0
  %3686 = vmatprep.subr.mxu0 0.0
  %3687 = vmatpush1.msra.mxu0 0.0
  %3688 = vmatprep.mubr.f32.mxu0 0.0
  %3689 = vmatmul.mubr.f32.gmra.mrb[0].mxu0 %v3622
  %v3690 = vpop.f32.mrb[0].mxu0
  %v3691 = vadd.f32 0.0, %v3690
  %v3692 = vpop.f32.mrb[0].mxu0
  %3693 = vdwg.mxu0
  %v3694 = vadd.f32 %v3610, %v3691
  %v3695 = vld [vmem:[#allocation3 + $0x10] sm:$0x3]
  %s3696 = scalar_lea.vmem %s6, 512
  %v3697 = vld [vmem:[%s3696] sm:$0xff]
  %v3698 = vld [vmem:[%s3696 + $0x8] sm:$0xff]
  %v3699 = vld [vmem:[%s3696 + $0x10] sm:$0xff]
  %v3700 = vld [vmem:[%s3696 + $0x18] sm:$0xff]
  %v3701 = vld [vmem:[%s3696 + $0x20] sm:$0xff]
  %v3702 = vld [vmem:[%s3696 + $0x28] sm:$0xff]
  %v3703 = vld [vmem:[%s3696 + $0x30] sm:$0xff]
  %v3704 = vld [vmem:[%s3696 + $0x38] sm:$0xff]
  %v3706 = vsel %vm3021, %v3695, 0
  %3708 = vmatprep.subr.mxu0 0.0
  %3709 = vmatpush1.msra.mxu0 %v3697
  %3710 = vmatprep.subr.mxu0 0.0
  %3711 = vmatpush1.msra.mxu0 %v3698
  %3712 = vmatprep.subr.mxu0 0.0
  %3713 = vmatpush1.msra.mxu0 %v3699
  %3714 = vmatprep.subr.mxu0 0.0
  %3715 = vmatpush1.msra.mxu0 %v3700
  %3716 = vmatprep.subr.mxu0 0.0
  %3717 = vmatpush1.msra.mxu0 %v3701
  %3718 = vmatprep.subr.mxu0 0.0
  %3719 = vmatpush1.msra.mxu0 %v3702
  %3720 = vmatprep.subr.mxu0 0.0
  %3721 = vmatpush1.msra.mxu0 %v3703
  %3722 = vmatprep.subr.mxu0 0.0
  %3723 = vmatpush1.msra.mxu0 %v3704
  %3724 = vmatprep.subr.mxu0 0.0
  %3725 = vmatpush1.msra.mxu0 0.0
  %3726 = vmatprep.subr.mxu0 0.0
  %3727 = vmatpush1.msra.mxu0 0.0
  %3728 = vmatprep.subr.mxu0 0.0
  %3729 = vmatpush1.msra.mxu0 0.0
  %3730 = vmatprep.subr.mxu0 0.0
  %3731 = vmatpush1.msra.mxu0 0.0
  %3732 = vmatprep.subr.mxu0 0.0
  %3733 = vmatpush1.msra.mxu0 0.0
  %3734 = vmatprep.subr.mxu0 0.0
  %3735 = vmatpush1.msra.mxu0 0.0
  %3736 = vmatprep.subr.mxu0 0.0
  %3737 = vmatpush1.msra.mxu0 0.0
  %3738 = vmatprep.subr.mxu0 0.0
  %3739 = vmatpush1.msra.mxu0 0.0
  %3740 = vmatprep.subr.mxu0 0.0
  %3741 = vmatpush1.msra.mxu0 0.0
  %3742 = vmatprep.subr.mxu0 0.0
  %3743 = vmatpush1.msra.mxu0 0.0
  %3744 = vmatprep.subr.mxu0 0.0
  %3745 = vmatpush1.msra.mxu0 0.0
  %3746 = vmatprep.subr.mxu0 0.0
  %3747 = vmatpush1.msra.mxu0 0.0
  %3748 = vmatprep.subr.mxu0 0.0
  %3749 = vmatpush1.msra.mxu0 0.0
  %3750 = vmatprep.subr.mxu0 0.0
  %3751 = vmatpush1.msra.mxu0 0.0
  %3752 = vmatprep.subr.mxu0 0.0
  %3753 = vmatpush1.msra.mxu0 0.0
  %3754 = vmatprep.subr.mxu0 0.0
  %3755 = vmatpush1.msra.mxu0 0.0
  %3756 = vmatprep.subr.mxu0 0.0
  %3757 = vmatpush1.msra.mxu0 0.0
  %3758 = vmatprep.subr.mxu0 0.0
  %3759 = vmatpush1.msra.mxu0 0.0
  %3760 = vmatprep.subr.mxu0 0.0
  %3761 = vmatpush1.msra.mxu0 0.0
  %3762 = vmatprep.subr.mxu0 0.0
  %3763 = vmatpush1.msra.mxu0 0.0
  %3764 = vmatprep.subr.mxu0 0.0
  %3765 = vmatpush1.msra.mxu0 0.0
  %3766 = vmatprep.subr.mxu0 0.0
  %3767 = vmatpush1.msra.mxu0 0.0
  %3768 = vmatprep.subr.mxu0 0.0
  %3769 = vmatpush1.msra.mxu0 0.0
  %3770 = vmatprep.subr.mxu0 0.0
  %3771 = vmatpush1.msra.mxu0 0.0
  %3772 = vmatprep.mubr.f32.mxu0 0.0
  %3773 = vmatmul.mubr.f32.gmra.mrb[0].mxu0 %v3706
  %v3774 = vpop.f32.mrb[0].mxu0
  %v3775 = vadd.f32 0.0, %v3774
  %v3776 = vpop.f32.mrb[0].mxu0
  %3777 = vdwg.mxu0
  %v3778 = vadd.f32 %v3694, %v3775
  %v3779 = vld [vmem:[#allocation3 + $0x12] sm:$0x3]
  %s3780 = scalar_lea.vmem %s6, 576
  %v3781 = vld [vmem:[%s3780] sm:$0xff]
  %v3782 = vld [vmem:[%s3780 + $0x8] sm:$0xff]
  %v3783 = vld [vmem:[%s3780 + $0x10] sm:$0xff]
  %v3784 = vld [vmem:[%s3780 + $0x18] sm:$0xff]
  %v3785 = vld [vmem:[%s3780 + $0x20] sm:$0xff]
  %v3786 = vld [vmem:[%s3780 + $0x28] sm:$0xff]
  %v3787 = vld [vmem:[%s3780 + $0x30] sm:$0xff]
  %v3788 = vld [vmem:[%s3780 + $0x38] sm:$0xff]
  %v3790 = vsel %vm3021, %v3779, 0
  %3792 = vmatprep.subr.mxu0 0.0
  %3793 = vmatpush1.msra.mxu0 %v3781
  %3794 = vmatprep.subr.mxu0 0.0
  %3795 = vmatpush1.msra.mxu0 %v3782
  %3796 = vmatprep.subr.mxu0 0.0
  %3797 = vmatpush1.msra.mxu0 %v3783
  %3798 = vmatprep.subr.mxu0 0.0
  %3799 = vmatpush1.msra.mxu0 %v3784
  %3800 = vmatprep.subr.mxu0 0.0
  %3801 = vmatpush1.msra.mxu0 %v3785
  %3802 = vmatprep.subr.mxu0 0.0
  %3803 = vmatpush1.msra.mxu0 %v3786
  %3804 = vmatprep.subr.mxu0 0.0
  %3805 = vmatpush1.msra.mxu0 %v3787
  %3806 = vmatprep.subr.mxu0 0.0
  %3807 = vmatpush1.msra.mxu0 %v3788
  %3808 = vmatprep.subr.mxu0 0.0
  %3809 = vmatpush1.msra.mxu0 0.0
  %3810 = vmatprep.subr.mxu0 0.0
  %3811 = vmatpush1.msra.mxu0 0.0
  %3812 = vmatprep.subr.mxu0 0.0
  %3813 = vmatpush1.msra.mxu0 0.0
  %3814 = vmatprep.subr.mxu0 0.0
  %3815 = vmatpush1.msra.mxu0 0.0
  %3816 = vmatprep.subr.mxu0 0.0
  %3817 = vmatpush1.msra.mxu0 0.0
  %3818 = vmatprep.subr.mxu0 0.0
  %3819 = vmatpush1.msra.mxu0 0.0
  %3820 = vmatprep.subr.mxu0 0.0
  %3821 = vmatpush1.msra.mxu0 0.0
  %3822 = vmatprep.subr.mxu0 0.0
  %3823 = vmatpush1.msra.mxu0 0.0
  %3824 = vmatprep.subr.mxu0 0.0
  %3825 = vmatpush1.msra.mxu0 0.0
  %3826 = vmatprep.subr.mxu0 0.0
  %3827 = vmatpush1.msra.mxu0 0.0
  %3828 = vmatprep.subr.mxu0 0.0
  %3829 = vmatpush1.msra.mxu0 0.0
  %3830 = vmatprep.subr.mxu0 0.0
  %3831 = vmatpush1.msra.mxu0 0.0
  %3832 = vmatprep.subr.mxu0 0.0
  %3833 = vmatpush1.msra.mxu0 0.0
  %3834 = vmatprep.subr.mxu0 0.0
  %3835 = vmatpush1.msra.mxu0 0.0
  %3836 = vmatprep.subr.mxu0 0.0
  %3837 = vmatpush1.msra.mxu0 0.0
  %3838 = vmatprep.subr.mxu0 0.0
  %3839 = vmatpush1.msra.mxu0 0.0
  %3840 = vmatprep.subr.mxu0 0.0
  %3841 = vmatpush1.msra.mxu0 0.0
  %3842 = vmatprep.subr.mxu0 0.0
  %3843 = vmatpush1.msra.mxu0 0.0
  %3844 = vmatprep.subr.mxu0 0.0
  %3845 = vmatpush1.msra.mxu0 0.0
  %3846 = vmatprep.subr.mxu0 0.0
  %3847 = vmatpush1.msra.mxu0 0.0
  %3848 = vmatprep.subr.mxu0 0.0
  %3849 = vmatpush1.msra.mxu0 0.0
  %3850 = vmatprep.subr.mxu0 0.0
  %3851 = vmatpush1.msra.mxu0 0.0
  %3852 = vmatprep.subr.mxu0 0.0
  %3853 = vmatpush1.msra.mxu0 0.0
  %3854 = vmatprep.subr.mxu0 0.0
  %3855 = vmatpush1.msra.mxu0 0.0
  %3856 = vmatprep.mubr.f32.mxu0 0.0
  %3857 = vmatmul.mubr.f32.gmra.mrb[0].mxu0 %v3790
  %v3858 = vpop.f32.mrb[0].mxu0
  %v3859 = vadd.f32 0.0, %v3858
  %v3860 = vpop.f32.mrb[0].mxu0
  %3861 = vdwg.mxu0
  %v3862 = vadd.f32 %v3778, %v3859
  %v3863 = vld [vmem:[#allocation3 + $0x14] sm:$0x3]
  %s3864 = scalar_lea.vmem %s6, 640
  %v3865 = vld [vmem:[%s3864] sm:$0xff]
  %v3866 = vld [vmem:[%s3864 + $0x8] sm:$0xff]
  %v3867 = vld [vmem:[%s3864 + $0x10] sm:$0xff]
  %v3868 = vld [vmem:[%s3864 + $0x18] sm:$0xff]
  %v3869 = vld [vmem:[%s3864 + $0x20] sm:$0xff]
  %v3870 = vld [vmem:[%s3864 + $0x28] sm:$0xff]
  %v3871 = vld [vmem:[%s3864 + $0x30] sm:$0xff]
  %v3872 = vld [vmem:[%s3864 + $0x38] sm:$0xff]
  %v3874 = vsel %vm3021, %v3863, 0
  %3876 = vmatprep.subr.mxu0 0.0
  %3877 = vmatpush1.msra.mxu0 %v3865
  %3878 = vmatprep.subr.mxu0 0.0
  %3879 = vmatpush1.msra.mxu0 %v3866
  %3880 = vmatprep.subr.mxu0 0.0
  %3881 = vmatpush1.msra.mxu0 %v3867
  %3882 = vmatprep.subr.mxu0 0.0
  %3883 = vmatpush1.msra.mxu0 %v3868
  %3884 = vmatprep.subr.mxu0 0.0
  %3885 = vmatpush1.msra.mxu0 %v3869
  %3886 = vmatprep.subr.mxu0 0.0
  %3887 = vmatpush1.msra.mxu0 %v3870
  %3888 = vmatprep.subr.mxu0 0.0
  %3889 = vmatpush1.msra.mxu0 %v3871
  %3890 = vmatprep.subr.mxu0 0.0
  %3891 = vmatpush1.msra.mxu0 %v3872
  %3892 = vmatprep.subr.mxu0 0.0
  %3893 = vmatpush1.msra.mxu0 0.0
  %3894 = vmatprep.subr.mxu0 0.0
  %3895 = vmatpush1.msra.mxu0 0.0
  %3896 = vmatprep.subr.mxu0 0.0
  %3897 = vmatpush1.msra.mxu0 0.0
  %3898 = vmatprep.subr.mxu0 0.0
  %3899 = vmatpush1.msra.mxu0 0.0
  %3900 = vmatprep.subr.mxu0 0.0
  %3901 = vmatpush1.msra.mxu0 0.0
  %3902 = vmatprep.subr.mxu0 0.0
  %3903 = vmatpush1.msra.mxu0 0.0
  %3904 = vmatprep.subr.mxu0 0.0
  %3905 = vmatpush1.msra.mxu0 0.0
  %3906 = vmatprep.subr.mxu0 0.0
  %3907 = vmatpush1.msra.mxu0 0.0
  %3908 = vmatprep.subr.mxu0 0.0
  %3909 = vmatpush1.msra.mxu0 0.0
  %3910 = vmatprep.subr.mxu0 0.0
  %3911 = vmatpush1.msra.mxu0 0.0
  %3912 = vmatprep.subr.mxu0 0.0
  %3913 = vmatpush1.msra.mxu0 0.0
  %3914 = vmatprep.subr.mxu0 0.0
  %3915 = vmatpush1.msra.mxu0 0.0
  %3916 = vmatprep.subr.mxu0 0.0
  %3917 = vmatpush1.msra.mxu0 0.0
  %3918 = vmatprep.subr.mxu0 0.0
  %3919 = vmatpush1.msra.mxu0 0.0
  %3920 = vmatprep.subr.mxu0 0.0
  %3921 = vmatpush1.msra.mxu0 0.0
  %3922 = vmatprep.subr.mxu0 0.0
  %3923 = vmatpush1.msra.mxu0 0.0
  %3924 = vmatprep.subr.mxu0 0.0
  %3925 = vmatpush1.msra.mxu0 0.0
  %3926 = vmatprep.subr.mxu0 0.0
  %3927 = vmatpush1.msra.mxu0 0.0
  %3928 = vmatprep.subr.mxu0 0.0
  %3929 = vmatpush1.msra.mxu0 0.0
  %3930 = vmatprep.subr.mxu0 0.0
  %3931 = vmatpush1.msra.mxu0 0.0
  %3932 = vmatprep.subr.mxu0 0.0
  %3933 = vmatpush1.msra.mxu0 0.0
  %3934 = vmatprep.subr.mxu0 0.0
  %3935 = vmatpush1.msra.mxu0 0.0
  %3936 = vmatprep.subr.mxu0 0.0
  %3937 = vmatpush1.msra.mxu0 0.0
  %3938 = vmatprep.subr.mxu0 0.0
  %3939 = vmatpush1.msra.mxu0 0.0
  %3940 = vmatprep.mubr.f32.mxu0 0.0
  %3941 = vmatmul.mubr.f32.gmra.mrb[0].mxu0 %v3874
  %v3942 = vpop.f32.mrb[0].mxu0
  %v3943 = vadd.f32 0.0, %v3942
  %v3944 = vpop.f32.mrb[0].mxu0
  %3945 = vdwg.mxu0
  %v3946 = vadd.f32 %v3862, %v3943
  %v3947 = vld [vmem:[#allocation3 + $0x16] sm:$0x3]
  %s3948 = scalar_lea.vmem %s6, 704
  %v3949 = vld [vmem:[%s3948] sm:$0xff]
  %v3950 = vld [vmem:[%s3948 + $0x8] sm:$0xff]
  %v3951 = vld [vmem:[%s3948 + $0x10] sm:$0xff]
  %v3952 = vld [vmem:[%s3948 + $0x18] sm:$0xff]
  %v3953 = vld [vmem:[%s3948 + $0x20] sm:$0xff]
  %v3954 = vld [vmem:[%s3948 + $0x28] sm:$0xff]
  %v3955 = vld [vmem:[%s3948 + $0x30] sm:$0xff]
  %v3956 = vld [vmem:[%s3948 + $0x38] sm:$0xff]
  %v3958 = vsel %vm3021, %v3947, 0
  %3960 = vmatprep.subr.mxu0 0.0
  %3961 = vmatpush1.msra.mxu0 %v3949
  %3962 = vmatprep.subr.mxu0 0.0
  %3963 = vmatpush1.msra.mxu0 %v3950
  %3964 = vmatprep.subr.mxu0 0.0
  %3965 = vmatpush1.msra.mxu0 %v3951
  %3966 = vmatprep.subr.mxu0 0.0
  %3967 = vmatpush1.msra.mxu0 %v3952
  %3968 = vmatprep.subr.mxu0 0.0
  %3969 = vmatpush1.msra.mxu0 %v3953
  %3970 = vmatprep.subr.mxu0 0.0
  %3971 = vmatpush1.msra.mxu0 %v3954
  %3972 = vmatprep.subr.mxu0 0.0
  %3973 = vmatpush1.msra.mxu0 %v3955
  %3974 = vmatprep.subr.mxu0 0.0
  %3975 = vmatpush1.msra.mxu0 %v3956
  %3976 = vmatprep.subr.mxu0 0.0
  %3977 = vmatpush1.msra.mxu0 0.0
  %3978 = vmatprep.subr.mxu0 0.0
  %3979 = vmatpush1.msra.mxu0 0.0
  %3980 = vmatprep.subr.mxu0 0.0
  %3981 = vmatpush1.msra.mxu0 0.0
  %3982 = vmatprep.subr.mxu0 0.0
  %3983 = vmatpush1.msra.mxu0 0.0
  %3984 = vmatprep.subr.mxu0 0.0
  %3985 = vmatpush1.msra.mxu0 0.0
  %3986 = vmatprep.subr.mxu0 0.0
  %3987 = vmatpush1.msra.mxu0 0.0
  %3988 = vmatprep.subr.mxu0 0.0
  %3989 = vmatpush1.msra.mxu0 0.0
  %3990 = vmatprep.subr.mxu0 0.0
  %3991 = vmatpush1.msra.mxu0 0.0
  %3992 = vmatprep.subr.mxu0 0.0
  %3993 = vmatpush1.msra.mxu0 0.0
  %3994 = vmatprep.subr.mxu0 0.0
  %3995 = vmatpush1.msra.mxu0 0.0
  %3996 = vmatprep.subr.mxu0 0.0
  %3997 = vmatpush1.msra.mxu0 0.0
  %3998 = vmatprep.subr.mxu0 0.0
  %3999 = vmatpush1.msra.mxu0 0.0
  %4000 = vmatprep.subr.mxu0 0.0
  %4001 = vmatpush1.msra.mxu0 0.0
  %4002 = vmatprep.subr.mxu0 0.0
  %4003 = vmatpush1.msra.mxu0 0.0
  %4004 = vmatprep.subr.mxu0 0.0
  %4005 = vmatpush1.msra.mxu0 0.0
  %4006 = vmatprep.subr.mxu0 0.0
  %4007 = vmatpush1.msra.mxu0 0.0
  %4008 = vmatprep.subr.mxu0 0.0
  %4009 = vmatpush1.msra.mxu0 0.0
  %4010 = vmatprep.subr.mxu0 0.0
  %4011 = vmatpush1.msra.mxu0 0.0
  %4012 = vmatprep.subr.mxu0 0.0
  %4013 = vmatpush1.msra.mxu0 0.0
  %4014 = vmatprep.subr.mxu0 0.0
  %4015 = vmatpush1.msra.mxu0 0.0
  %4016 = vmatprep.subr.mxu0 0.0
  %4017 = vmatpush1.msra.mxu0 0.0
  %4018 = vmatprep.subr.mxu0 0.0
  %4019 = vmatpush1.msra.mxu0 0.0
  %4020 = vmatprep.subr.mxu0 0.0
  %4021 = vmatpush1.msra.mxu0 0.0
  %4022 = vmatprep.subr.mxu0 0.0
  %4023 = vmatpush1.msra.mxu0 0.0
  %4024 = vmatprep.mubr.f32.mxu0 0.0
  %4025 = vmatmul.mubr.f32.gmra.mrb[0].mxu0 %v3958
  %v4026 = vpop.f32.mrb[0].mxu0
  %v4027 = vadd.f32 0.0, %v4026
  %v4028 = vpop.f32.mrb[0].mxu0
  %4029 = vdwg.mxu0
  %v4030 = vadd.f32 %v3946, %v4027
  %v4031 = vld [vmem:[#allocation3 + $0x18] sm:$0x3]
  %s4032 = scalar_lea.vmem %s6, 768
  %v4033 = vld [vmem:[%s4032] sm:$0xff]
  %v4034 = vld [vmem:[%s4032 + $0x8] sm:$0xff]
  %v4035 = vld [vmem:[%s4032 + $0x10] sm:$0xff]
  %v4036 = vld [vmem:[%s4032 + $0x18] sm:$0xff]
  %v4037 = vld [vmem:[%s4032 + $0x20] sm:$0xff]
  %v4038 = vld [vmem:[%s4032 + $0x28] sm:$0xff]
  %v4039 = vld [vmem:[%s4032 + $0x30] sm:$0xff]
  %v4040 = vld [vmem:[%s4032 + $0x38] sm:$0xff]
  %v4042 = vsel %vm3021, %v4031, 0
  %4044 = vmatprep.subr.mxu0 0.0
  %4045 = vmatpush1.msra.mxu0 %v4033
  %4046 = vmatprep.subr.mxu0 0.0
  %4047 = vmatpush1.msra.mxu0 %v4034
  %4048 = vmatprep.subr.mxu0 0.0
  %4049 = vmatpush1.msra.mxu0 %v4035
  %4050 = vmatprep.subr.mxu0 0.0
  %4051 = vmatpush1.msra.mxu0 %v4036
  %4052 = vmatprep.subr.mxu0 0.0
  %4053 = vmatpush1.msra.mxu0 %v4037
  %4054 = vmatprep.subr.mxu0 0.0
  %4055 = vmatpush1.msra.mxu0 %v4038
  %4056 = vmatprep.subr.mxu0 0.0
  %4057 = vmatpush1.msra.mxu0 %v4039
  %4058 = vmatprep.subr.mxu0 0.0
  %4059 = vmatpush1.msra.mxu0 %v4040
  %4060 = vmatprep.subr.mxu0 0.0
  %4061 = vmatpush1.msra.mxu0 0.0
  %4062 = vmatprep.subr.mxu0 0.0
  %4063 = vmatpush1.msra.mxu0 0.0
  %4064 = vmatprep.subr.mxu0 0.0
  %4065 = vmatpush1.msra.mxu0 0.0
  %4066 = vmatprep.subr.mxu0 0.0
  %4067 = vmatpush1.msra.mxu0 0.0
  %4068 = vmatprep.subr.mxu0 0.0
  %4069 = vmatpush1.msra.mxu0 0.0
  %4070 = vmatprep.subr.mxu0 0.0
  %4071 = vmatpush1.msra.mxu0 0.0
  %4072 = vmatprep.subr.mxu0 0.0
  %4073 = vmatpush1.msra.mxu0 0.0
  %4074 = vmatprep.subr.mxu0 0.0
  %4075 = vmatpush1.msra.mxu0 0.0
  %4076 = vmatprep.subr.mxu0 0.0
  %4077 = vmatpush1.msra.mxu0 0.0
  %4078 = vmatprep.subr.mxu0 0.0
  %4079 = vmatpush1.msra.mxu0 0.0
  %4080 = vmatprep.subr.mxu0 0.0
  %4081 = vmatpush1.msra.mxu0 0.0
  %4082 = vmatprep.subr.mxu0 0.0
  %4083 = vmatpush1.msra.mxu0 0.0
  %4084 = vmatprep.subr.mxu0 0.0
  %4085 = vmatpush1.msra.mxu0 0.0
  %4086 = vmatprep.subr.mxu0 0.0
  %4087 = vmatpush1.msra.mxu0 0.0
  %4088 = vmatprep.subr.mxu0 0.0
  %4089 = vmatpush1.msra.mxu0 0.0
  %4090 = vmatprep.subr.mxu0 0.0
  %4091 = vmatpush1.msra.mxu0 0.0
  %4092 = vmatprep.subr.mxu0 0.0
  %4093 = vmatpush1.msra.mxu0 0.0
  %4094 = vmatprep.subr.mxu0 0.0
  %4095 = vmatpush1.msra.mxu0 0.0
  %4096 = vmatprep.subr.mxu0 0.0
  %4097 = vmatpush1.msra.mxu0 0.0
  %4098 = vmatprep.subr.mxu0 0.0
  %4099 = vmatpush1.msra.mxu0 0.0
  %4100 = vmatprep.subr.mxu0 0.0
  %4101 = vmatpush1.msra.mxu0 0.0
  %4102 = vmatprep.subr.mxu0 0.0
  %4103 = vmatpush1.msra.mxu0 0.0
  %4104 = vmatprep.subr.mxu0 0.0
  %4105 = vmatpush1.msra.mxu0 0.0
  %4106 = vmatprep.subr.mxu0 0.0
  %4107 = vmatpush1.msra.mxu0 0.0
  %4108 = vmatprep.mubr.f32.mxu0 0.0
  %4109 = vmatmul.mubr.f32.gmra.mrb[0].mxu0 %v4042
  %v4110 = vpop.f32.mrb[0].mxu0
  %v4111 = vadd.f32 0.0, %v4110
  %v4112 = vpop.f32.mrb[0].mxu0
  %4113 = vdwg.mxu0
  %v4114 = vadd.f32 %v4030, %v4111
  %v4115 = vld [vmem:[#allocation3 + $0x1a] sm:$0x3]
  %s4116 = scalar_lea.vmem %s6, 832
  %v4117 = vld [vmem:[%s4116] sm:$0xff]
  %v4118 = vld [vmem:[%s4116 + $0x8] sm:$0xff]
  %v4119 = vld [vmem:[%s4116 + $0x10] sm:$0xff]
  %v4120 = vld [vmem:[%s4116 + $0x18] sm:$0xff]
  %v4121 = vld [vmem:[%s4116 + $0x20] sm:$0xff]
  %v4122 = vld [vmem:[%s4116 + $0x28] sm:$0xff]
  %v4123 = vld [vmem:[%s4116 + $0x30] sm:$0xff]
  %v4124 = vld [vmem:[%s4116 + $0x38] sm:$0xff]
  %v4126 = vsel %vm3021, %v4115, 0
  %4128 = vmatprep.subr.mxu0 0.0
  %4129 = vmatpush1.msra.mxu0 %v4117
  %4130 = vmatprep.subr.mxu0 0.0
  %4131 = vmatpush1.msra.mxu0 %v4118
  %4132 = vmatprep.subr.mxu0 0.0
  %4133 = vmatpush1.msra.mxu0 %v4119
  %4134 = vmatprep.subr.mxu0 0.0
  %4135 = vmatpush1.msra.mxu0 %v4120
  %4136 = vmatprep.subr.mxu0 0.0
  %4137 = vmatpush1.msra.mxu0 %v4121
  %4138 = vmatprep.subr.mxu0 0.0
  %4139 = vmatpush1.msra.mxu0 %v4122
  %4140 = vmatprep.subr.mxu0 0.0
  %4141 = vmatpush1.msra.mxu0 %v4123
  %4142 = vmatprep.subr.mxu0 0.0
  %4143 = vmatpush1.msra.mxu0 %v4124
  %4144 = vmatprep.subr.mxu0 0.0
  %4145 = vmatpush1.msra.mxu0 0.0
  %4146 = vmatprep.subr.mxu0 0.0
  %4147 = vmatpush1.msra.mxu0 0.0
  %4148 = vmatprep.subr.mxu0 0.0
  %4149 = vmatpush1.msra.mxu0 0.0
  %4150 = vmatprep.subr.mxu0 0.0
  %4151 = vmatpush1.msra.mxu0 0.0
  %4152 = vmatprep.subr.mxu0 0.0
  %4153 = vmatpush1.msra.mxu0 0.0
  %4154 = vmatprep.subr.mxu0 0.0
  %4155 = vmatpush1.msra.mxu0 0.0
  %4156 = vmatprep.subr.mxu0 0.0
  %4157 = vmatpush1.msra.mxu0 0.0
  %4158 = vmatprep.subr.mxu0 0.0
  %4159 = vmatpush1.msra.mxu0 0.0
  %4160 = vmatprep.subr.mxu0 0.0
  %4161 = vmatpush1.msra.mxu0 0.0
  %4162 = vmatprep.subr.mxu0 0.0
  %4163 = vmatpush1.msra.mxu0 0.0
  %4164 = vmatprep.subr.mxu0 0.0
  %4165 = vmatpush1.msra.mxu0 0.0
  %4166 = vmatprep.subr.mxu0 0.0
  %4167 = vmatpush1.msra.mxu0 0.0
  %4168 = vmatprep.subr.mxu0 0.0
  %4169 = vmatpush1.msra.mxu0 0.0
  %4170 = vmatprep.subr.mxu0 0.0
  %4171 = vmatpush1.msra.mxu0 0.0
  %4172 = vmatprep.subr.mxu0 0.0
  %4173 = vmatpush1.msra.mxu0 0.0
  %4174 = vmatprep.subr.mxu0 0.0
  %4175 = vmatpush1.msra.mxu0 0.0
  %4176 = vmatprep.subr.mxu0 0.0
  %4177 = vmatpush1.msra.mxu0 0.0
  %4178 = vmatprep.subr.mxu0 0.0
  %4179 = vmatpush1.msra.mxu0 0.0
  %4180 = vmatprep.subr.mxu0 0.0
  %4181 = vmatpush1.msra.mxu0 0.0
  %4182 = vmatprep.subr.mxu0 0.0
  %4183 = vmatpush1.msra.mxu0 0.0
  %4184 = vmatprep.subr.mxu0 0.0
  %4185 = vmatpush1.msra.mxu0 0.0
  %4186 = vmatprep.subr.mxu0 0.0
  %4187 = vmatpush1.msra.mxu0 0.0
  %4188 = vmatprep.subr.mxu0 0.0
  %4189 = vmatpush1.msra.mxu0 0.0
  %4190 = vmatprep.subr.mxu0 0.0
  %4191 = vmatpush1.msra.mxu0 0.0
  %4192 = vmatprep.mubr.f32.mxu0 0.0
  %4193 = vmatmul.mubr.f32.gmra.mrb[0].mxu0 %v4126
  %v4194 = vpop.f32.mrb[0].mxu0
  %v4195 = vadd.f32 0.0, %v4194
  %v4196 = vpop.f32.mrb[0].mxu0
  %4197 = vdwg.mxu0
  %v4198 = vadd.f32 %v4114, %v4195
  %v4199 = vld [vmem:[#allocation3 + $0x1c] sm:$0x3]
  %s4200 = scalar_lea.vmem %s6, 896
  %v4201 = vld [vmem:[%s4200] sm:$0xff]
  %v4202 = vld [vmem:[%s4200 + $0x8] sm:$0xff]
  %v4203 = vld [vmem:[%s4200 + $0x10] sm:$0xff]
  %v4204 = vld [vmem:[%s4200 + $0x18] sm:$0xff]
  %v4205 = vld [vmem:[%s4200 + $0x20] sm:$0xff]
  %v4206 = vld [vmem:[%s4200 + $0x28] sm:$0xff]
  %v4207 = vld [vmem:[%s4200 + $0x30] sm:$0xff]
  %v4208 = vld [vmem:[%s4200 + $0x38] sm:$0xff]
  %v4210 = vsel %vm3021, %v4199, 0
  %4212 = vmatprep.subr.mxu0 0.0
  %4213 = vmatpush1.msra.mxu0 %v4201
  %4214 = vmatprep.subr.mxu0 0.0
  %4215 = vmatpush1.msra.mxu0 %v4202
  %4216 = vmatprep.subr.mxu0 0.0
  %4217 = vmatpush1.msra.mxu0 %v4203
  %4218 = vmatprep.subr.mxu0 0.0
  %4219 = vmatpush1.msra.mxu0 %v4204
  %4220 = vmatprep.subr.mxu0 0.0
  %4221 = vmatpush1.msra.mxu0 %v4205
  %4222 = vmatprep.subr.mxu0 0.0
  %4223 = vmatpush1.msra.mxu0 %v4206
  %4224 = vmatprep.subr.mxu0 0.0
  %4225 = vmatpush1.msra.mxu0 %v4207
  %4226 = vmatprep.subr.mxu0 0.0
  %4227 = vmatpush1.msra.mxu0 %v4208
  %4228 = vmatprep.subr.mxu0 0.0
  %4229 = vmatpush1.msra.mxu0 0.0
  %4230 = vmatprep.subr.mxu0 0.0
  %4231 = vmatpush1.msra.mxu0 0.0
  %4232 = vmatprep.subr.mxu0 0.0
  %4233 = vmatpush1.msra.mxu0 0.0
  %4234 = vmatprep.subr.mxu0 0.0
  %4235 = vmatpush1.msra.mxu0 0.0
  %4236 = vmatprep.subr.mxu0 0.0
  %4237 = vmatpush1.msra.mxu0 0.0
  %4238 = vmatprep.subr.mxu0 0.0
  %4239 = vmatpush1.msra.mxu0 0.0
  %4240 = vmatprep.subr.mxu0 0.0
  %4241 = vmatpush1.msra.mxu0 0.0
  %4242 = vmatprep.subr.mxu0 0.0
  %4243 = vmatpush1.msra.mxu0 0.0
  %4244 = vmatprep.subr.mxu0 0.0
  %4245 = vmatpush1.msra.mxu0 0.0
  %4246 = vmatprep.subr.mxu0 0.0
  %4247 = vmatpush1.msra.mxu0 0.0
  %4248 = vmatprep.subr.mxu0 0.0
  %4249 = vmatpush1.msra.mxu0 0.0
  %4250 = vmatprep.subr.mxu0 0.0
  %4251 = vmatpush1.msra.mxu0 0.0
  %4252 = vmatprep.subr.mxu0 0.0
  %4253 = vmatpush1.msra.mxu0 0.0
  %4254 = vmatprep.subr.mxu0 0.0
  %4255 = vmatpush1.msra.mxu0 0.0
  %4256 = vmatprep.subr.mxu0 0.0
  %4257 = vmatpush1.msra.mxu0 0.0
  %4258 = vmatprep.subr.mxu0 0.0
  %4259 = vmatpush1.msra.mxu0 0.0
  %4260 = vmatprep.subr.mxu0 0.0
  %4261 = vmatpush1.msra.mxu0 0.0
  %4262 = vmatprep.subr.mxu0 0.0
  %4263 = vmatpush1.msra.mxu0 0.0
  %4264 = vmatprep.subr.mxu0 0.0
  %4265 = vmatpush1.msra.mxu0 0.0
  %4266 = vmatprep.subr.mxu0 0.0
  %4267 = vmatpush1.msra.mxu0 0.0
  %4268 = vmatprep.subr.mxu0 0.0
  %4269 = vmatpush1.msra.mxu0 0.0
  %4270 = vmatprep.subr.mxu0 0.0
  %4271 = vmatpush1.msra.mxu0 0.0
  %4272 = vmatprep.subr.mxu0 0.0
  %4273 = vmatpush1.msra.mxu0 0.0
  %4274 = vmatprep.subr.mxu0 0.0
  %4275 = vmatpush1.msra.mxu0 0.0
  %4276 = vmatprep.mubr.f32.mxu0 0.0
  %4277 = vmatmul.mubr.f32.gmra.mrb[0].mxu0 %v4210
  %v4278 = vpop.f32.mrb[0].mxu0
  %v4279 = vadd.f32 0.0, %v4278
  %v4280 = vpop.f32.mrb[0].mxu0
  %4281 = vdwg.mxu0
  %v4282 = vadd.f32 %v4198, %v4279
  %v4283 = vld [vmem:[#allocation3 + $0x1e] sm:$0x3]
  %s4284 = scalar_lea.vmem %s6, 960
  %v4285 = vld [vmem:[%s4284] sm:$0xff]
  %v4286 = vld [vmem:[%s4284 + $0x8] sm:$0xff]
  %v4287 = vld [vmem:[%s4284 + $0x10] sm:$0xff]
  %v4288 = vld [vmem:[%s4284 + $0x18] sm:$0xff]
  %v4289 = vld [vmem:[%s4284 + $0x20] sm:$0xff]
  %v4290 = vld [vmem:[%s4284 + $0x28] sm:$0xff]
  %v4291 = vld [vmem:[%s4284 + $0x30] sm:$0xff]
  %v4292 = vld [vmem:[%s4284 + $0x38] sm:$0xff]
  %v4294 = vsel %vm3021, %v4283, 0
  %4296 = vmatprep.subr.mxu0 0.0
  %4297 = vmatpush1.msra.mxu0 %v4285
  %4298 = vmatprep.subr.mxu0 0.0
  %4299 = vmatpush1.msra.mxu0 %v4286
  %4300 = vmatprep.subr.mxu0 0.0
  %4301 = vmatpush1.msra.mxu0 %v4287
  %4302 = vmatprep.subr.mxu0 0.0
  %4303 = vmatpush1.msra.mxu0 %v4288
  %4304 = vmatprep.subr.mxu0 0.0
  %4305 = vmatpush1.msra.mxu0 %v4289
  %4306 = vmatprep.subr.mxu0 0.0
  %4307 = vmatpush1.msra.mxu0 %v4290
  %4308 = vmatprep.subr.mxu0 0.0
  %4309 = vmatpush1.msra.mxu0 %v4291
  %4310 = vmatprep.subr.mxu0 0.0
  %4311 = vmatpush1.msra.mxu0 %v4292
  %4312 = vmatprep.subr.mxu0 0.0
  %4313 = vmatpush1.msra.mxu0 0.0
  %4314 = vmatprep.subr.mxu0 0.0
  %4315 = vmatpush1.msra.mxu0 0.0
  %4316 = vmatprep.subr.mxu0 0.0
  %4317 = vmatpush1.msra.mxu0 0.0
  %4318 = vmatprep.subr.mxu0 0.0
  %4319 = vmatpush1.msra.mxu0 0.0
  %4320 = vmatprep.subr.mxu0 0.0
  %4321 = vmatpush1.msra.mxu0 0.0
  %4322 = vmatprep.subr.mxu0 0.0
  %4323 = vmatpush1.msra.mxu0 0.0
  %4324 = vmatprep.subr.mxu0 0.0
  %4325 = vmatpush1.msra.mxu0 0.0
  %4326 = vmatprep.subr.mxu0 0.0
  %4327 = vmatpush1.msra.mxu0 0.0
  %4328 = vmatprep.subr.mxu0 0.0
  %4329 = vmatpush1.msra.mxu0 0.0
  %4330 = vmatprep.subr.mxu0 0.0
  %4331 = vmatpush1.msra.mxu0 0.0
  %4332 = vmatprep.subr.mxu0 0.0
  %4333 = vmatpush1.msra.mxu0 0.0
  %4334 = vmatprep.subr.mxu0 0.0
  %4335 = vmatpush1.msra.mxu0 0.0
  %4336 = vmatprep.subr.mxu0 0.0
  %4337 = vmatpush1.msra.mxu0 0.0
  %4338 = vmatprep.subr.mxu0 0.0
  %4339 = vmatpush1.msra.mxu0 0.0
  %4340 = vmatprep.subr.mxu0 0.0
  %4341 = vmatpush1.msra.mxu0 0.0
  %4342 = vmatprep.subr.mxu0 0.0
  %4343 = vmatpush1.msra.mxu0 0.0
  %4344 = vmatprep.subr.mxu0 0.0
  %4345 = vmatpush1.msra.mxu0 0.0
  %4346 = vmatprep.subr.mxu0 0.0
  %4347 = vmatpush1.msra.mxu0 0.0
  %4348 = vmatprep.subr.mxu0 0.0
  %4349 = vmatpush1.msra.mxu0 0.0
  %4350 = vmatprep.subr.mxu0 0.0
  %4351 = vmatpush1.msra.mxu0 0.0
  %4352 = vmatprep.subr.mxu0 0.0
  %4353 = vmatpush1.msra.mxu0 0.0
  %4354 = vmatprep.subr.mxu0 0.0
  %4355 = vmatpush1.msra.mxu0 0.0
  %4356 = vmatprep.subr.mxu0 0.0
  %4357 = vmatpush1.msra.mxu0 0.0
  %4358 = vmatprep.subr.mxu0 0.0
  %4359 = vmatpush1.msra.mxu0 0.0
  %4360 = vmatprep.mubr.f32.mxu0 0.0
  %4361 = vmatmul.mubr.f32.gmra.mrb[0].mxu0 %v4294
  %v4362 = vpop.f32.mrb[0].mxu0
  %v4363 = vadd.f32 0.0, %v4362
  %v4364 = vpop.f32.mrb[0].mxu0
  %4365 = vdwg.mxu0
  %v4366 = vadd.f32 %v4282, %v4363
  %v4367 = vld [vmem:[%s7] sm:$0x1]
  %v4369 = vlaneseq
  %v4370 = vshrl.u32 %v4369, 7
  %v4371 = vsub.s32 0, %v4370
  %v4372 = vrot.slane %v4367, %v4371
  %v4374 = vadd.f32 %v4366, %v4372
  %v4375 = vmax.f32 %v4374, 0.0
  %v4376 = vld [vmem:[%s8] sm:$0x1]
  %v4378 = vlaneseq
  %v4379 = vshrl.u32 %v4378, 7
  %v4380 = vsub.s32 0, %v4379
  %v4381 = vrot.slane %v4376, %v4380
  %v4383 = vmul.f32 %v4375, %v4381
  %vm4384 = vcmask 74752
  %v4385 = vsel %vm4384, %v4383, 0.0
  %4386 = vadd.xlane.f32.xlu0 %v4385
  %v4387 = vpop.xlane.xlu0 %4386
  %v4388 = vld [vmem:[#allocation4] sm:$0x1]
  %v4390 = vlaneseq
  %v4391 = vshrl.u32 %v4390, 7
  %v4392 = vsub.s32 0, %v4391
  %v4393 = vrot.slane %v4388, %v4392
  %v4395 = vadd.f32 %v4387, %v4393
  %vm4396 = vcmask 1024
  %4397 = vst.msk [vmem:[%s10] sm:$0x3] %vm4396, %v4395
  // Predicated region
  $region42: #{forward.1} parent=0 // pred_check
    _
  $region43: #{forward.1} parent=0 // pred_check_branch
    %4399 = sbr.rel (0) target = $region45
  $region44: #{forward.1} parent=0 // pred_region
    _
  $region45: #{forward.1} parent=0 // pred_fallthru
    _
  // Predicated region
  $region46: #{forward.1} parent=0 // pred_check
    _
  $region47: #{forward.1} parent=0 // pred_check_branch
    %4401 = sbr.rel (0) target = $region49
  $region48: #{forward.1} parent=0 // pred_region
    _
  $region49: #{forward.1} parent=0 // pred_fallthru
    _

</llo_original>
